<compile_context>
chip_gen: v6e
topology: v6e:2x2x1
jax: 0.10.0
libtpu: 0.0.40
codegen_flags: <defaults>
</compile_context>

<pallas_src>
import functools
import math

import jax
import jax.numpy as jnp
from jax import lax
from jax.experimental import pallas as pl
from jax.experimental.pallas import tpu as pltpu

SOS_TOKEN = 1
LANES = 128


def _gru_cell(gi, gh, h, H):
    """PyTorch-style GRU cell given precomputed input/hidden gate pre-activations."""
    r = jax.nn.sigmoid(gi[:, :H] + gh[:, :H])
    z = jax.nn.sigmoid(gi[:, H:2 * H] + gh[:, H:2 * H])
    n = jnp.tanh(gi[:, 2 * H:] + r * gh[:, 2 * H:])
    return (1.0 - z) * n + z * h


# ----------------------------------------------------------------------------
# fused kernel: encoder GRU + greedy attention decoder, one invocation
# ----------------------------------------------------------------------------
def _greedy_search_kernel(x_emb_ref, emb_ref,
                          enc_wih_ref, enc_whh_ref, enc_bih_ref, enc_bhh_ref,
                          dec_wih_ref, dec_whh_ref, dec_bih_ref, dec_bhh_ref,
                          w_cat_ref, b_cat_ref, w_out_ref, b_out_ref,
                          tok_out_ref, score_out_ref,
                          enc_scr, gi_scr, tok_scr):
    T, H = enc_scr.shape
    V = emb_ref.shape[0]
    max_length = tok_out_ref.shape[0]
    lanes = tok_out_ref.shape[1]

    # ------------------------- encoder GRU ----------------------------------
    # Input-gate matmul hoisted out of the recurrence: one [T,3H] bf16 matmul.
    gi_scr[...] = (jnp.dot(x_emb_ref[...], enc_wih_ref[...],
                           preferred_element_type=jnp.float32) + enc_bih_ref[...])
    enc_whh = enc_whh_ref[...]
    enc_bhh = enc_bhh_ref[...]

    def enc_body(t, h):
        gi = gi_scr[pl.ds(t, 1), :]                                     # [1,3H]
        gh = (jnp.dot(h.astype(jnp.bfloat16), enc_whh,
                      preferred_element_type=jnp.float32) + enc_bhh)
        h_new = _gru_cell(gi, gh, h, H)
        enc_scr[pl.ds(t, 1), :] = h_new
        return h_new

    enc_hidden = lax.fori_loop(0, T, enc_body,
                               jnp.zeros((1, H), jnp.float32), unroll=True)

    # ------------------------- greedy decoder -------------------------------
    dec_wih = dec_wih_ref[...]
    dec_whh = dec_whh_ref[...]
    dec_bih = dec_bih_ref[...]
    dec_bhh = dec_bhh_ref[...]
    w_cat = w_cat_ref[...]
    b_cat = b_cat_ref[...]
    w_out = w_out_ref[...]
    b_out = b_out_ref[...]
    enc_out = enc_scr[...]                                              # [T,H]

    def dec_body(step, carry):
        h, x = carry                                                    # [1,H] each

        # GRU cell (H multiple of 128 -> lane-aligned gate slices)
        gi = (jnp.dot(x.astype(jnp.bfloat16), dec_wih,
                      preferred_element_type=jnp.float32) + dec_bih)
        gh = (jnp.dot(h.astype(jnp.bfloat16), dec_whh,
                      preferred_element_type=jnp.float32) + dec_bhh)
        rnn_out = _gru_cell(gi, gh, h, H)                               # [1,H]

        # Luong dot attention: contract on the last (H) dims -> no transpose.
        scores = lax.dot_general(rnn_out, enc_out, (((1,), (1,)), ((), ())),
                                 preferred_element_type=jnp.float32)   # [1,T]
        attn = jax.nn.softmax(scores, axis=-1)
        context = jnp.dot(attn, enc_out,
                          preferred_element_type=jnp.float32)          # [1,H]

        # K-stacked concat projection: [rnn_out | context] @ W_concat (2H,H)
        cat = jnp.concatenate([rnn_out, context], axis=1)              # [1,2H]
        concat_out = jnp.tanh(
            jnp.dot(cat.astype(jnp.bfloat16), w_cat,
                    preferred_element_type=jnp.float32) + b_cat)       # [1,H]
        logits = (jnp.dot(concat_out.astype(jnp.bfloat16), w_out,
                          preferred_element_type=jnp.float32) + b_out)  # [1,V]

        # greedy token (first maximal index) and its exact softmax probability
        m = jnp.max(logits, axis=-1, keepdims=True)                     # [1,1]
        ids = lax.broadcasted_iota(jnp.int32, logits.shape, 1)
        tok_vec = jnp.min(jnp.where(logits >= m, ids, V),
                          axis=-1, keepdims=True)                       # [1,1] i32
        denom = jnp.sum(jnp.exp(logits - m), axis=-1, keepdims=True)    # [1,1]
        score = 1.0 / denom                                             # exact

        # vector -> scalar for the dynamic embedding-row gather
        tok_scr[...] = tok_vec
        tok = tok_scr[0, 0]

        # per-step results (lane-broadcast rows; column 0 extracted outside)
        tok_out_ref[pl.ds(step, 1), :] = jnp.broadcast_to(tok, (1, lanes)).astype(jnp.int32)
        score_out_ref[pl.ds(step, 1), :] = jnp.broadcast_to(score, (1, lanes))

        # token feedback: one dynamic row load from the resident embedding
        x_next = emb_ref[pl.ds(tok, 1), :]                              # [1,H]
        return rnn_out, x_next

    x0 = emb_ref[pl.ds(SOS_TOKEN, 1), :]                                # SOS embedding
    lax.fori_loop(0, max_length, dec_body, (enc_hidden, x0), unroll=True)


def run_greedy_search(x_emb, emb, params, max_length):
    T, H = x_emb.shape
    V = emb.shape[0]
    vmem = pl.BlockSpec(memory_space=pltpu.MemorySpace.VMEM)

    inputs = (x_emb, emb,
              params["enc_w_ih"], params["enc_w_hh"],
              params["enc_b_ih"], params["enc_b_hh"],
              params["dec_w_ih"], params["dec_w_hh"],
              params["dec_b_ih"], params["dec_b_hh"],
              params["w_concat"], params["b_concat"],
              params["w_out"], params["b_out"])

    out_shape = (jax.ShapeDtypeStruct((max_length, LANES), jnp.int32),
                 jax.ShapeDtypeStruct((max_length, LANES), jnp.float32))

    scratch_shapes = [
        pltpu.VMEM((T, H), jnp.float32),       # encoder outputs (attention memory)
        pltpu.VMEM((T, 3 * H), jnp.float32),   # hoisted encoder input-gate preacts
        pltpu.VMEM((1, 1), jnp.int32),         # argmax token (vector->scalar hop)
    ]

    # Single invocation -> everything is resident exactly once (no pipeline
    # double-buffers).  Size the scoped VMEM limit from the real footprint,
    # with headroom, staying well under v7x's 64 MiB physical VMEM.
    in_bytes = sum(math.prod(a.shape) * a.dtype.itemsize for a in inputs)
    out_bytes = max_length * LANES * (4 + 4)
    scr_bytes = (T * H + T * 3 * H + 1) * 4
    vmem_limit = min(2 * (in_bytes + out_bytes + scr_bytes) + (16 << 20), 48 << 20)

    return pl.pallas_call(
        _greedy_search_kernel,
        out_shape=out_shape,
        in_specs=[vmem] * len(inputs),
        out_specs=(vmem, vmem),
        scratch_shapes=scratch_shapes,
        compiler_params=pltpu.CompilerParams(vmem_limit_bytes=int(vmem_limit)),
    )(*inputs)


# ----------------------------------------------------------------------------
# GreedySearchDecoder.forward
# ----------------------------------------------------------------------------
@functools.partial(jax.jit, static_argnames=("max_length",))
def greedy_search_decode(input_seq, input_length, max_length, params):
    """input_seq: [T] int32 tokens. Returns (all_tokens [max_length] int32,
    all_scores [max_length] float32)."""
    del input_length  # TODO(synk): unpadded input assumed (T == input_length)
    emb = params["embedding"]                                           # [V,H] f32
    # one-time XLA gather; bf16 so the hoisted encoder matmul is a bf16 MXU op
    x_emb = jnp.take(emb, input_seq, axis=0).astype(jnp.bfloat16)       # [T,H]
    tok_rows, score_rows = run_greedy_search(x_emb, emb, params, max_length)
    return tok_rows[:, 0], score_rows[:, 0]


# ----------------------------------------------------------------------------
# deterministic parameter construction (weights bf16, biases / embedding f32)
# ----------------------------------------------------------------------------
def make_params(key, vocab, hidden):
    ks = jax.random.split(key, 12)
    s = 0.1

    def w(k, shape):
        return (s * jax.random.normal(k, shape, jnp.float32)).astype(jnp.bfloat16)

    def b(k, shape):
        return s * jax.random.normal(k, shape, jnp.float32)

    return {
        "embedding": s * jax.random.normal(ks[0], (vocab, hidden), jnp.float32),
        "enc_w_ih": w(ks[1], (hidden, 3 * hidden)),
        "enc_w_hh": w(ks[2], (hidden, 3 * hidden)),
        "enc_b_ih": b(ks[3], (1, 3 * hidden)),
        "enc_b_hh": b(ks[4], (1, 3 * hidden)),
        "dec_w_ih": w(ks[5], (hidden, 3 * hidden)),
        "dec_w_hh": w(ks[6], (hidden, 3 * hidden)),
        "dec_b_ih": b(ks[7], (1, 3 * hidden)),
        "dec_b_hh": b(ks[8], (1, 3 * hidden)),
        "w_concat": w(ks[9], (2 * hidden, hidden)),     # original [2H,H] shape
        "b_concat": jnp.zeros((1, hidden), jnp.float32),
        "w_out": w(ks[10], (hidden, vocab)),
        "b_out": jnp.zeros((1, vocab), jnp.float32),
    }


if __name__ == "__main__":
    # lane-aligned small sizes: H and V multiples of 128
    VOCAB, HIDDEN, SEQ_LEN, MAX_LENGTH = 256, 128, 8, 6

    key = jax.random.PRNGKey(0)
    params = make_params(key, VOCAB, HIDDEN)
    input_seq = jax.random.randint(jax.random.fold_in(key, 7),
                                   (SEQ_LEN,), 2, VOCAB, dtype=jnp.int32)
    input_length = jnp.array([SEQ_LEN], jnp.int32)

    all_tokens, all_scores = greedy_search_decode(
        input_seq, input_length, MAX_LENGTH, params)
    jax.block_until_ready((all_tokens, all_scores))

    assert all_tokens.shape == (MAX_LENGTH,) and all_tokens.dtype == jnp.int32
    assert all_scores.shape == (MAX_LENGTH,) and all_scores.dtype == jnp.float32
    assert bool(jnp.all(all_tokens >= 0)) and bool(jnp.all(all_tokens < VOCAB))
    assert bool(jnp.all(all_scores > 0.0)) and bool(jnp.all(all_scores <= 1.0 + 1e-5))
    print("KERNEL_OK")
</pallas_src>

<mosaic_0001>
module attributes {stable_mosaic.version = 11 : i64} {
  func.func @_greedy_search_kernel(%arg0: memref<8x128xbf16, #tpu.memory_space<vmem>>, %arg1: memref<256x128xf32, #tpu.memory_space<vmem>>, %arg2: memref<128x384xbf16, #tpu.memory_space<vmem>>, %arg3: memref<128x384xbf16, #tpu.memory_space<vmem>>, %arg4: memref<1x384xf32, #tpu.memory_space<vmem>>, %arg5: memref<1x384xf32, #tpu.memory_space<vmem>>, %arg6: memref<128x384xbf16, #tpu.memory_space<vmem>>, %arg7: memref<128x384xbf16, #tpu.memory_space<vmem>>, %arg8: memref<1x384xf32, #tpu.memory_space<vmem>>, %arg9: memref<1x384xf32, #tpu.memory_space<vmem>>, %arg10: memref<256x128xbf16, #tpu.memory_space<vmem>>, %arg11: memref<1x128xf32, #tpu.memory_space<vmem>>, %arg12: memref<128x256xbf16, #tpu.memory_space<vmem>>, %arg13: memref<1x256xf32, #tpu.memory_space<vmem>>, %arg14: memref<6x128xi32, #tpu.memory_space<vmem>>, %arg15: memref<6x128xf32, #tpu.memory_space<vmem>>, %arg16: memref<8x128xf32, #tpu.memory_space<vmem>>, %arg17: memref<8x384xf32, #tpu.memory_space<vmem>>, %arg18: memref<1x1xi32, #tpu.memory_space<vmem>>) attributes {dimension_semantics = [], scalar_prefetch = 0 : i64, scratch_operands = 3 : i64, tpu.core_type = #tpu.core_type<tc>} {
    %c0 = arith.constant 0 : index
    %c0_0 = arith.constant 0 : index
    %0 = vector.load %arg0[%c0, %c0_0] : memref<8x128xbf16, #tpu.memory_space<vmem>>, vector<8x128xbf16>
    %c0_1 = arith.constant 0 : index
    %c0_2 = arith.constant 0 : index
    %1 = vector.load %arg2[%c0_1, %c0_2] : memref<128x384xbf16, #tpu.memory_space<vmem>>, vector<128x384xbf16>
    %cst = arith.constant dense<0.000000e+00> : vector<8x384xf32>
    %2 = tpu.matmul %0, %1, %cst {dimension_numbers = #tpu.dot_dimension_numbers<[1], [0], [0], [1], [0, 0, 1, 1], [], []>} : vector<8x128xbf16>, vector<128x384xbf16>, vector<8x384xf32> -> vector<8x384xf32>
    %c0_3 = arith.constant 0 : index
    %c0_4 = arith.constant 0 : index
    %3 = vector.load %arg4[%c0_3, %c0_4] : memref<1x384xf32, #tpu.memory_space<vmem>>, vector<1x384xf32>
    %4 = vector.broadcast %3 : vector<1x384xf32> to vector<8x384xf32>
    %5 = arith.addf %2, %4 : vector<8x384xf32>
    %c0_5 = arith.constant 0 : index
    %c0_6 = arith.constant 0 : index
    %6 = vector.load %arg17[%c0_5, %c0_6] : memref<8x384xf32, #tpu.memory_space<vmem>>, vector<8x384xf32>
    tpu.vector_store %arg17[%c0_5, %c0_6], %5 {strides = array<i32>} : memref<8x384xf32, #tpu.memory_space<vmem>>, vector<8x384xf32>,
    %c0_7 = arith.constant 0 : index
    %c0_8 = arith.constant 0 : index
    %7 = vector.load %arg3[%c0_7, %c0_8] : memref<128x384xbf16, #tpu.memory_space<vmem>>, vector<128x384xbf16>
    %c0_9 = arith.constant 0 : index
    %c0_10 = arith.constant 0 : index
    %8 = vector.load %arg5[%c0_9, %c0_10] : memref<1x384xf32, #tpu.memory_space<vmem>>, vector<1x384xf32>
    %cst_11 = arith.constant 0.000000e+00 : f32
    %9 = vector.broadcast %cst_11 : f32 to vector<1x128xf32>
    %c0_i32 = arith.constant 0 : i32
    %10 = arith.index_cast %c0_i32 : i32 to index
    %c0_12 = arith.constant 0 : index
    %11 = vector.load %arg17[%10, %c0_12] : memref<8x384xf32, #tpu.memory_space<vmem>>, vector<1x384xf32>
    %12 = arith.truncf %9 : vector<1x128xf32> to vector<1x128xbf16>
    %cst_13 = arith.constant dense<0.000000e+00> : vector<1x384xf32>
    %13 = tpu.matmul %12, %7, %cst_13 {dimension_numbers = #tpu.dot_dimension_numbers<[1], [0], [0], [1], [0, 0, 1, 1], [], []>} : vector<1x128xbf16>, vector<128x384xbf16>, vector<1x384xf32> -> vector<1x384xf32>
    %14 = arith.addf %13, %8 : vector<1x384xf32>
    %15 = vector.extract_strided_slice %11 {offsets = [0, 0], sizes = [1, 128], strides = [1, 1]} : vector<1x384xf32> to vector<1x128xf32>
    %16 = vector.extract_strided_slice %14 {offsets = [0, 0], sizes = [1, 128], strides = [1, 1]} : vector<1x384xf32> to vector<1x128xf32>
    %17 = arith.addf %15, %16 : vector<1x128xf32>
    %18 = arith.negf %17 : vector<1x128xf32>
    %19 = math.exp %18 : vector<1x128xf32>
    %cst_14 = arith.constant 1.000000e+00 : f32
    %20 = vector.broadcast %cst_14 : f32 to vector<1x128xf32>
    %21 = arith.addf %20, %19 : vector<1x128xf32>
    %22 = arith.divf %20, %21 : vector<1x128xf32>
    %23 = vector.extract_strided_slice %11 {offsets = [0, 128], sizes = [1, 128], strides = [1, 1]} : vector<1x384xf32> to vector<1x128xf32>
    %24 = vector.extract_strided_slice %14 {offsets = [0, 128], sizes = [1, 128], strides = [1, 1]} : vector<1x384xf32> to vector<1x128xf32>
    %25 = arith.addf %23, %24 : vector<1x128xf32>
    %26 = arith.negf %25 : vector<1x128xf32>
    %27 = math.exp %26 : vector<1x128xf32>
    %cst_15 = arith.constant 1.000000e+00 : f32
    %28 = vector.broadcast %cst_15 : f32 to vector<1x128xf32>
    %29 = arith.addf %28, %27 : vector<1x128xf32>
    %30 = arith.divf %28, %29 : vector<1x128xf32>
    %31 = vector.extract_strided_slice %11 {offsets = [0, 256], sizes = [1, 128], strides = [1, 1]} : vector<1x384xf32> to vector<1x128xf32>
    %32 = vector.extract_strided_slice %14 {offsets = [0, 256], sizes = [1, 128], strides = [1, 1]} : vector<1x384xf32> to vector<1x128xf32>
    %33 = arith.mulf %22, %32 : vector<1x128xf32>
    %34 = arith.addf %31, %33 : vector<1x128xf32>
    %35 = math.tanh %34 : vector<1x128xf32>
    %cst_16 = arith.constant 1.000000e+00 : f32
    %36 = vector.broadcast %cst_16 : f32 to vector<1x128xf32>
    %37 = arith.subf %36, %30 : vector<1x128xf32>
    %38 = arith.mulf %37, %35 : vector<1x128xf32>
    %39 = arith.mulf %30, %9 : vector<1x128xf32>
    %40 = arith.addf %38, %39 : vector<1x128xf32>
    %41 = arith.index_cast %c0_i32 : i32 to index
    %c0_17 = arith.constant 0 : index
    %42 = vector.load %arg16[%41, %c0_17] : memref<8x128xf32, #tpu.memory_space<vmem>>, vector<1x128xf32>
    tpu.vector_store %arg16[%41, %c0_17], %40 {strides = array<i32>} : memref<8x128xf32, #tpu.memory_space<vmem>>, vector<1x128xf32>,
    %c1_i32 = arith.constant 1 : i32
    %43 = arith.index_cast %c1_i32 : i32 to index
    %c0_18 = arith.constant 0 : index
    %44 = vector.load %arg17[%43, %c0_18] : memref<8x384xf32, #tpu.memory_space<vmem>>, vector<1x384xf32>
    %45 = arith.truncf %40 : vector<1x128xf32> to vector<1x128xbf16>
    %cst_19 = arith.constant dense<0.000000e+00> : vector<1x384xf32>
    %46 = tpu.matmul %45, %7, %cst_19 {dimension_numbers = #tpu.dot_dimension_numbers<[1], [0], [0], [1], [0, 0, 1, 1], [], []>} : vector<1x128xbf16>, vector<128x384xbf16>, vector<1x384xf32> -> vector<1x384xf32>
    %47 = arith.addf %46, %8 : vector<1x384xf32>
    %48 = vector.extract_strided_slice %44 {offsets = [0, 0], sizes = [1, 128], strides = [1, 1]} : vector<1x384xf32> to vector<1x128xf32>
    %49 = vector.extract_strided_slice %47 {offsets = [0, 0], sizes = [1, 128], strides = [1, 1]} : vector<1x384xf32> to vector<1x128xf32>
    %50 = arith.addf %48, %49 : vector<1x128xf32>
    %51 = arith.negf %50 : vector<1x128xf32>
    %52 = math.exp %51 : vector<1x128xf32>
    %cst_20 = arith.constant 1.000000e+00 : f32
    %53 = vector.broadcast %cst_20 : f32 to vector<1x128xf32>
    %54 = arith.addf %53, %52 : vector<1x128xf32>
    %55 = arith.divf %53, %54 : vector<1x128xf32>
    %56 = vector.extract_strided_slice %44 {offsets = [0, 128], sizes = [1, 128], strides = [1, 1]} : vector<1x384xf32> to vector<1x128xf32>
    %57 = vector.extract_strided_slice %47 {offsets = [0, 128], sizes = [1, 128], strides = [1, 1]} : vector<1x384xf32> to vector<1x128xf32>
    %58 = arith.addf %56, %57 : vector<1x128xf32>
    %59 = arith.negf %58 : vector<1x128xf32>
    %60 = math.exp %59 : vector<1x128xf32>
    %cst_21 = arith.constant 1.000000e+00 : f32
    %61 = vector.broadcast %cst_21 : f32 to vector<1x128xf32>
    %62 = arith.addf %61, %60 : vector<1x128xf32>
    %63 = arith.divf %61, %62 : vector<1x128xf32>
    %64 = vector.extract_strided_slice %44 {offsets = [0, 256], sizes = [1, 128], strides = [1, 1]} : vector<1x384xf32> to vector<1x128xf32>
    %65 = vector.extract_strided_slice %47 {offsets = [0, 256], sizes = [1, 128], strides = [1, 1]} : vector<1x384xf32> to vector<1x128xf32>
    %66 = arith.mulf %55, %65 : vector<1x128xf32>
    %67 = arith.addf %64, %66 : vector<1x128xf32>
    %68 = math.tanh %67 : vector<1x128xf32>
    %cst_22 = arith.constant 1.000000e+00 : f32
    %69 = vector.broadcast %cst_22 : f32 to vector<1x128xf32>
    %70 = arith.subf %69, %63 : vector<1x128xf32>
    %71 = arith.mulf %70, %68 : vector<1x128xf32>
    %72 = arith.mulf %63, %40 : vector<1x128xf32>
    %73 = arith.addf %71, %72 : vector<1x128xf32>
    %74 = arith.index_cast %c1_i32 : i32 to index
    %c0_23 = arith.constant 0 : index
    %75 = vector.load %arg16[%74, %c0_23] : memref<8x128xf32, #tpu.memory_space<vmem>>, vector<1x128xf32>
    tpu.vector_store %arg16[%74, %c0_23], %73 {strides = array<i32>} : memref<8x128xf32, #tpu.memory_space<vmem>>, vector<1x128xf32>,
    %c2_i32 = arith.constant 2 : i32
    %76 = arith.index_cast %c2_i32 : i32 to index
    %c0_24 = arith.constant 0 : index
    %77 = vector.load %arg17[%76, %c0_24] : memref<8x384xf32, #tpu.memory_space<vmem>>, vector<1x384xf32>
    %78 = arith.truncf %73 : vector<1x128xf32> to vector<1x128xbf16>
    %cst_25 = arith.constant dense<0.000000e+00> : vector<1x384xf32>
    %79 = tpu.matmul %78, %7, %cst_25 {dimension_numbers = #tpu.dot_dimension_numbers<[1], [0], [0], [1], [0, 0, 1, 1], [], []>} : vector<1x128xbf16>, vector<128x384xbf16>, vector<1x384xf32> -> vector<1x384xf32>
    %80 = arith.addf %79, %8 : vector<1x384xf32>
    %81 = vector.extract_strided_slice %77 {offsets = [0, 0], sizes = [1, 128], strides = [1, 1]} : vector<1x384xf32> to vector<1x128xf32>
    %82 = vector.extract_strided_slice %80 {offsets = [0, 0], sizes = [1, 128], strides = [1, 1]} : vector<1x384xf32> to vector<1x128xf32>
    %83 = arith.addf %81, %82 : vector<1x128xf32>
    %84 = arith.negf %83 : vector<1x128xf32>
    %85 = math.exp %84 : vector<1x128xf32>
    %cst_26 = arith.constant 1.000000e+00 : f32
    %86 = vector.broadcast %cst_26 : f32 to vector<1x128xf32>
    %87 = arith.addf %86, %85 : vector<1x128xf32>
    %88 = arith.divf %86, %87 : vector<1x128xf32>
    %89 = vector.extract_strided_slice %77 {offsets = [0, 128], sizes = [1, 128], strides = [1, 1]} : vector<1x384xf32> to vector<1x128xf32>
    %90 = vector.extract_strided_slice %80 {offsets = [0, 128], sizes = [1, 128], strides = [1, 1]} : vector<1x384xf32> to vector<1x128xf32>
    %91 = arith.addf %89, %90 : vector<1x128xf32>
    %92 = arith.negf %91 : vector<1x128xf32>
    %93 = math.exp %92 : vector<1x128xf32>
    %cst_27 = arith.constant 1.000000e+00 : f32
    %94 = vector.broadcast %cst_27 : f32 to vector<1x128xf32>
    %95 = arith.addf %94, %93 : vector<1x128xf32>
    %96 = arith.divf %94, %95 : vector<1x128xf32>
    %97 = vector.extract_strided_slice %77 {offsets = [0, 256], sizes = [1, 128], strides = [1, 1]} : vector<1x384xf32> to vector<1x128xf32>
    %98 = vector.extract_strided_slice %80 {offsets = [0, 256], sizes = [1, 128], strides = [1, 1]} : vector<1x384xf32> to vector<1x128xf32>
    %99 = arith.mulf %88, %98 : vector<1x128xf32>
    %100 = arith.addf %97, %99 : vector<1x128xf32>
    %101 = math.tanh %100 : vector<1x128xf32>
    %cst_28 = arith.constant 1.000000e+00 : f32
    %102 = vector.broadcast %cst_28 : f32 to vector<1x128xf32>
    %103 = arith.subf %102, %96 : vector<1x128xf32>
    %104 = arith.mulf %103, %101 : vector<1x128xf32>
    %105 = arith.mulf %96, %73 : vector<1x128xf32>
    %106 = arith.addf %104, %105 : vector<1x128xf32>
    %107 = arith.index_cast %c2_i32 : i32 to index
    %c0_29 = arith.constant 0 : index
    %108 = vector.load %arg16[%107, %c0_29] : memref<8x128xf32, #tpu.memory_space<vmem>>, vector<1x128xf32>
    tpu.vector_store %arg16[%107, %c0_29], %106 {strides = array<i32>} : memref<8x128xf32, #tpu.memory_space<vmem>>, vector<1x128xf32>,
    %c3_i32 = arith.constant 3 : i32
    %109 = arith.index_cast %c3_i32 : i32 to index
    %c0_30 = arith.constant 0 : index
    %110 = vector.load %arg17[%109, %c0_30] : memref<8x384xf32, #tpu.memory_space<vmem>>, vector<1x384xf32>
    %111 = arith.truncf %106 : vector<1x128xf32> to vector<1x128xbf16>
    %cst_31 = arith.constant dense<0.000000e+00> : vector<1x384xf32>
    %112 = tpu.matmul %111, %7, %cst_31 {dimension_numbers = #tpu.dot_dimension_numbers<[1], [0], [0], [1], [0, 0, 1, 1], [], []>} : vector<1x128xbf16>, vector<128x384xbf16>, vector<1x384xf32> -> vector<1x384xf32>
    %113 = arith.addf %112, %8 : vector<1x384xf32>
    %114 = vector.extract_strided_slice %110 {offsets = [0, 0], sizes = [1, 128], strides = [1, 1]} : vector<1x384xf32> to vector<1x128xf32>
    %115 = vector.extract_strided_slice %113 {offsets = [0, 0], sizes = [1, 128], strides = [1, 1]} : vector<1x384xf32> to vector<1x128xf32>
    %116 = arith.addf %114, %115 : vector<1x128xf32>
    %117 = arith.negf %116 : vector<1x128xf32>
    %118 = math.exp %117 : vector<1x128xf32>
    %cst_32 = arith.constant 1.000000e+00 : f32
    %119 = vector.broadcast %cst_32 : f32 to vector<1x128xf32>
    %120 = arith.addf %119, %118 : vector<1x128xf32>
    %121 = arith.divf %119, %120 : vector<1x128xf32>
    %122 = vector.extract_strided_slice %110 {offsets = [0, 128], sizes = [1, 128], strides = [1, 1]} : vector<1x384xf32> to vector<1x128xf32>
    %123 = vector.extract_strided_slice %113 {offsets = [0, 128], sizes = [1, 128], strides = [1, 1]} : vector<1x384xf32> to vector<1x128xf32>
    %124 = arith.addf %122, %123 : vector<1x128xf32>
    %125 = arith.negf %124 : vector<1x128xf32>
    %126 = math.exp %125 : vector<1x128xf32>
    %cst_33 = arith.constant 1.000000e+00 : f32
    %127 = vector.broadcast %cst_33 : f32 to vector<1x128xf32>
    %128 = arith.addf %127, %126 : vector<1x128xf32>
    %129 = arith.divf %127, %128 : vector<1x128xf32>
    %130 = vector.extract_strided_slice %110 {offsets = [0, 256], sizes = [1, 128], strides = [1, 1]} : vector<1x384xf32> to vector<1x128xf32>
    %131 = vector.extract_strided_slice %113 {offsets = [0, 256], sizes = [1, 128], strides = [1, 1]} : vector<1x384xf32> to vector<1x128xf32>
    %132 = arith.mulf %121, %131 : vector<1x128xf32>
    %133 = arith.addf %130, %132 : vector<1x128xf32>
    %134 = math.tanh %133 : vector<1x128xf32>
    %cst_34 = arith.constant 1.000000e+00 : f32
    %135 = vector.broadcast %cst_34 : f32 to vector<1x128xf32>
    %136 = arith.subf %135, %129 : vector<1x128xf32>
    %137 = arith.mulf %136, %134 : vector<1x128xf32>
    %138 = arith.mulf %129, %106 : vector<1x128xf32>
    %139 = arith.addf %137, %138 : vector<1x128xf32>
    %140 = arith.index_cast %c3_i32 : i32 to index
    %c0_35 = arith.constant 0 : index
    %141 = vector.load %arg16[%140, %c0_35] : memref<8x128xf32, #tpu.memory_space<vmem>>, vector<1x128xf32>
    tpu.vector_store %arg16[%140, %c0_35], %139 {strides = array<i32>} : memref<8x128xf32, #tpu.memory_space<vmem>>, vector<1x128xf32>,
    %c4_i32 = arith.constant 4 : i32
    %142 = arith.index_cast %c4_i32 : i32 to index
    %c0_36 = arith.constant 0 : index
    %143 = vector.load %arg17[%142, %c0_36] : memref<8x384xf32, #tpu.memory_space<vmem>>, vector<1x384xf32>
    %144 = arith.truncf %139 : vector<1x128xf32> to vector<1x128xbf16>
    %cst_37 = arith.constant dense<0.000000e+00> : vector<1x384xf32>
    %145 = tpu.matmul %144, %7, %cst_37 {dimension_numbers = #tpu.dot_dimension_numbers<[1], [0], [0], [1], [0, 0, 1, 1], [], []>} : vector<1x128xbf16>, vector<128x384xbf16>, vector<1x384xf32> -> vector<1x384xf32>
    %146 = arith.addf %145, %8 : vector<1x384xf32>
    %147 = vector.extract_strided_slice %143 {offsets = [0, 0], sizes = [1, 128], strides = [1, 1]} : vector<1x384xf32> to vector<1x128xf32>
    %148 = vector.extract_strided_slice %146 {offsets = [0, 0], sizes = [1, 128], strides = [1, 1]} : vector<1x384xf32> to vector<1x128xf32>
    %149 = arith.addf %147, %148 : vector<1x128xf32>
    %150 = arith.negf %149 : vector<1x128xf32>
    %151 = math.exp %150 : vector<1x128xf32>
    %cst_38 = arith.constant 1.000000e+00 : f32
    %152 = vector.broadcast %cst_38 : f32 to vector<1x128xf32>
    %153 = arith.addf %152, %151 : vector<1x128xf32>
    %154 = arith.divf %152, %153 : vector<1x128xf32>
    %155 = vector.extract_strided_slice %143 {offsets = [0, 128], sizes = [1, 128], strides = [1, 1]} : vector<1x384xf32> to vector<1x128xf32>
    %156 = vector.extract_strided_slice %146 {offsets = [0, 128], sizes = [1, 128], strides = [1, 1]} : vector<1x384xf32> to vector<1x128xf32>
    %157 = arith.addf %155, %156 : vector<1x128xf32>
    %158 = arith.negf %157 : vector<1x128xf32>
    %159 = math.exp %158 : vector<1x128xf32>
    %cst_39 = arith.constant 1.000000e+00 : f32
    %160 = vector.broadcast %cst_39 : f32 to vector<1x128xf32>
    %161 = arith.addf %160, %159 : vector<1x128xf32>
    %162 = arith.divf %160, %161 : vector<1x128xf32>
    %163 = vector.extract_strided_slice %143 {offsets = [0, 256], sizes = [1, 128], strides = [1, 1]} : vector<1x384xf32> to vector<1x128xf32>
    %164 = vector.extract_strided_slice %146 {offsets = [0, 256], sizes = [1, 128], strides = [1, 1]} : vector<1x384xf32> to vector<1x128xf32>
    %165 = arith.mulf %154, %164 : vector<1x128xf32>
    %166 = arith.addf %163, %165 : vector<1x128xf32>
    %167 = math.tanh %166 : vector<1x128xf32>
    %cst_40 = arith.constant 1.000000e+00 : f32
    %168 = vector.broadcast %cst_40 : f32 to vector<1x128xf32>
    %169 = arith.subf %168, %162 : vector<1x128xf32>
    %170 = arith.mulf %169, %167 : vector<1x128xf32>
    %171 = arith.mulf %162, %139 : vector<1x128xf32>
    %172 = arith.addf %170, %171 : vector<1x128xf32>
    %173 = arith.index_cast %c4_i32 : i32 to index
    %c0_41 = arith.constant 0 : index
    %174 = vector.load %arg16[%173, %c0_41] : memref<8x128xf32, #tpu.memory_space<vmem>>, vector<1x128xf32>
    tpu.vector_store %arg16[%173, %c0_41], %172 {strides = array<i32>} : memref<8x128xf32, #tpu.memory_space<vmem>>, vector<1x128xf32>,
    %c5_i32 = arith.constant 5 : i32
    %175 = arith.index_cast %c5_i32 : i32 to index
    %c0_42 = arith.constant 0 : index
    %176 = vector.load %arg17[%175, %c0_42] : memref<8x384xf32, #tpu.memory_space<vmem>>, vector<1x384xf32>
    %177 = arith.truncf %172 : vector<1x128xf32> to vector<1x128xbf16>
    %cst_43 = arith.constant dense<0.000000e+00> : vector<1x384xf32>
    %178 = tpu.matmul %177, %7, %cst_43 {dimension_numbers = #tpu.dot_dimension_numbers<[1], [0], [0], [1], [0, 0, 1, 1], [], []>} : vector<1x128xbf16>, vector<128x384xbf16>, vector<1x384xf32> -> vector<1x384xf32>
    %179 = arith.addf %178, %8 : vector<1x384xf32>
    %180 = vector.extract_strided_slice %176 {offsets = [0, 0], sizes = [1, 128], strides = [1, 1]} : vector<1x384xf32> to vector<1x128xf32>
    %181 = vector.extract_strided_slice %179 {offsets = [0, 0], sizes = [1, 128], strides = [1, 1]} : vector<1x384xf32> to vector<1x128xf32>
    %182 = arith.addf %180, %181 : vector<1x128xf32>
    %183 = arith.negf %182 : vector<1x128xf32>
    %184 = math.exp %183 : vector<1x128xf32>
    %cst_44 = arith.constant 1.000000e+00 : f32
    %185 = vector.broadcast %cst_44 : f32 to vector<1x128xf32>
    %186 = arith.addf %185, %184 : vector<1x128xf32>
    %187 = arith.divf %185, %186 : vector<1x128xf32>
    %188 = vector.extract_strided_slice %176 {offsets = [0, 128], sizes = [1, 128], strides = [1, 1]} : vector<1x384xf32> to vector<1x128xf32>
    %189 = vector.extract_strided_slice %179 {offsets = [0, 128], sizes = [1, 128], strides = [1, 1]} : vector<1x384xf32> to vector<1x128xf32>
    %190 = arith.addf %188, %189 : vector<1x128xf32>
    %191 = arith.negf %190 : vector<1x128xf32>
    %192 = math.exp %191 : vector<1x128xf32>
    %cst_45 = arith.constant 1.000000e+00 : f32
    %193 = vector.broadcast %cst_45 : f32 to vector<1x128xf32>
    %194 = arith.addf %193, %192 : vector<1x128xf32>
    %195 = arith.divf %193, %194 : vector<1x128xf32>
    %196 = vector.extract_strided_slice %176 {offsets = [0, 256], sizes = [1, 128], strides = [1, 1]} : vector<1x384xf32> to vector<1x128xf32>
    %197 = vector.extract_strided_slice %179 {offsets = [0, 256], sizes = [1, 128], strides = [1, 1]} : vector<1x384xf32> to vector<1x128xf32>
    %198 = arith.mulf %187, %197 : vector<1x128xf32>
    %199 = arith.addf %196, %198 : vector<1x128xf32>
    %200 = math.tanh %199 : vector<1x128xf32>
    %cst_46 = arith.constant 1.000000e+00 : f32
    %201 = vector.broadcast %cst_46 : f32 to vector<1x128xf32>
    %202 = arith.subf %201, %195 : vector<1x128xf32>
    %203 = arith.mulf %202, %200 : vector<1x128xf32>
    %204 = arith.mulf %195, %172 : vector<1x128xf32>
    %205 = arith.addf %203, %204 : vector<1x128xf32>
    %206 = arith.index_cast %c5_i32 : i32 to index
    %c0_47 = arith.constant 0 : index
    %207 = vector.load %arg16[%206, %c0_47] : memref<8x128xf32, #tpu.memory_space<vmem>>, vector<1x128xf32>
    tpu.vector_store %arg16[%206, %c0_47], %205 {strides = array<i32>} : memref<8x128xf32, #tpu.memory_space<vmem>>, vector<1x128xf32>,
    %c6_i32 = arith.constant 6 : i32
    %208 = arith.index_cast %c6_i32 : i32 to index
    %c0_48 = arith.constant 0 : index
    %209 = vector.load %arg17[%208, %c0_48] : memref<8x384xf32, #tpu.memory_space<vmem>>, vector<1x384xf32>
    %210 = arith.truncf %205 : vector<1x128xf32> to vector<1x128xbf16>
    %cst_49 = arith.constant dense<0.000000e+00> : vector<1x384xf32>
    %211 = tpu.matmul %210, %7, %cst_49 {dimension_numbers = #tpu.dot_dimension_numbers<[1], [0], [0], [1], [0, 0, 1, 1], [], []>} : vector<1x128xbf16>, vector<128x384xbf16>, vector<1x384xf32> -> vector<1x384xf32>
    %212 = arith.addf %211, %8 : vector<1x384xf32>
    %213 = vector.extract_strided_slice %209 {offsets = [0, 0], sizes = [1, 128], strides = [1, 1]} : vector<1x384xf32> to vector<1x128xf32>
    %214 = vector.extract_strided_slice %212 {offsets = [0, 0], sizes = [1, 128], strides = [1, 1]} : vector<1x384xf32> to vector<1x128xf32>
    %215 = arith.addf %213, %214 : vector<1x128xf32>
    %216 = arith.negf %215 : vector<1x128xf32>
    %217 = math.exp %216 : vector<1x128xf32>
    %cst_50 = arith.constant 1.000000e+00 : f32
    %218 = vector.broadcast %cst_50 : f32 to vector<1x128xf32>
    %219 = arith.addf %218, %217 : vector<1x128xf32>
    %220 = arith.divf %218, %219 : vector<1x128xf32>
    %221 = vector.extract_strided_slice %209 {offsets = [0, 128], sizes = [1, 128], strides = [1, 1]} : vector<1x384xf32> to vector<1x128xf32>
    %222 = vector.extract_strided_slice %212 {offsets = [0, 128], sizes = [1, 128], strides = [1, 1]} : vector<1x384xf32> to vector<1x128xf32>
    %223 = arith.addf %221, %222 : vector<1x128xf32>
    %224 = arith.negf %223 : vector<1x128xf32>
    %225 = math.exp %224 : vector<1x128xf32>
    %cst_51 = arith.constant 1.000000e+00 : f32
    %226 = vector.broadcast %cst_51 : f32 to vector<1x128xf32>
    %227 = arith.addf %226, %225 : vector<1x128xf32>
    %228 = arith.divf %226, %227 : vector<1x128xf32>
    %229 = vector.extract_strided_slice %209 {offsets = [0, 256], sizes = [1, 128], strides = [1, 1]} : vector<1x384xf32> to vector<1x128xf32>
    %230 = vector.extract_strided_slice %212 {offsets = [0, 256], sizes = [1, 128], strides = [1, 1]} : vector<1x384xf32> to vector<1x128xf32>
    %231 = arith.mulf %220, %230 : vector<1x128xf32>
    %232 = arith.addf %229, %231 : vector<1x128xf32>
    %233 = math.tanh %232 : vector<1x128xf32>
    %cst_52 = arith.constant 1.000000e+00 : f32
    %234 = vector.broadcast %cst_52 : f32 to vector<1x128xf32>
    %235 = arith.subf %234, %228 : vector<1x128xf32>
    %236 = arith.mulf %235, %233 : vector<1x128xf32>
    %237 = arith.mulf %228, %205 : vector<1x128xf32>
    %238 = arith.addf %236, %237 : vector<1x128xf32>
    %239 = arith.index_cast %c6_i32 : i32 to index
    %c0_53 = arith.constant 0 : index
    %240 = vector.load %arg16[%239, %c0_53] : memref<8x128xf32, #tpu.memory_space<vmem>>, vector<1x128xf32>
    tpu.vector_store %arg16[%239, %c0_53], %238 {strides = array<i32>} : memref<8x128xf32, #tpu.memory_space<vmem>>, vector<1x128xf32>,
    %c7_i32 = arith.constant 7 : i32
    %241 = arith.index_cast %c7_i32 : i32 to index
    %c0_54 = arith.constant 0 : index
    %242 = vector.load %arg17[%241, %c0_54] : memref<8x384xf32, #tpu.memory_space<vmem>>, vector<1x384xf32>
    %243 = arith.truncf %238 : vector<1x128xf32> to vector<1x128xbf16>
    %cst_55 = arith.constant dense<0.000000e+00> : vector<1x384xf32>
    %244 = tpu.matmul %243, %7, %cst_55 {dimension_numbers = #tpu.dot_dimension_numbers<[1], [0], [0], [1], [0, 0, 1, 1], [], []>} : vector<1x128xbf16>, vector<128x384xbf16>, vector<1x384xf32> -> vector<1x384xf32>
    %245 = arith.addf %244, %8 : vector<1x384xf32>
    %246 = vector.extract_strided_slice %242 {offsets = [0, 0], sizes = [1, 128], strides = [1, 1]} : vector<1x384xf32> to vector<1x128xf32>
    %247 = vector.extract_strided_slice %245 {offsets = [0, 0], sizes = [1, 128], strides = [1, 1]} : vector<1x384xf32> to vector<1x128xf32>
    %248 = arith.addf %246, %247 : vector<1x128xf32>
    %249 = arith.negf %248 : vector<1x128xf32>
    %250 = math.exp %249 : vector<1x128xf32>
    %cst_56 = arith.constant 1.000000e+00 : f32
    %251 = vector.broadcast %cst_56 : f32 to vector<1x128xf32>
    %252 = arith.addf %251, %250 : vector<1x128xf32>
    %253 = arith.divf %251, %252 : vector<1x128xf32>
    %254 = vector.extract_strided_slice %242 {offsets = [0, 128], sizes = [1, 128], strides = [1, 1]} : vector<1x384xf32> to vector<1x128xf32>
    %255 = vector.extract_strided_slice %245 {offsets = [0, 128], sizes = [1, 128], strides = [1, 1]} : vector<1x384xf32> to vector<1x128xf32>
    %256 = arith.addf %254, %255 : vector<1x128xf32>
    %257 = arith.negf %256 : vector<1x128xf32>
    %258 = math.exp %257 : vector<1x128xf32>
    %cst_57 = arith.constant 1.000000e+00 : f32
    %259 = vector.broadcast %cst_57 : f32 to vector<1x128xf32>
    %260 = arith.addf %259, %258 : vector<1x128xf32>
    %261 = arith.divf %259, %260 : vector<1x128xf32>
    %262 = vector.extract_strided_slice %242 {offsets = [0, 256], sizes = [1, 128], strides = [1, 1]} : vector<1x384xf32> to vector<1x128xf32>
    %263 = vector.extract_strided_slice %245 {offsets = [0, 256], sizes = [1, 128], strides = [1, 1]} : vector<1x384xf32> to vector<1x128xf32>
    %264 = arith.mulf %253, %263 : vector<1x128xf32>
    %265 = arith.addf %262, %264 : vector<1x128xf32>
    %266 = math.tanh %265 : vector<1x128xf32>
    %cst_58 = arith.constant 1.000000e+00 : f32
    %267 = vector.broadcast %cst_58 : f32 to vector<1x128xf32>
    %268 = arith.subf %267, %261 : vector<1x128xf32>
    %269 = arith.mulf %268, %266 : vector<1x128xf32>
    %270 = arith.mulf %261, %238 : vector<1x128xf32>
    %271 = arith.addf %269, %270 : vector<1x128xf32>
    %272 = arith.index_cast %c7_i32 : i32 to index
    %c0_59 = arith.constant 0 : index
    %273 = vector.load %arg16[%272, %c0_59] : memref<8x128xf32, #tpu.memory_space<vmem>>, vector<1x128xf32>
    tpu.vector_store %arg16[%272, %c0_59], %271 {strides = array<i32>} : memref<8x128xf32, #tpu.memory_space<vmem>>, vector<1x128xf32>,
    %c8_i32 = arith.constant 8 : i32
    %c0_60 = arith.constant 0 : index
    %c0_61 = arith.constant 0 : index
    %274 = vector.load %arg6[%c0_60, %c0_61] : memref<128x384xbf16, #tpu.memory_space<vmem>>, vector<128x384xbf16>
    %c0_62 = arith.constant 0 : index
    %c0_63 = arith.constant 0 : index
    %275 = vector.load %arg7[%c0_62, %c0_63] : memref<128x384xbf16, #tpu.memory_space<vmem>>, vector<128x384xbf16>
    %c0_64 = arith.constant 0 : index
    %c0_65 = arith.constant 0 : index
    %276 = vector.load %arg8[%c0_64, %c0_65] : memref<1x384xf32, #tpu.memory_space<vmem>>, vector<1x384xf32>
    %c0_66 = arith.constant 0 : index
    %c0_67 = arith.constant 0 : index
    %277 = vector.load %arg9[%c0_66, %c0_67] : memref<1x384xf32, #tpu.memory_space<vmem>>, vector<1x384xf32>
    %c0_68 = arith.constant 0 : index
    %c0_69 = arith.constant 0 : index
    %278 = vector.load %arg10[%c0_68, %c0_69] : memref<256x128xbf16, #tpu.memory_space<vmem>>, vector<256x128xbf16>
    %c0_70 = arith.constant 0 : index
    %c0_71 = arith.constant 0 : index
    %279 = vector.load %arg11[%c0_70, %c0_71] : memref<1x128xf32, #tpu.memory_space<vmem>>, vector<1x128xf32>
    %c0_72 = arith.constant 0 : index
    %c0_73 = arith.constant 0 : index
    %280 = vector.load %arg12[%c0_72, %c0_73] : memref<128x256xbf16, #tpu.memory_space<vmem>>, vector<128x256xbf16>
    %c0_74 = arith.constant 0 : index
    %c0_75 = arith.constant 0 : index
    %281 = vector.load %arg13[%c0_74, %c0_75] : memref<1x256xf32, #tpu.memory_space<vmem>>, vector<1x256xf32>
    %c0_76 = arith.constant 0 : index
    %c0_77 = arith.constant 0 : index
    %282 = vector.load %arg16[%c0_76, %c0_77] : memref<8x128xf32, #tpu.memory_space<vmem>>, vector<8x128xf32>
    %c1 = arith.constant 1 : index
    %c0_78 = arith.constant 0 : index
    %283 = vector.load %arg1[%c1, %c0_78] : memref<256x128xf32, #tpu.memory_space<vmem>>, vector<1x128xf32>
    %c0_i32_79 = arith.constant 0 : i32
    %284 = arith.truncf %283 : vector<1x128xf32> to vector<1x128xbf16>
    %cst_80 = arith.constant dense<0.000000e+00> : vector<1x384xf32>
    %285 = tpu.matmul %284, %274, %cst_80 {dimension_numbers = #tpu.dot_dimension_numbers<[1], [0], [0], [1], [0, 0, 1, 1], [], []>} : vector<1x128xbf16>, vector<128x384xbf16>, vector<1x384xf32> -> vector<1x384xf32>
    %286 = arith.addf %285, %276 : vector<1x384xf32>
    %287 = arith.truncf %271 : vector<1x128xf32> to vector<1x128xbf16>
    %cst_81 = arith.constant dense<0.000000e+00> : vector<1x384xf32>
    %288 = tpu.matmul %287, %275, %cst_81 {dimension_numbers = #tpu.dot_dimension_numbers<[1], [0], [0], [1], [0, 0, 1, 1], [], []>} : vector<1x128xbf16>, vector<128x384xbf16>, vector<1x384xf32> -> vector<1x384xf32>
    %289 = arith.addf %288, %277 : vector<1x384xf32>
    %290 = vector.extract_strided_slice %286 {offsets = [0, 0], sizes = [1, 128], strides = [1, 1]} : vector<1x384xf32> to vector<1x128xf32>
    %291 = vector.extract_strided_slice %289 {offsets = [0, 0], sizes = [1, 128], strides = [1, 1]} : vector<1x384xf32> to vector<1x128xf32>
    %292 = arith.addf %290, %291 : vector<1x128xf32>
    %293 = arith.negf %292 : vector<1x128xf32>
    %294 = math.exp %293 : vector<1x128xf32>
    %cst_82 = arith.constant 1.000000e+00 : f32
    %295 = vector.broadcast %cst_82 : f32 to vector<1x128xf32>
    %296 = arith.addf %295, %294 : vector<1x128xf32>
    %297 = arith.divf %295, %296 : vector<1x128xf32>
    %298 = vector.extract_strided_slice %286 {offsets = [0, 128], sizes = [1, 128], strides = [1, 1]} : vector<1x384xf32> to vector<1x128xf32>
    %299 = vector.extract_strided_slice %289 {offsets = [0, 128], sizes = [1, 128], strides = [1, 1]} : vector<1x384xf32> to vector<1x128xf32>
    %300 = arith.addf %298, %299 : vector<1x128xf32>
    %301 = arith.negf %300 : vector<1x128xf32>
    %302 = math.exp %301 : vector<1x128xf32>
    %cst_83 = arith.constant 1.000000e+00 : f32
    %303 = vector.broadcast %cst_83 : f32 to vector<1x128xf32>
    %304 = arith.addf %303, %302 : vector<1x128xf32>
    %305 = arith.divf %303, %304 : vector<1x128xf32>
    %306 = vector.extract_strided_slice %286 {offsets = [0, 256], sizes = [1, 128], strides = [1, 1]} : vector<1x384xf32> to vector<1x128xf32>
    %307 = vector.extract_strided_slice %289 {offsets = [0, 256], sizes = [1, 128], strides = [1, 1]} : vector<1x384xf32> to vector<1x128xf32>
    %308 = arith.mulf %297, %307 : vector<1x128xf32>
    %309 = arith.addf %306, %308 : vector<1x128xf32>
    %310 = math.tanh %309 : vector<1x128xf32>
    %cst_84 = arith.constant 1.000000e+00 : f32
    %311 = vector.broadcast %cst_84 : f32 to vector<1x128xf32>
    %312 = arith.subf %311, %305 : vector<1x128xf32>
    %313 = arith.mulf %312, %310 : vector<1x128xf32>
    %314 = arith.mulf %305, %271 : vector<1x128xf32>
    %315 = arith.addf %313, %314 : vector<1x128xf32>
    %cst_85 = arith.constant dense<0.000000e+00> : vector<1x8xf32>
    %316 = tpu.matmul %315, %282, %cst_85 {dimension_numbers = #tpu.dot_dimension_numbers<[1], [1], [0], [0], [0, 0, 1, 0], [], []>} : vector<1x128xf32>, vector<8x128xf32>, vector<1x8xf32> -> vector<1x8xf32>
    %cst_86 = arith.constant dense<0xFF800000> : vector<1xf32>
    %317 = vector.multi_reduction <maximumf>, %316, %cst_86 [1] : vector<1x8xf32> to vector<1xf32>
    %cst_87 = arith.constant 0xFF800000 : f32
    %318 = vector.broadcast %cst_87 : f32 to vector<1xf32>
    %319 = arith.maximumf %318, %317 : vector<1xf32>
    %320 = vector.shape_cast %319 : vector<1xf32> to vector<1x1xf32>
    %321 = vector.broadcast %320 : vector<1x1xf32> to vector<1x8xf32>
    %322 = arith.subf %316, %321 : vector<1x8xf32>
    %323 = math.exp %322 : vector<1x8xf32>
    %cst_88 = arith.constant dense<0.000000e+00> : vector<1xf32>
    %324 = vector.multi_reduction <add>, %323, %cst_88 [1] : vector<1x8xf32> to vector<1xf32>
    %325 = vector.shape_cast %324 : vector<1xf32> to vector<1x1xf32>
    %326 = vector.broadcast %325 : vector<1x1xf32> to vector<1x8xf32>
    %327 = arith.divf %323, %326 : vector<1x8xf32>
    %cst_89 = arith.constant dense<0.000000e+00> : vector<1x128xf32>
    %328 = tpu.matmul %327, %282, %cst_89 {dimension_numbers = #tpu.dot_dimension_numbers<[1], [0], [0], [1], [0, 0, 1, 1], [], []>} : vector<1x8xf32>, vector<8x128xf32>, vector<1x128xf32> -> vector<1x128xf32>
    %329 = tpu.concatenate %315, %328 in 1 : vector<1x128xf32>, vector<1x128xf32> -> vector<1x256xf32>
    %330 = arith.truncf %329 : vector<1x256xf32> to vector<1x256xbf16>
    %cst_90 = arith.constant dense<0.000000e+00> : vector<1x128xf32>
    %331 = tpu.matmul %330, %278, %cst_90 {dimension_numbers = #tpu.dot_dimension_numbers<[1], [0], [0], [1], [0, 0, 1, 1], [], []>} : vector<1x256xbf16>, vector<256x128xbf16>, vector<1x128xf32> -> vector<1x128xf32>
    %332 = arith.addf %331, %279 : vector<1x128xf32>
    %333 = math.tanh %332 : vector<1x128xf32>
    %334 = arith.truncf %333 : vector<1x128xf32> to vector<1x128xbf16>
    %cst_91 = arith.constant dense<0.000000e+00> : vector<1x256xf32>
    %335 = tpu.matmul %334, %280, %cst_91 {dimension_numbers = #tpu.dot_dimension_numbers<[1], [0], [0], [1], [0, 0, 1, 1], [], []>} : vector<1x128xbf16>, vector<128x256xbf16>, vector<1x256xf32> -> vector<1x256xf32>
    %336 = arith.addf %335, %281 : vector<1x256xf32>
    %cst_92 = arith.constant dense<0xFF800000> : vector<1xf32>
    %337 = vector.multi_reduction <maximumf>, %336, %cst_92 [1] : vector<1x256xf32> to vector<1xf32>
    %338 = vector.shape_cast %337 : vector<1xf32> to vector<1x1xf32>
    %339 = tpu.iota {dimensions = array<i32: 1>} : vector<1x256xi32>
    %340 = vector.broadcast %338 : vector<1x1xf32> to vector<1x256xf32>
    %341 = arith.cmpf oge, %336, %340 : vector<1x256xf32>
    %c256_i32 = arith.constant 256 : i32
    %342 = vector.broadcast %c256_i32 : i32 to vector<1x256xi32>
    %343 = arith.select %341, %339, %342 : vector<1x256xi1>, vector<1x256xi32>
    %cst_93 = arith.constant dense<2147483647> : vector<1xi32>
    %344 = vector.multi_reduction <minsi>, %343, %cst_93 [1] : vector<1x256xi32> to vector<1xi32>
    %345 = vector.shape_cast %344 : vector<1xi32> to vector<1x1xi32>
    %346 = vector.broadcast %338 : vector<1x1xf32> to vector<1x256xf32>
    %347 = arith.subf %336, %346 : vector<1x256xf32>
    %348 = math.exp %347 : vector<1x256xf32>
    %cst_94 = arith.constant dense<0.000000e+00> : vector<1xf32>
    %349 = vector.multi_reduction <add>, %348, %cst_94 [1] : vector<1x256xf32> to vector<1xf32>
    %350 = vector.shape_cast %349 : vector<1xf32> to vector<1x1xf32>
    %cst_95 = arith.constant 1.000000e+00 : f32
    %351 = vector.broadcast %cst_95 : f32 to vector<1x1xf32>
    %352 = arith.divf %351, %350 : vector<1x1xf32>
    %c0_96 = arith.constant 0 : index
    %c0_97 = arith.constant 0 : index
    %353 = vector.load %arg18[%c0_96, %c0_97] : memref<1x1xi32, #tpu.memory_space<vmem>>, vector<1x1xi32>
    tpu.vector_store %arg18[%c0_96, %c0_97], %345 {strides = array<i32>} : memref<1x1xi32, #tpu.memory_space<vmem>>, vector<1x1xi32>,
    %c0_98 = arith.constant 0 : index
    %c0_99 = arith.constant 0 : index
    %354 = vector.load %arg18[%c0_98, %c0_99] : memref<1x1xi32, #tpu.memory_space<vmem>>, vector<1x1xi32>
    %355 = vector.extract %354[0, 0] : i32 from vector<1x1xi32>
    %356 = vector.broadcast %355 : i32 to vector<1x128xi32>
    %357 = arith.index_cast %c0_i32_79 : i32 to index
    %c0_100 = arith.constant 0 : index
    %358 = vector.load %arg14[%357, %c0_100] : memref<6x128xi32, #tpu.memory_space<vmem>>, vector<1x128xi32>
    tpu.vector_store %arg14[%357, %c0_100], %356 {strides = array<i32>} : memref<6x128xi32, #tpu.memory_space<vmem>>, vector<1x128xi32>,
    %359 = vector.shape_cast %352 : vector<1x1xf32> to vector<1x1xf32>
    %360 = vector.broadcast %359 : vector<1x1xf32> to vector<1x128xf32>
    %361 = arith.index_cast %c0_i32_79 : i32 to index
    %c0_101 = arith.constant 0 : index
    %362 = vector.load %arg15[%361, %c0_101] : memref<6x128xf32, #tpu.memory_space<vmem>>, vector<1x128xf32>
    tpu.vector_store %arg15[%361, %c0_101], %360 {strides = array<i32>} : memref<6x128xf32, #tpu.memory_space<vmem>>, vector<1x128xf32>,
    %363 = arith.index_cast %355 : i32 to index
    %c0_102 = arith.constant 0 : index
    %364 = vector.load %arg1[%363, %c0_102] : memref<256x128xf32, #tpu.memory_space<vmem>>, vector<1x128xf32>
    %c1_i32_103 = arith.constant 1 : i32
    %365 = arith.truncf %364 : vector<1x128xf32> to vector<1x128xbf16>
    %cst_104 = arith.constant dense<0.000000e+00> : vector<1x384xf32>
    %366 = tpu.matmul %365, %274, %cst_104 {dimension_numbers = #tpu.dot_dimension_numbers<[1], [0], [0], [1], [0, 0, 1, 1], [], []>} : vector<1x128xbf16>, vector<128x384xbf16>, vector<1x384xf32> -> vector<1x384xf32>
    %367 = arith.addf %366, %276 : vector<1x384xf32>
    %368 = arith.truncf %315 : vector<1x128xf32> to vector<1x128xbf16>
    %cst_105 = arith.constant dense<0.000000e+00> : vector<1x384xf32>
    %369 = tpu.matmul %368, %275, %cst_105 {dimension_numbers = #tpu.dot_dimension_numbers<[1], [0], [0], [1], [0, 0, 1, 1], [], []>} : vector<1x128xbf16>, vector<128x384xbf16>, vector<1x384xf32> -> vector<1x384xf32>
    %370 = arith.addf %369, %277 : vector<1x384xf32>
    %371 = vector.extract_strided_slice %367 {offsets = [0, 0], sizes = [1, 128], strides = [1, 1]} : vector<1x384xf32> to vector<1x128xf32>
    %372 = vector.extract_strided_slice %370 {offsets = [0, 0], sizes = [1, 128], strides = [1, 1]} : vector<1x384xf32> to vector<1x128xf32>
    %373 = arith.addf %371, %372 : vector<1x128xf32>
    %374 = arith.negf %373 : vector<1x128xf32>
    %375 = math.exp %374 : vector<1x128xf32>
    %cst_106 = arith.constant 1.000000e+00 : f32
    %376 = vector.broadcast %cst_106 : f32 to vector<1x128xf32>
    %377 = arith.addf %376, %375 : vector<1x128xf32>
    %378 = arith.divf %376, %377 : vector<1x128xf32>
    %379 = vector.extract_strided_slice %367 {offsets = [0, 128], sizes = [1, 128], strides = [1, 1]} : vector<1x384xf32> to vector<1x128xf32>
    %380 = vector.extract_strided_slice %370 {offsets = [0, 128], sizes = [1, 128], strides = [1, 1]} : vector<1x384xf32> to vector<1x128xf32>
    %381 = arith.addf %379, %380 : vector<1x128xf32>
    %382 = arith.negf %381 : vector<1x128xf32>
    %383 = math.exp %382 : vector<1x128xf32>
    %cst_107 = arith.constant 1.000000e+00 : f32
    %384 = vector.broadcast %cst_107 : f32 to vector<1x128xf32>
    %385 = arith.addf %384, %383 : vector<1x128xf32>
    %386 = arith.divf %384, %385 : vector<1x128xf32>
    %387 = vector.extract_strided_slice %367 {offsets = [0, 256], sizes = [1, 128], strides = [1, 1]} : vector<1x384xf32> to vector<1x128xf32>
    %388 = vector.extract_strided_slice %370 {offsets = [0, 256], sizes = [1, 128], strides = [1, 1]} : vector<1x384xf32> to vector<1x128xf32>
    %389 = arith.mulf %378, %388 : vector<1x128xf32>
    %390 = arith.addf %387, %389 : vector<1x128xf32>
    %391 = math.tanh %390 : vector<1x128xf32>
    %cst_108 = arith.constant 1.000000e+00 : f32
    %392 = vector.broadcast %cst_108 : f32 to vector<1x128xf32>
    %393 = arith.subf %392, %386 : vector<1x128xf32>
    %394 = arith.mulf %393, %391 : vector<1x128xf32>
    %395 = arith.mulf %386, %315 : vector<1x128xf32>
    %396 = arith.addf %394, %395 : vector<1x128xf32>
    %cst_109 = arith.constant dense<0.000000e+00> : vector<1x8xf32>
    %397 = tpu.matmul %396, %282, %cst_109 {dimension_numbers = #tpu.dot_dimension_numbers<[1], [1], [0], [0], [0, 0, 1, 0], [], []>} : vector<1x128xf32>, vector<8x128xf32>, vector<1x8xf32> -> vector<1x8xf32>
    %cst_110 = arith.constant dense<0xFF800000> : vector<1xf32>
    %398 = vector.multi_reduction <maximumf>, %397, %cst_110 [1] : vector<1x8xf32> to vector<1xf32>
    %cst_111 = arith.constant 0xFF800000 : f32
    %399 = vector.broadcast %cst_111 : f32 to vector<1xf32>
    %400 = arith.maximumf %399, %398 : vector<1xf32>
    %401 = vector.shape_cast %400 : vector<1xf32> to vector<1x1xf32>
    %402 = vector.broadcast %401 : vector<1x1xf32> to vector<1x8xf32>
    %403 = arith.subf %397, %402 : vector<1x8xf32>
    %404 = math.exp %403 : vector<1x8xf32>
    %cst_112 = arith.constant dense<0.000000e+00> : vector<1xf32>
    %405 = vector.multi_reduction <add>, %404, %cst_112 [1] : vector<1x8xf32> to vector<1xf32>
    %406 = vector.shape_cast %405 : vector<1xf32> to vector<1x1xf32>
    %407 = vector.broadcast %406 : vector<1x1xf32> to vector<1x8xf32>
    %408 = arith.divf %404, %407 : vector<1x8xf32>
    %cst_113 = arith.constant dense<0.000000e+00> : vector<1x128xf32>
    %409 = tpu.matmul %408, %282, %cst_113 {dimension_numbers = #tpu.dot_dimension_numbers<[1], [0], [0], [1], [0, 0, 1, 1], [], []>} : vector<1x8xf32>, vector<8x128xf32>, vector<1x128xf32> -> vector<1x128xf32>
    %410 = tpu.concatenate %396, %409 in 1 : vector<1x128xf32>, vector<1x128xf32> -> vector<1x256xf32>
    %411 = arith.truncf %410 : vector<1x256xf32> to vector<1x256xbf16>
    %cst_114 = arith.constant dense<0.000000e+00> : vector<1x128xf32>
    %412 = tpu.matmul %411, %278, %cst_114 {dimension_numbers = #tpu.dot_dimension_numbers<[1], [0], [0], [1], [0, 0, 1, 1], [], []>} : vector<1x256xbf16>, vector<256x128xbf16>, vector<1x128xf32> -> vector<1x128xf32>
    %413 = arith.addf %412, %279 : vector<1x128xf32>
    %414 = math.tanh %413 : vector<1x128xf32>
    %415 = arith.truncf %414 : vector<1x128xf32> to vector<1x128xbf16>
    %cst_115 = arith.constant dense<0.000000e+00> : vector<1x256xf32>
    %416 = tpu.matmul %415, %280, %cst_115 {dimension_numbers = #tpu.dot_dimension_numbers<[1], [0], [0], [1], [0, 0, 1, 1], [], []>} : vector<1x128xbf16>, vector<128x256xbf16>, vector<1x256xf32> -> vector<1x256xf32>
    %417 = arith.addf %416, %281 : vector<1x256xf32>
    %cst_116 = arith.constant dense<0xFF800000> : vector<1xf32>
    %418 = vector.multi_reduction <maximumf>, %417, %cst_116 [1] : vector<1x256xf32> to vector<1xf32>
    %419 = vector.shape_cast %418 : vector<1xf32> to vector<1x1xf32>
    %420 = tpu.iota {dimensions = array<i32: 1>} : vector<1x256xi32>
    %421 = vector.broadcast %419 : vector<1x1xf32> to vector<1x256xf32>
    %422 = arith.cmpf oge, %417, %421 : vector<1x256xf32>
    %c256_i32_117 = arith.constant 256 : i32
    %423 = vector.broadcast %c256_i32_117 : i32 to vector<1x256xi32>
    %424 = arith.select %422, %420, %423 : vector<1x256xi1>, vector<1x256xi32>
    %cst_118 = arith.constant dense<2147483647> : vector<1xi32>
    %425 = vector.multi_reduction <minsi>, %424, %cst_118 [1] : vector<1x256xi32> to vector<1xi32>
    %426 = vector.shape_cast %425 : vector<1xi32> to vector<1x1xi32>
    %427 = vector.broadcast %419 : vector<1x1xf32> to vector<1x256xf32>
    %428 = arith.subf %417, %427 : vector<1x256xf32>
    %429 = math.exp %428 : vector<1x256xf32>
    %cst_119 = arith.constant dense<0.000000e+00> : vector<1xf32>
    %430 = vector.multi_reduction <add>, %429, %cst_119 [1] : vector<1x256xf32> to vector<1xf32>
    %431 = vector.shape_cast %430 : vector<1xf32> to vector<1x1xf32>
    %cst_120 = arith.constant 1.000000e+00 : f32
    %432 = vector.broadcast %cst_120 : f32 to vector<1x1xf32>
    %433 = arith.divf %432, %431 : vector<1x1xf32>
    %c0_121 = arith.constant 0 : index
    %c0_122 = arith.constant 0 : index
    %434 = vector.load %arg18[%c0_121, %c0_122] : memref<1x1xi32, #tpu.memory_space<vmem>>, vector<1x1xi32>
    tpu.vector_store %arg18[%c0_121, %c0_122], %426 {strides = array<i32>} : memref<1x1xi32, #tpu.memory_space<vmem>>, vector<1x1xi32>,
    %c0_123 = arith.constant 0 : index
    %c0_124 = arith.constant 0 : index
    %435 = vector.load %arg18[%c0_123, %c0_124] : memref<1x1xi32, #tpu.memory_space<vmem>>, vector<1x1xi32>
    %436 = vector.extract %435[0, 0] : i32 from vector<1x1xi32>
    %437 = vector.broadcast %436 : i32 to vector<1x128xi32>
    %438 = arith.index_cast %c1_i32_103 : i32 to index
    %c0_125 = arith.constant 0 : index
    %439 = vector.load %arg14[%438, %c0_125] : memref<6x128xi32, #tpu.memory_space<vmem>>, vector<1x128xi32>
    tpu.vector_store %arg14[%438, %c0_125], %437 {strides = array<i32>} : memref<6x128xi32, #tpu.memory_space<vmem>>, vector<1x128xi32>,
    %440 = vector.shape_cast %433 : vector<1x1xf32> to vector<1x1xf32>
    %441 = vector.broadcast %440 : vector<1x1xf32> to vector<1x128xf32>
    %442 = arith.index_cast %c1_i32_103 : i32 to index
    %c0_126 = arith.constant 0 : index
    %443 = vector.load %arg15[%442, %c0_126] : memref<6x128xf32, #tpu.memory_space<vmem>>, vector<1x128xf32>
    tpu.vector_store %arg15[%442, %c0_126], %441 {strides = array<i32>} : memref<6x128xf32, #tpu.memory_space<vmem>>, vector<1x128xf32>,
    %444 = arith.index_cast %436 : i32 to index
    %c0_127 = arith.constant 0 : index
    %445 = vector.load %arg1[%444, %c0_127] : memref<256x128xf32, #tpu.memory_space<vmem>>, vector<1x128xf32>
    %c2_i32_128 = arith.constant 2 : i32
    %446 = arith.truncf %445 : vector<1x128xf32> to vector<1x128xbf16>
    %cst_129 = arith.constant dense<0.000000e+00> : vector<1x384xf32>
    %447 = tpu.matmul %446, %274, %cst_129 {dimension_numbers = #tpu.dot_dimension_numbers<[1], [0], [0], [1], [0, 0, 1, 1], [], []>} : vector<1x128xbf16>, vector<128x384xbf16>, vector<1x384xf32> -> vector<1x384xf32>
    %448 = arith.addf %447, %276 : vector<1x384xf32>
    %449 = arith.truncf %396 : vector<1x128xf32> to vector<1x128xbf16>
    %cst_130 = arith.constant dense<0.000000e+00> : vector<1x384xf32>
    %450 = tpu.matmul %449, %275, %cst_130 {dimension_numbers = #tpu.dot_dimension_numbers<[1], [0], [0], [1], [0, 0, 1, 1], [], []>} : vector<1x128xbf16>, vector<128x384xbf16>, vector<1x384xf32> -> vector<1x384xf32>
    %451 = arith.addf %450, %277 : vector<1x384xf32>
    %452 = vector.extract_strided_slice %448 {offsets = [0, 0], sizes = [1, 128], strides = [1, 1]} : vector<1x384xf32> to vector<1x128xf32>
    %453 = vector.extract_strided_slice %451 {offsets = [0, 0], sizes = [1, 128], strides = [1, 1]} : vector<1x384xf32> to vector<1x128xf32>
    %454 = arith.addf %452, %453 : vector<1x128xf32>
    %455 = arith.negf %454 : vector<1x128xf32>
    %456 = math.exp %455 : vector<1x128xf32>
    %cst_131 = arith.constant 1.000000e+00 : f32
    %457 = vector.broadcast %cst_131 : f32 to vector<1x128xf32>
    %458 = arith.addf %457, %456 : vector<1x128xf32>
    %459 = arith.divf %457, %458 : vector<1x128xf32>
    %460 = vector.extract_strided_slice %448 {offsets = [0, 128], sizes = [1, 128], strides = [1, 1]} : vector<1x384xf32> to vector<1x128xf32>
    %461 = vector.extract_strided_slice %451 {offsets = [0, 128], sizes = [1, 128], strides = [1, 1]} : vector<1x384xf32> to vector<1x128xf32>
    %462 = arith.addf %460, %461 : vector<1x128xf32>
    %463 = arith.negf %462 : vector<1x128xf32>
    %464 = math.exp %463 : vector<1x128xf32>
    %cst_132 = arith.constant 1.000000e+00 : f32
    %465 = vector.broadcast %cst_132 : f32 to vector<1x128xf32>
    %466 = arith.addf %465, %464 : vector<1x128xf32>
    %467 = arith.divf %465, %466 : vector<1x128xf32>
    %468 = vector.extract_strided_slice %448 {offsets = [0, 256], sizes = [1, 128], strides = [1, 1]} : vector<1x384xf32> to vector<1x128xf32>
    %469 = vector.extract_strided_slice %451 {offsets = [0, 256], sizes = [1, 128], strides = [1, 1]} : vector<1x384xf32> to vector<1x128xf32>
    %470 = arith.mulf %459, %469 : vector<1x128xf32>
    %471 = arith.addf %468, %470 : vector<1x128xf32>
    %472 = math.tanh %471 : vector<1x128xf32>
    %cst_133 = arith.constant 1.000000e+00 : f32
    %473 = vector.broadcast %cst_133 : f32 to vector<1x128xf32>
    %474 = arith.subf %473, %467 : vector<1x128xf32>
    %475 = arith.mulf %474, %472 : vector<1x128xf32>
    %476 = arith.mulf %467, %396 : vector<1x128xf32>
    %477 = arith.addf %475, %476 : vector<1x128xf32>
    %cst_134 = arith.constant dense<0.000000e+00> : vector<1x8xf32>
    %478 = tpu.matmul %477, %282, %cst_134 {dimension_numbers = #tpu.dot_dimension_numbers<[1], [1], [0], [0], [0, 0, 1, 0], [], []>} : vector<1x128xf32>, vector<8x128xf32>, vector<1x8xf32> -> vector<1x8xf32>
    %cst_135 = arith.constant dense<0xFF800000> : vector<1xf32>
    %479 = vector.multi_reduction <maximumf>, %478, %cst_135 [1] : vector<1x8xf32> to vector<1xf32>
    %cst_136 = arith.constant 0xFF800000 : f32
    %480 = vector.broadcast %cst_136 : f32 to vector<1xf32>
    %481 = arith.maximumf %480, %479 : vector<1xf32>
    %482 = vector.shape_cast %481 : vector<1xf32> to vector<1x1xf32>
    %483 = vector.broadcast %482 : vector<1x1xf32> to vector<1x8xf32>
    %484 = arith.subf %478, %483 : vector<1x8xf32>
    %485 = math.exp %484 : vector<1x8xf32>
    %cst_137 = arith.constant dense<0.000000e+00> : vector<1xf32>
    %486 = vector.multi_reduction <add>, %485, %cst_137 [1] : vector<1x8xf32> to vector<1xf32>
    %487 = vector.shape_cast %486 : vector<1xf32> to vector<1x1xf32>
    %488 = vector.broadcast %487 : vector<1x1xf32> to vector<1x8xf32>
    %489 = arith.divf %485, %488 : vector<1x8xf32>
    %cst_138 = arith.constant dense<0.000000e+00> : vector<1x128xf32>
    %490 = tpu.matmul %489, %282, %cst_138 {dimension_numbers = #tpu.dot_dimension_numbers<[1], [0], [0], [1], [0, 0, 1, 1], [], []>} : vector<1x8xf32>, vector<8x128xf32>, vector<1x128xf32> -> vector<1x128xf32>
    %491 = tpu.concatenate %477, %490 in 1 : vector<1x128xf32>, vector<1x128xf32> -> vector<1x256xf32>
    %492 = arith.truncf %491 : vector<1x256xf32> to vector<1x256xbf16>
    %cst_139 = arith.constant dense<0.000000e+00> : vector<1x128xf32>
    %493 = tpu.matmul %492, %278, %cst_139 {dimension_numbers = #tpu.dot_dimension_numbers<[1], [0], [0], [1], [0, 0, 1, 1], [], []>} : vector<1x256xbf16>, vector<256x128xbf16>, vector<1x128xf32> -> vector<1x128xf32>
    %494 = arith.addf %493, %279 : vector<1x128xf32>
    %495 = math.tanh %494 : vector<1x128xf32>
    %496 = arith.truncf %495 : vector<1x128xf32> to vector<1x128xbf16>
    %cst_140 = arith.constant dense<0.000000e+00> : vector<1x256xf32>
    %497 = tpu.matmul %496, %280, %cst_140 {dimension_numbers = #tpu.dot_dimension_numbers<[1], [0], [0], [1], [0, 0, 1, 1], [], []>} : vector<1x128xbf16>, vector<128x256xbf16>, vector<1x256xf32> -> vector<1x256xf32>
    %498 = arith.addf %497, %281 : vector<1x256xf32>
    %cst_141 = arith.constant dense<0xFF800000> : vector<1xf32>
    %499 = vector.multi_reduction <maximumf>, %498, %cst_141 [1] : vector<1x256xf32> to vector<1xf32>
    %500 = vector.shape_cast %499 : vector<1xf32> to vector<1x1xf32>
    %501 = tpu.iota {dimensions = array<i32: 1>} : vector<1x256xi32>
    %502 = vector.broadcast %500 : vector<1x1xf32> to vector<1x256xf32>
    %503 = arith.cmpf oge, %498, %502 : vector<1x256xf32>
    %c256_i32_142 = arith.constant 256 : i32
    %504 = vector.broadcast %c256_i32_142 : i32 to vector<1x256xi32>
    %505 = arith.select %503, %501, %504 : vector<1x256xi1>, vector<1x256xi32>
    %cst_143 = arith.constant dense<2147483647> : vector<1xi32>
    %506 = vector.multi_reduction <minsi>, %505, %cst_143 [1] : vector<1x256xi32> to vector<1xi32>
    %507 = vector.shape_cast %506 : vector<1xi32> to vector<1x1xi32>
    %508 = vector.broadcast %500 : vector<1x1xf32> to vector<1x256xf32>
    %509 = arith.subf %498, %508 : vector<1x256xf32>
    %510 = math.exp %509 : vector<1x256xf32>
    %cst_144 = arith.constant dense<0.000000e+00> : vector<1xf32>
    %511 = vector.multi_reduction <add>, %510, %cst_144 [1] : vector<1x256xf32> to vector<1xf32>
    %512 = vector.shape_cast %511 : vector<1xf32> to vector<1x1xf32>
    %cst_145 = arith.constant 1.000000e+00 : f32
    %513 = vector.broadcast %cst_145 : f32 to vector<1x1xf32>
    %514 = arith.divf %513, %512 : vector<1x1xf32>
    %c0_146 = arith.constant 0 : index
    %c0_147 = arith.constant 0 : index
    %515 = vector.load %arg18[%c0_146, %c0_147] : memref<1x1xi32, #tpu.memory_space<vmem>>, vector<1x1xi32>
    tpu.vector_store %arg18[%c0_146, %c0_147], %507 {strides = array<i32>} : memref<1x1xi32, #tpu.memory_space<vmem>>, vector<1x1xi32>,
    %c0_148 = arith.constant 0 : index
    %c0_149 = arith.constant 0 : index
    %516 = vector.load %arg18[%c0_148, %c0_149] : memref<1x1xi32, #tpu.memory_space<vmem>>, vector<1x1xi32>
    %517 = vector.extract %516[0, 0] : i32 from vector<1x1xi32>
    %518 = vector.broadcast %517 : i32 to vector<1x128xi32>
    %519 = arith.index_cast %c2_i32_128 : i32 to index
    %c0_150 = arith.constant 0 : index
    %520 = vector.load %arg14[%519, %c0_150] : memref<6x128xi32, #tpu.memory_space<vmem>>, vector<1x128xi32>
    tpu.vector_store %arg14[%519, %c0_150], %518 {strides = array<i32>} : memref<6x128xi32, #tpu.memory_space<vmem>>, vector<1x128xi32>,
    %521 = vector.shape_cast %514 : vector<1x1xf32> to vector<1x1xf32>
    %522 = vector.broadcast %521 : vector<1x1xf32> to vector<1x128xf32>
    %523 = arith.index_cast %c2_i32_128 : i32 to index
    %c0_151 = arith.constant 0 : index
    %524 = vector.load %arg15[%523, %c0_151] : memref<6x128xf32, #tpu.memory_space<vmem>>, vector<1x128xf32>
    tpu.vector_store %arg15[%523, %c0_151], %522 {strides = array<i32>} : memref<6x128xf32, #tpu.memory_space<vmem>>, vector<1x128xf32>,
    %525 = arith.index_cast %517 : i32 to index
    %c0_152 = arith.constant 0 : index
    %526 = vector.load %arg1[%525, %c0_152] : memref<256x128xf32, #tpu.memory_space<vmem>>, vector<1x128xf32>
    %c3_i32_153 = arith.constant 3 : i32
    %527 = arith.truncf %526 : vector<1x128xf32> to vector<1x128xbf16>
    %cst_154 = arith.constant dense<0.000000e+00> : vector<1x384xf32>
    %528 = tpu.matmul %527, %274, %cst_154 {dimension_numbers = #tpu.dot_dimension_numbers<[1], [0], [0], [1], [0, 0, 1, 1], [], []>} : vector<1x128xbf16>, vector<128x384xbf16>, vector<1x384xf32> -> vector<1x384xf32>
    %529 = arith.addf %528, %276 : vector<1x384xf32>
    %530 = arith.truncf %477 : vector<1x128xf32> to vector<1x128xbf16>
    %cst_155 = arith.constant dense<0.000000e+00> : vector<1x384xf32>
    %531 = tpu.matmul %530, %275, %cst_155 {dimension_numbers = #tpu.dot_dimension_numbers<[1], [0], [0], [1], [0, 0, 1, 1], [], []>} : vector<1x128xbf16>, vector<128x384xbf16>, vector<1x384xf32> -> vector<1x384xf32>
    %532 = arith.addf %531, %277 : vector<1x384xf32>
    %533 = vector.extract_strided_slice %529 {offsets = [0, 0], sizes = [1, 128], strides = [1, 1]} : vector<1x384xf32> to vector<1x128xf32>
    %534 = vector.extract_strided_slice %532 {offsets = [0, 0], sizes = [1, 128], strides = [1, 1]} : vector<1x384xf32> to vector<1x128xf32>
    %535 = arith.addf %533, %534 : vector<1x128xf32>
    %536 = arith.negf %535 : vector<1x128xf32>
    %537 = math.exp %536 : vector<1x128xf32>
    %cst_156 = arith.constant 1.000000e+00 : f32
    %538 = vector.broadcast %cst_156 : f32 to vector<1x128xf32>
    %539 = arith.addf %538, %537 : vector<1x128xf32>
    %540 = arith.divf %538, %539 : vector<1x128xf32>
    %541 = vector.extract_strided_slice %529 {offsets = [0, 128], sizes = [1, 128], strides = [1, 1]} : vector<1x384xf32> to vector<1x128xf32>
    %542 = vector.extract_strided_slice %532 {offsets = [0, 128], sizes = [1, 128], strides = [1, 1]} : vector<1x384xf32> to vector<1x128xf32>
    %543 = arith.addf %541, %542 : vector<1x128xf32>
    %544 = arith.negf %543 : vector<1x128xf32>
    %545 = math.exp %544 : vector<1x128xf32>
    %cst_157 = arith.constant 1.000000e+00 : f32
    %546 = vector.broadcast %cst_157 : f32 to vector<1x128xf32>
    %547 = arith.addf %546, %545 : vector<1x128xf32>
    %548 = arith.divf %546, %547 : vector<1x128xf32>
    %549 = vector.extract_strided_slice %529 {offsets = [0, 256], sizes = [1, 128], strides = [1, 1]} : vector<1x384xf32> to vector<1x128xf32>
    %550 = vector.extract_strided_slice %532 {offsets = [0, 256], sizes = [1, 128], strides = [1, 1]} : vector<1x384xf32> to vector<1x128xf32>
    %551 = arith.mulf %540, %550 : vector<1x128xf32>
    %552 = arith.addf %549, %551 : vector<1x128xf32>
    %553 = math.tanh %552 : vector<1x128xf32>
    %cst_158 = arith.constant 1.000000e+00 : f32
    %554 = vector.broadcast %cst_158 : f32 to vector<1x128xf32>
    %555 = arith.subf %554, %548 : vector<1x128xf32>
    %556 = arith.mulf %555, %553 : vector<1x128xf32>
    %557 = arith.mulf %548, %477 : vector<1x128xf32>
    %558 = arith.addf %556, %557 : vector<1x128xf32>
    %cst_159 = arith.constant dense<0.000000e+00> : vector<1x8xf32>
    %559 = tpu.matmul %558, %282, %cst_159 {dimension_numbers = #tpu.dot_dimension_numbers<[1], [1], [0], [0], [0, 0, 1, 0], [], []>} : vector<1x128xf32>, vector<8x128xf32>, vector<1x8xf32> -> vector<1x8xf32>
    %cst_160 = arith.constant dense<0xFF800000> : vector<1xf32>
    %560 = vector.multi_reduction <maximumf>, %559, %cst_160 [1] : vector<1x8xf32> to vector<1xf32>
    %cst_161 = arith.constant 0xFF800000 : f32
    %561 = vector.broadcast %cst_161 : f32 to vector<1xf32>
    %562 = arith.maximumf %561, %560 : vector<1xf32>
    %563 = vector.shape_cast %562 : vector<1xf32> to vector<1x1xf32>
    %564 = vector.broadcast %563 : vector<1x1xf32> to vector<1x8xf32>
    %565 = arith.subf %559, %564 : vector<1x8xf32>
    %566 = math.exp %565 : vector<1x8xf32>
    %cst_162 = arith.constant dense<0.000000e+00> : vector<1xf32>
    %567 = vector.multi_reduction <add>, %566, %cst_162 [1] : vector<1x8xf32> to vector<1xf32>
    %568 = vector.shape_cast %567 : vector<1xf32> to vector<1x1xf32>
    %569 = vector.broadcast %568 : vector<1x1xf32> to vector<1x8xf32>
    %570 = arith.divf %566, %569 : vector<1x8xf32>
    %cst_163 = arith.constant dense<0.000000e+00> : vector<1x128xf32>
    %571 = tpu.matmul %570, %282, %cst_163 {dimension_numbers = #tpu.dot_dimension_numbers<[1], [0], [0], [1], [0, 0, 1, 1], [], []>} : vector<1x8xf32>, vector<8x128xf32>, vector<1x128xf32> -> vector<1x128xf32>
    %572 = tpu.concatenate %558, %571 in 1 : vector<1x128xf32>, vector<1x128xf32> -> vector<1x256xf32>
    %573 = arith.truncf %572 : vector<1x256xf32> to vector<1x256xbf16>
    %cst_164 = arith.constant dense<0.000000e+00> : vector<1x128xf32>
    %574 = tpu.matmul %573, %278, %cst_164 {dimension_numbers = #tpu.dot_dimension_numbers<[1], [0], [0], [1], [0, 0, 1, 1], [], []>} : vector<1x256xbf16>, vector<256x128xbf16>, vector<1x128xf32> -> vector<1x128xf32>
    %575 = arith.addf %574, %279 : vector<1x128xf32>
    %576 = math.tanh %575 : vector<1x128xf32>
    %577 = arith.truncf %576 : vector<1x128xf32> to vector<1x128xbf16>
    %cst_165 = arith.constant dense<0.000000e+00> : vector<1x256xf32>
    %578 = tpu.matmul %577, %280, %cst_165 {dimension_numbers = #tpu.dot_dimension_numbers<[1], [0], [0], [1], [0, 0, 1, 1], [], []>} : vector<1x128xbf16>, vector<128x256xbf16>, vector<1x256xf32> -> vector<1x256xf32>
    %579 = arith.addf %578, %281 : vector<1x256xf32>
    %cst_166 = arith.constant dense<0xFF800000> : vector<1xf32>
    %580 = vector.multi_reduction <maximumf>, %579, %cst_166 [1] : vector<1x256xf32> to vector<1xf32>
    %581 = vector.shape_cast %580 : vector<1xf32> to vector<1x1xf32>
    %582 = tpu.iota {dimensions = array<i32: 1>} : vector<1x256xi32>
    %583 = vector.broadcast %581 : vector<1x1xf32> to vector<1x256xf32>
    %584 = arith.cmpf oge, %579, %583 : vector<1x256xf32>
    %c256_i32_167 = arith.constant 256 : i32
    %585 = vector.broadcast %c256_i32_167 : i32 to vector<1x256xi32>
    %586 = arith.select %584, %582, %585 : vector<1x256xi1>, vector<1x256xi32>
    %cst_168 = arith.constant dense<2147483647> : vector<1xi32>
    %587 = vector.multi_reduction <minsi>, %586, %cst_168 [1] : vector<1x256xi32> to vector<1xi32>
    %588 = vector.shape_cast %587 : vector<1xi32> to vector<1x1xi32>
    %589 = vector.broadcast %581 : vector<1x1xf32> to vector<1x256xf32>
    %590 = arith.subf %579, %589 : vector<1x256xf32>
    %591 = math.exp %590 : vector<1x256xf32>
    %cst_169 = arith.constant dense<0.000000e+00> : vector<1xf32>
    %592 = vector.multi_reduction <add>, %591, %cst_169 [1] : vector<1x256xf32> to vector<1xf32>
    %593 = vector.shape_cast %592 : vector<1xf32> to vector<1x1xf32>
    %cst_170 = arith.constant 1.000000e+00 : f32
    %594 = vector.broadcast %cst_170 : f32 to vector<1x1xf32>
    %595 = arith.divf %594, %593 : vector<1x1xf32>
    %c0_171 = arith.constant 0 : index
    %c0_172 = arith.constant 0 : index
    %596 = vector.load %arg18[%c0_171, %c0_172] : memref<1x1xi32, #tpu.memory_space<vmem>>, vector<1x1xi32>
    tpu.vector_store %arg18[%c0_171, %c0_172], %588 {strides = array<i32>} : memref<1x1xi32, #tpu.memory_space<vmem>>, vector<1x1xi32>,
    %c0_173 = arith.constant 0 : index
    %c0_174 = arith.constant 0 : index
    %597 = vector.load %arg18[%c0_173, %c0_174] : memref<1x1xi32, #tpu.memory_space<vmem>>, vector<1x1xi32>
    %598 = vector.extract %597[0, 0] : i32 from vector<1x1xi32>
    %599 = vector.broadcast %598 : i32 to vector<1x128xi32>
    %600 = arith.index_cast %c3_i32_153 : i32 to index
    %c0_175 = arith.constant 0 : index
    %601 = vector.load %arg14[%600, %c0_175] : memref<6x128xi32, #tpu.memory_space<vmem>>, vector<1x128xi32>
    tpu.vector_store %arg14[%600, %c0_175], %599 {strides = array<i32>} : memref<6x128xi32, #tpu.memory_space<vmem>>, vector<1x128xi32>,
    %602 = vector.shape_cast %595 : vector<1x1xf32> to vector<1x1xf32>
    %603 = vector.broadcast %602 : vector<1x1xf32> to vector<1x128xf32>
    %604 = arith.index_cast %c3_i32_153 : i32 to index
    %c0_176 = arith.constant 0 : index
    %605 = vector.load %arg15[%604, %c0_176] : memref<6x128xf32, #tpu.memory_space<vmem>>, vector<1x128xf32>
    tpu.vector_store %arg15[%604, %c0_176], %603 {strides = array<i32>} : memref<6x128xf32, #tpu.memory_space<vmem>>, vector<1x128xf32>,
    %606 = arith.index_cast %598 : i32 to index
    %c0_177 = arith.constant 0 : index
    %607 = vector.load %arg1[%606, %c0_177] : memref<256x128xf32, #tpu.memory_space<vmem>>, vector<1x128xf32>
    %c4_i32_178 = arith.constant 4 : i32
    %608 = arith.truncf %607 : vector<1x128xf32> to vector<1x128xbf16>
    %cst_179 = arith.constant dense<0.000000e+00> : vector<1x384xf32>
    %609 = tpu.matmul %608, %274, %cst_179 {dimension_numbers = #tpu.dot_dimension_numbers<[1], [0], [0], [1], [0, 0, 1, 1], [], []>} : vector<1x128xbf16>, vector<128x384xbf16>, vector<1x384xf32> -> vector<1x384xf32>
    %610 = arith.addf %609, %276 : vector<1x384xf32>
    %611 = arith.truncf %558 : vector<1x128xf32> to vector<1x128xbf16>
    %cst_180 = arith.constant dense<0.000000e+00> : vector<1x384xf32>
    %612 = tpu.matmul %611, %275, %cst_180 {dimension_numbers = #tpu.dot_dimension_numbers<[1], [0], [0], [1], [0, 0, 1, 1], [], []>} : vector<1x128xbf16>, vector<128x384xbf16>, vector<1x384xf32> -> vector<1x384xf32>
    %613 = arith.addf %612, %277 : vector<1x384xf32>
    %614 = vector.extract_strided_slice %610 {offsets = [0, 0], sizes = [1, 128], strides = [1, 1]} : vector<1x384xf32> to vector<1x128xf32>
    %615 = vector.extract_strided_slice %613 {offsets = [0, 0], sizes = [1, 128], strides = [1, 1]} : vector<1x384xf32> to vector<1x128xf32>
    %616 = arith.addf %614, %615 : vector<1x128xf32>
    %617 = arith.negf %616 : vector<1x128xf32>
    %618 = math.exp %617 : vector<1x128xf32>
    %cst_181 = arith.constant 1.000000e+00 : f32
    %619 = vector.broadcast %cst_181 : f32 to vector<1x128xf32>
    %620 = arith.addf %619, %618 : vector<1x128xf32>
    %621 = arith.divf %619, %620 : vector<1x128xf32>
    %622 = vector.extract_strided_slice %610 {offsets = [0, 128], sizes = [1, 128], strides = [1, 1]} : vector<1x384xf32> to vector<1x128xf32>
    %623 = vector.extract_strided_slice %613 {offsets = [0, 128], sizes = [1, 128], strides = [1, 1]} : vector<1x384xf32> to vector<1x128xf32>
    %624 = arith.addf %622, %623 : vector<1x128xf32>
    %625 = arith.negf %624 : vector<1x128xf32>
    %626 = math.exp %625 : vector<1x128xf32>
    %cst_182 = arith.constant 1.000000e+00 : f32
    %627 = vector.broadcast %cst_182 : f32 to vector<1x128xf32>
    %628 = arith.addf %627, %626 : vector<1x128xf32>
    %629 = arith.divf %627, %628 : vector<1x128xf32>
    %630 = vector.extract_strided_slice %610 {offsets = [0, 256], sizes = [1, 128], strides = [1, 1]} : vector<1x384xf32> to vector<1x128xf32>
    %631 = vector.extract_strided_slice %613 {offsets = [0, 256], sizes = [1, 128], strides = [1, 1]} : vector<1x384xf32> to vector<1x128xf32>
    %632 = arith.mulf %621, %631 : vector<1x128xf32>
    %633 = arith.addf %630, %632 : vector<1x128xf32>
    %634 = math.tanh %633 : vector<1x128xf32>
    %cst_183 = arith.constant 1.000000e+00 : f32
    %635 = vector.broadcast %cst_183 : f32 to vector<1x128xf32>
    %636 = arith.subf %635, %629 : vector<1x128xf32>
    %637 = arith.mulf %636, %634 : vector<1x128xf32>
    %638 = arith.mulf %629, %558 : vector<1x128xf32>
    %639 = arith.addf %637, %638 : vector<1x128xf32>
    %cst_184 = arith.constant dense<0.000000e+00> : vector<1x8xf32>
    %640 = tpu.matmul %639, %282, %cst_184 {dimension_numbers = #tpu.dot_dimension_numbers<[1], [1], [0], [0], [0, 0, 1, 0], [], []>} : vector<1x128xf32>, vector<8x128xf32>, vector<1x8xf32> -> vector<1x8xf32>
    %cst_185 = arith.constant dense<0xFF800000> : vector<1xf32>
    %641 = vector.multi_reduction <maximumf>, %640, %cst_185 [1] : vector<1x8xf32> to vector<1xf32>
    %cst_186 = arith.constant 0xFF800000 : f32
    %642 = vector.broadcast %cst_186 : f32 to vector<1xf32>
    %643 = arith.maximumf %642, %641 : vector<1xf32>
    %644 = vector.shape_cast %643 : vector<1xf32> to vector<1x1xf32>
    %645 = vector.broadcast %644 : vector<1x1xf32> to vector<1x8xf32>
    %646 = arith.subf %640, %645 : vector<1x8xf32>
    %647 = math.exp %646 : vector<1x8xf32>
    %cst_187 = arith.constant dense<0.000000e+00> : vector<1xf32>
    %648 = vector.multi_reduction <add>, %647, %cst_187 [1] : vector<1x8xf32> to vector<1xf32>
    %649 = vector.shape_cast %648 : vector<1xf32> to vector<1x1xf32>
    %650 = vector.broadcast %649 : vector<1x1xf32> to vector<1x8xf32>
    %651 = arith.divf %647, %650 : vector<1x8xf32>
    %cst_188 = arith.constant dense<0.000000e+00> : vector<1x128xf32>
    %652 = tpu.matmul %651, %282, %cst_188 {dimension_numbers = #tpu.dot_dimension_numbers<[1], [0], [0], [1], [0, 0, 1, 1], [], []>} : vector<1x8xf32>, vector<8x128xf32>, vector<1x128xf32> -> vector<1x128xf32>
    %653 = tpu.concatenate %639, %652 in 1 : vector<1x128xf32>, vector<1x128xf32> -> vector<1x256xf32>
    %654 = arith.truncf %653 : vector<1x256xf32> to vector<1x256xbf16>
    %cst_189 = arith.constant dense<0.000000e+00> : vector<1x128xf32>
    %655 = tpu.matmul %654, %278, %cst_189 {dimension_numbers = #tpu.dot_dimension_numbers<[1], [0], [0], [1], [0, 0, 1, 1], [], []>} : vector<1x256xbf16>, vector<256x128xbf16>, vector<1x128xf32> -> vector<1x128xf32>
    %656 = arith.addf %655, %279 : vector<1x128xf32>
    %657 = math.tanh %656 : vector<1x128xf32>
    %658 = arith.truncf %657 : vector<1x128xf32> to vector<1x128xbf16>
    %cst_190 = arith.constant dense<0.000000e+00> : vector<1x256xf32>
    %659 = tpu.matmul %658, %280, %cst_190 {dimension_numbers = #tpu.dot_dimension_numbers<[1], [0], [0], [1], [0, 0, 1, 1], [], []>} : vector<1x128xbf16>, vector<128x256xbf16>, vector<1x256xf32> -> vector<1x256xf32>
    %660 = arith.addf %659, %281 : vector<1x256xf32>
    %cst_191 = arith.constant dense<0xFF800000> : vector<1xf32>
    %661 = vector.multi_reduction <maximumf>, %660, %cst_191 [1] : vector<1x256xf32> to vector<1xf32>
    %662 = vector.shape_cast %661 : vector<1xf32> to vector<1x1xf32>
    %663 = tpu.iota {dimensions = array<i32: 1>} : vector<1x256xi32>
    %664 = vector.broadcast %662 : vector<1x1xf32> to vector<1x256xf32>
    %665 = arith.cmpf oge, %660, %664 : vector<1x256xf32>
    %c256_i32_192 = arith.constant 256 : i32
    %666 = vector.broadcast %c256_i32_192 : i32 to vector<1x256xi32>
    %667 = arith.select %665, %663, %666 : vector<1x256xi1>, vector<1x256xi32>
    %cst_193 = arith.constant dense<2147483647> : vector<1xi32>
    %668 = vector.multi_reduction <minsi>, %667, %cst_193 [1] : vector<1x256xi32> to vector<1xi32>
    %669 = vector.shape_cast %668 : vector<1xi32> to vector<1x1xi32>
    %670 = vector.broadcast %662 : vector<1x1xf32> to vector<1x256xf32>
    %671 = arith.subf %660, %670 : vector<1x256xf32>
    %672 = math.exp %671 : vector<1x256xf32>
    %cst_194 = arith.constant dense<0.000000e+00> : vector<1xf32>
    %673 = vector.multi_reduction <add>, %672, %cst_194 [1] : vector<1x256xf32> to vector<1xf32>
    %674 = vector.shape_cast %673 : vector<1xf32> to vector<1x1xf32>
    %cst_195 = arith.constant 1.000000e+00 : f32
    %675 = vector.broadcast %cst_195 : f32 to vector<1x1xf32>
    %676 = arith.divf %675, %674 : vector<1x1xf32>
    %c0_196 = arith.constant 0 : index
    %c0_197 = arith.constant 0 : index
    %677 = vector.load %arg18[%c0_196, %c0_197] : memref<1x1xi32, #tpu.memory_space<vmem>>, vector<1x1xi32>
    tpu.vector_store %arg18[%c0_196, %c0_197], %669 {strides = array<i32>} : memref<1x1xi32, #tpu.memory_space<vmem>>, vector<1x1xi32>,
    %c0_198 = arith.constant 0 : index
    %c0_199 = arith.constant 0 : index
    %678 = vector.load %arg18[%c0_198, %c0_199] : memref<1x1xi32, #tpu.memory_space<vmem>>, vector<1x1xi32>
    %679 = vector.extract %678[0, 0] : i32 from vector<1x1xi32>
    %680 = vector.broadcast %679 : i32 to vector<1x128xi32>
    %681 = arith.index_cast %c4_i32_178 : i32 to index
    %c0_200 = arith.constant 0 : index
    %682 = vector.load %arg14[%681, %c0_200] : memref<6x128xi32, #tpu.memory_space<vmem>>, vector<1x128xi32>
    tpu.vector_store %arg14[%681, %c0_200], %680 {strides = array<i32>} : memref<6x128xi32, #tpu.memory_space<vmem>>, vector<1x128xi32>,
    %683 = vector.shape_cast %676 : vector<1x1xf32> to vector<1x1xf32>
    %684 = vector.broadcast %683 : vector<1x1xf32> to vector<1x128xf32>
    %685 = arith.index_cast %c4_i32_178 : i32 to index
    %c0_201 = arith.constant 0 : index
    %686 = vector.load %arg15[%685, %c0_201] : memref<6x128xf32, #tpu.memory_space<vmem>>, vector<1x128xf32>
    tpu.vector_store %arg15[%685, %c0_201], %684 {strides = array<i32>} : memref<6x128xf32, #tpu.memory_space<vmem>>, vector<1x128xf32>,
    %687 = arith.index_cast %679 : i32 to index
    %c0_202 = arith.constant 0 : index
    %688 = vector.load %arg1[%687, %c0_202] : memref<256x128xf32, #tpu.memory_space<vmem>>, vector<1x128xf32>
    %c5_i32_203 = arith.constant 5 : i32
    %689 = arith.truncf %688 : vector<1x128xf32> to vector<1x128xbf16>
    %cst_204 = arith.constant dense<0.000000e+00> : vector<1x384xf32>
    %690 = tpu.matmul %689, %274, %cst_204 {dimension_numbers = #tpu.dot_dimension_numbers<[1], [0], [0], [1], [0, 0, 1, 1], [], []>} : vector<1x128xbf16>, vector<128x384xbf16>, vector<1x384xf32> -> vector<1x384xf32>
    %691 = arith.addf %690, %276 : vector<1x384xf32>
    %692 = arith.truncf %639 : vector<1x128xf32> to vector<1x128xbf16>
    %cst_205 = arith.constant dense<0.000000e+00> : vector<1x384xf32>
    %693 = tpu.matmul %692, %275, %cst_205 {dimension_numbers = #tpu.dot_dimension_numbers<[1], [0], [0], [1], [0, 0, 1, 1], [], []>} : vector<1x128xbf16>, vector<128x384xbf16>, vector<1x384xf32> -> vector<1x384xf32>
    %694 = arith.addf %693, %277 : vector<1x384xf32>
    %695 = vector.extract_strided_slice %691 {offsets = [0, 0], sizes = [1, 128], strides = [1, 1]} : vector<1x384xf32> to vector<1x128xf32>
    %696 = vector.extract_strided_slice %694 {offsets = [0, 0], sizes = [1, 128], strides = [1, 1]} : vector<1x384xf32> to vector<1x128xf32>
    %697 = arith.addf %695, %696 : vector<1x128xf32>
    %698 = arith.negf %697 : vector<1x128xf32>
    %699 = math.exp %698 : vector<1x128xf32>
    %cst_206 = arith.constant 1.000000e+00 : f32
    %700 = vector.broadcast %cst_206 : f32 to vector<1x128xf32>
    %701 = arith.addf %700, %699 : vector<1x128xf32>
    %702 = arith.divf %700, %701 : vector<1x128xf32>
    %703 = vector.extract_strided_slice %691 {offsets = [0, 128], sizes = [1, 128], strides = [1, 1]} : vector<1x384xf32> to vector<1x128xf32>
    %704 = vector.extract_strided_slice %694 {offsets = [0, 128], sizes = [1, 128], strides = [1, 1]} : vector<1x384xf32> to vector<1x128xf32>
    %705 = arith.addf %703, %704 : vector<1x128xf32>
    %706 = arith.negf %705 : vector<1x128xf32>
    %707 = math.exp %706 : vector<1x128xf32>
    %cst_207 = arith.constant 1.000000e+00 : f32
    %708 = vector.broadcast %cst_207 : f32 to vector<1x128xf32>
    %709 = arith.addf %708, %707 : vector<1x128xf32>
    %710 = arith.divf %708, %709 : vector<1x128xf32>
    %711 = vector.extract_strided_slice %691 {offsets = [0, 256], sizes = [1, 128], strides = [1, 1]} : vector<1x384xf32> to vector<1x128xf32>
    %712 = vector.extract_strided_slice %694 {offsets = [0, 256], sizes = [1, 128], strides = [1, 1]} : vector<1x384xf32> to vector<1x128xf32>
    %713 = arith.mulf %702, %712 : vector<1x128xf32>
    %714 = arith.addf %711, %713 : vector<1x128xf32>
    %715 = math.tanh %714 : vector<1x128xf32>
    %cst_208 = arith.constant 1.000000e+00 : f32
    %716 = vector.broadcast %cst_208 : f32 to vector<1x128xf32>
    %717 = arith.subf %716, %710 : vector<1x128xf32>
    %718 = arith.mulf %717, %715 : vector<1x128xf32>
    %719 = arith.mulf %710, %639 : vector<1x128xf32>
    %720 = arith.addf %718, %719 : vector<1x128xf32>
    %cst_209 = arith.constant dense<0.000000e+00> : vector<1x8xf32>
    %721 = tpu.matmul %720, %282, %cst_209 {dimension_numbers = #tpu.dot_dimension_numbers<[1], [1], [0], [0], [0, 0, 1, 0], [], []>} : vector<1x128xf32>, vector<8x128xf32>, vector<1x8xf32> -> vector<1x8xf32>
    %cst_210 = arith.constant dense<0xFF800000> : vector<1xf32>
    %722 = vector.multi_reduction <maximumf>, %721, %cst_210 [1] : vector<1x8xf32> to vector<1xf32>
    %cst_211 = arith.constant 0xFF800000 : f32
    %723 = vector.broadcast %cst_211 : f32 to vector<1xf32>
    %724 = arith.maximumf %723, %722 : vector<1xf32>
    %725 = vector.shape_cast %724 : vector<1xf32> to vector<1x1xf32>
    %726 = vector.broadcast %725 : vector<1x1xf32> to vector<1x8xf32>
    %727 = arith.subf %721, %726 : vector<1x8xf32>
    %728 = math.exp %727 : vector<1x8xf32>
    %cst_212 = arith.constant dense<0.000000e+00> : vector<1xf32>
    %729 = vector.multi_reduction <add>, %728, %cst_212 [1] : vector<1x8xf32> to vector<1xf32>
    %730 = vector.shape_cast %729 : vector<1xf32> to vector<1x1xf32>
    %731 = vector.broadcast %730 : vector<1x1xf32> to vector<1x8xf32>
    %732 = arith.divf %728, %731 : vector<1x8xf32>
    %cst_213 = arith.constant dense<0.000000e+00> : vector<1x128xf32>
    %733 = tpu.matmul %732, %282, %cst_213 {dimension_numbers = #tpu.dot_dimension_numbers<[1], [0], [0], [1], [0, 0, 1, 1], [], []>} : vector<1x8xf32>, vector<8x128xf32>, vector<1x128xf32> -> vector<1x128xf32>
    %734 = tpu.concatenate %720, %733 in 1 : vector<1x128xf32>, vector<1x128xf32> -> vector<1x256xf32>
    %735 = arith.truncf %734 : vector<1x256xf32> to vector<1x256xbf16>
    %cst_214 = arith.constant dense<0.000000e+00> : vector<1x128xf32>
    %736 = tpu.matmul %735, %278, %cst_214 {dimension_numbers = #tpu.dot_dimension_numbers<[1], [0], [0], [1], [0, 0, 1, 1], [], []>} : vector<1x256xbf16>, vector<256x128xbf16>, vector<1x128xf32> -> vector<1x128xf32>
    %737 = arith.addf %736, %279 : vector<1x128xf32>
    %738 = math.tanh %737 : vector<1x128xf32>
    %739 = arith.truncf %738 : vector<1x128xf32> to vector<1x128xbf16>
    %cst_215 = arith.constant dense<0.000000e+00> : vector<1x256xf32>
    %740 = tpu.matmul %739, %280, %cst_215 {dimension_numbers = #tpu.dot_dimension_numbers<[1], [0], [0], [1], [0, 0, 1, 1], [], []>} : vector<1x128xbf16>, vector<128x256xbf16>, vector<1x256xf32> -> vector<1x256xf32>
    %741 = arith.addf %740, %281 : vector<1x256xf32>
    %cst_216 = arith.constant dense<0xFF800000> : vector<1xf32>
    %742 = vector.multi_reduction <maximumf>, %741, %cst_216 [1] : vector<1x256xf32> to vector<1xf32>
    %743 = vector.shape_cast %742 : vector<1xf32> to vector<1x1xf32>
    %744 = tpu.iota {dimensions = array<i32: 1>} : vector<1x256xi32>
    %745 = vector.broadcast %743 : vector<1x1xf32> to vector<1x256xf32>
    %746 = arith.cmpf oge, %741, %745 : vector<1x256xf32>
    %c256_i32_217 = arith.constant 256 : i32
    %747 = vector.broadcast %c256_i32_217 : i32 to vector<1x256xi32>
    %748 = arith.select %746, %744, %747 : vector<1x256xi1>, vector<1x256xi32>
    %cst_218 = arith.constant dense<2147483647> : vector<1xi32>
    %749 = vector.multi_reduction <minsi>, %748, %cst_218 [1] : vector<1x256xi32> to vector<1xi32>
    %750 = vector.shape_cast %749 : vector<1xi32> to vector<1x1xi32>
    %751 = vector.broadcast %743 : vector<1x1xf32> to vector<1x256xf32>
    %752 = arith.subf %741, %751 : vector<1x256xf32>
    %753 = math.exp %752 : vector<1x256xf32>
    %cst_219 = arith.constant dense<0.000000e+00> : vector<1xf32>
    %754 = vector.multi_reduction <add>, %753, %cst_219 [1] : vector<1x256xf32> to vector<1xf32>
    %755 = vector.shape_cast %754 : vector<1xf32> to vector<1x1xf32>
    %cst_220 = arith.constant 1.000000e+00 : f32
    %756 = vector.broadcast %cst_220 : f32 to vector<1x1xf32>
    %757 = arith.divf %756, %755 : vector<1x1xf32>
    %c0_221 = arith.constant 0 : index
    %c0_222 = arith.constant 0 : index
    %758 = vector.load %arg18[%c0_221, %c0_222] : memref<1x1xi32, #tpu.memory_space<vmem>>, vector<1x1xi32>
    tpu.vector_store %arg18[%c0_221, %c0_222], %750 {strides = array<i32>} : memref<1x1xi32, #tpu.memory_space<vmem>>, vector<1x1xi32>,
    %c0_223 = arith.constant 0 : index
    %c0_224 = arith.constant 0 : index
    %759 = vector.load %arg18[%c0_223, %c0_224] : memref<1x1xi32, #tpu.memory_space<vmem>>, vector<1x1xi32>
    %760 = vector.extract %759[0, 0] : i32 from vector<1x1xi32>
    %761 = vector.broadcast %760 : i32 to vector<1x128xi32>
    %762 = arith.index_cast %c5_i32_203 : i32 to index
    %c0_225 = arith.constant 0 : index
    %763 = vector.load %arg14[%762, %c0_225] : memref<6x128xi32, #tpu.memory_space<vmem>>, vector<1x128xi32>
    tpu.vector_store %arg14[%762, %c0_225], %761 {strides = array<i32>} : memref<6x128xi32, #tpu.memory_space<vmem>>, vector<1x128xi32>,
    %764 = vector.shape_cast %757 : vector<1x1xf32> to vector<1x1xf32>
    %765 = vector.broadcast %764 : vector<1x1xf32> to vector<1x128xf32>
    %766 = arith.index_cast %c5_i32_203 : i32 to index
    %c0_226 = arith.constant 0 : index
    %767 = vector.load %arg15[%766, %c0_226] : memref<6x128xf32, #tpu.memory_space<vmem>>, vector<1x128xf32>
    tpu.vector_store %arg15[%766, %c0_226], %765 {strides = array<i32>} : memref<6x128xf32, #tpu.memory_space<vmem>>, vector<1x128xf32>,
    %768 = arith.index_cast %760 : i32 to index
    %c0_227 = arith.constant 0 : index
    %769 = vector.load %arg1[%768, %c0_227] : memref<256x128xf32, #tpu.memory_space<vmem>>, vector<1x128xf32>
    %c6_i32_228 = arith.constant 6 : i32
    return
  }
}

</mosaic_0001>

<llo_original>
// kernel: greedy_search_decode.1
$region0: #{greedy_search_decode.1}
  #allocation0 [shape = 'u32[]', space=smem, size = 0x4, offset = 0x4, fixed_abs, tag = 'smem constant byte address 0x4 - core index']
  #allocation1 [shape = 'u32[144,128]{1,0:T(1,128)}', space=vmem, size = 0x12000, scoped, tag = 'internal scratch']
  #allocation2 [shape = 'f32[8,128]{1,0:T(8,128)}', space=vmem, size = 0x1000, scoped, tag = 'scratch operand']
  #allocation3 [shape = 'f32[8,384]{1,0:T(8,128)}', space=vmem, size = 0x3000, scoped, tag = 'scratch operand']
  #allocation4 [shape = 's32[1,1]{1,0:T(1,128)}', space=vmem, size = 0x200, scoped, tag = 'scratch operand']
  %s0 = inlined_call_operand.vmem [shape: bf16[8,128], index: 0, kind: input, shape index: {}]
  %s1 = inlined_call_operand.hbm [shape: f32[256,128], index: 1, kind: input, shape index: {}]
  %s2 = inlined_call_operand.hbm [shape: bf16[128,384], index: 2, kind: input, shape index: {}]
  %s3 = inlined_call_operand.hbm [shape: bf16[128,384], index: 3, kind: input, shape index: {}]
  %s4 = inlined_call_operand.vmem [shape: f32[1,384], index: 4, kind: input, shape index: {}]
  %s5 = inlined_call_operand.vmem [shape: f32[1,384], index: 5, kind: input, shape index: {}]
  %s6 = inlined_call_operand.hbm [shape: bf16[128,384], index: 6, kind: input, shape index: {}]
  %s7 = inlined_call_operand.hbm [shape: bf16[128,384], index: 7, kind: input, shape index: {}]
  %s8 = inlined_call_operand.vmem [shape: f32[1,384], index: 8, kind: input, shape index: {}]
  %s9 = inlined_call_operand.vmem [shape: f32[1,384], index: 9, kind: input, shape index: {}]
  %s10 = inlined_call_operand.hbm [shape: bf16[256,128], index: 10, kind: input, shape index: {}]
  %s11 = inlined_call_operand.vmem [shape: f32[1,128], index: 11, kind: input, shape index: {}]
  %s12 = inlined_call_operand.hbm [shape: bf16[128,256], index: 12, kind: input, shape index: {}]
  %s13 = inlined_call_operand.vmem [shape: f32[1,256], index: 13, kind: input, shape index: {}]
  %s14 = inlined_call_operand.vmem [shape: s32[6,128], index: 14, kind: output, shape index: {0}]
  %s15 = inlined_call_operand.vmem [shape: f32[6,128], index: 15, kind: output, shape index: {1}]
  %16 = xla_tuple %s14, %s15
  %s17 = sld [smem:[#allocation0]]
  $region102: #{greedy_search_decode.1} parent=0
    _
  %s19 = ssub.s32 1, %s17
  %s20 = scalar_select 0, %s19, %s17
  $region1: #{greedy_search_decode.1} parent=0
    #allocation5 [shape = 'u8[131072]{0}', space=vmem, size = 0x20000, scoped, tag = 'input window, operand 1, single buffered']
    #allocation6 [shape = 's32[1]{0}', space=sflag, size = 0x4, scoped, tag = 'scoped memory for greedy_search_decode.1']
    #allocation7 [shape = 'u8[98304]{0}', space=vmem, size = 0x18000, scoped, tag = 'input window, operand 2, single buffered']
    #allocation8 [shape = 's32[1]{0}', space=sflag, size = 0x4, scoped, tag = 'scoped memory for greedy_search_decode.1']
    #allocation9 [shape = 'u8[98304]{0}', space=vmem, size = 0x18000, scoped, tag = 'input window, operand 3, single buffered']
    #allocation10 [shape = 'u8[98304]{0}', space=vmem, size = 0x18000, scoped, tag = 'input window, operand 6, single buffered']
    #allocation11 [shape = 's32[1]{0}', space=sflag, size = 0x4, scoped, tag = 'scoped memory for greedy_search_decode.1']
    #allocation12 [shape = 'u8[98304]{0}', space=vmem, size = 0x18000, scoped, tag = 'input window, operand 7, single buffered']
    #allocation13 [shape = 'u8[65536]{0}', space=vmem, size = 0x10000, scoped, tag = 'input window, operand 10, single buffered']
    #allocation14 [shape = 's32[1]{0}', space=sflag, size = 0x4, scoped, tag = 'scoped memory for greedy_search_decode.1']
    #allocation15 [shape = 'u8[65536]{0}', space=vmem, size = 0x10000, scoped, tag = 'input window, operand 12, single buffered']
    %21 = vsyncpa [#allocation6], 0
    %22 = vsyncpa [#allocation8], 0
    %23 = vsyncpa [#allocation11], 0
    %24 = vsyncpa [#allocation14], 0
    // Predicated region
    $region2: #{greedy_search_decode.1} parent=1 // pred_check
      _
    $region3: #{greedy_search_decode.1} parent=1 // pred_check_branch
      %26 = sbr.rel (0) target = $region5
    $region4: #{greedy_search_decode.1} parent=1 // pred_region
      _
    $region5: #{greedy_search_decode.1} parent=1 // pred_fallthru
      _
    // Predicated region
    $region6: #{greedy_search_decode.1} parent=1 // pred_check
      _
    $region7: #{greedy_search_decode.1} parent=1 // pred_check_branch
      %28 = sbr.rel (0) target = $region9
    $region8: #{greedy_search_decode.1} parent=1 // pred_region
      %s30 = ssub.s32 4096, 4096
      %31 = vsyncadd [#allocation6], %s30
      %s32 = sshll.u32 [#allocation5], 4
      %s33 = int_to_ptr.vmem [resolvable:$true] %s32
      %38 = dma.hbm_to_vmem [thread:$0]  %s1, 4096, %s33, [#allocation6], 128, 128, 8
    $region9: #{greedy_search_decode.1} parent=1 // pred_fallthru
      _
    // Predicated region
    $region10: #{greedy_search_decode.1} parent=1 // pred_check
      _
    $region11: #{greedy_search_decode.1} parent=1 // pred_check_branch
      %40 = sbr.rel (0) target = $region13
    $region12: #{greedy_search_decode.1} parent=1 // pred_region
      %s42 = ssub.s32 3072, 3072
      %43 = vsyncadd [#allocation8], %s42
      %s44 = sshll.u32 [#allocation7], 4
      %s45 = int_to_ptr.vmem [resolvable:$true] %s44
      %50 = dma.hbm_to_vmem [thread:$0]  %s2, 3072, %s45, [#allocation8], 192, 192, 12
    $region13: #{greedy_search_decode.1} parent=1 // pred_fallthru
      _
    // Predicated region
    $region14: #{greedy_search_decode.1} parent=1 // pred_check
      _
    $region15: #{greedy_search_decode.1} parent=1 // pred_check_branch
      %52 = sbr.rel (0) target = $region17
    $region16: #{greedy_search_decode.1} parent=1 // pred_region
      %s54 = ssub.s32 3072, 3072
      %55 = vsyncadd [#allocation8], %s54
      %s56 = sshll.u32 [#allocation9], 4
      %s57 = int_to_ptr.vmem [resolvable:$true] %s56
      %62 = dma.hbm_to_vmem [thread:$0]  %s3, 3072, %s57, [#allocation8], 192, 192, 12
    $region17: #{greedy_search_decode.1} parent=1 // pred_fallthru
      _
    // Predicated region
    $region18: #{greedy_search_decode.1} parent=1 // pred_check
      _
    $region19: #{greedy_search_decode.1} parent=1 // pred_check_branch
      %64 = sbr.rel (0) target = $region21
    $region20: #{greedy_search_decode.1} parent=1 // pred_region
      _
    $region21: #{greedy_search_decode.1} parent=1 // pred_fallthru
      _
    // Predicated region
    $region22: #{greedy_search_decode.1} parent=1 // pred_check
      _
    $region23: #{greedy_search_decode.1} parent=1 // pred_check_branch
      %66 = sbr.rel (0) target = $region25
    $region24: #{greedy_search_decode.1} parent=1 // pred_region
      _
    $region25: #{greedy_search_decode.1} parent=1 // pred_fallthru
      _
    // Predicated region
    $region26: #{greedy_search_decode.1} parent=1 // pred_check
      _
    $region27: #{greedy_search_decode.1} parent=1 // pred_check_branch
      %68 = sbr.rel (0) target = $region29
    $region28: #{greedy_search_decode.1} parent=1 // pred_region
      %s70 = ssub.s32 3072, 3072
      %71 = vsyncadd [#allocation11], %s70
      %s72 = sshll.u32 [#allocation10], 4
      %s73 = int_to_ptr.vmem [resolvable:$true] %s72
      %78 = dma.hbm_to_vmem [thread:$0]  %s6, 3072, %s73, [#allocation11], 192, 192, 12
    $region29: #{greedy_search_decode.1} parent=1 // pred_fallthru
      _
    // Predicated region
    $region30: #{greedy_search_decode.1} parent=1 // pred_check
      _
    $region31: #{greedy_search_decode.1} parent=1 // pred_check_branch
      %80 = sbr.rel (0) target = $region33
    $region32: #{greedy_search_decode.1} parent=1 // pred_region
      %s82 = ssub.s32 3072, 3072
      %83 = vsyncadd [#allocation11], %s82
      %s84 = sshll.u32 [#allocation12], 4
      %s85 = int_to_ptr.vmem [resolvable:$true] %s84
      %90 = dma.hbm_to_vmem [thread:$0]  %s7, 3072, %s85, [#allocation11], 192, 192, 12
    $region33: #{greedy_search_decode.1} parent=1 // pred_fallthru
      _
    // Predicated region
    $region34: #{greedy_search_decode.1} parent=1 // pred_check
      _
    $region35: #{greedy_search_decode.1} parent=1 // pred_check_branch
      %92 = sbr.rel (0) target = $region37
    $region36: #{greedy_search_decode.1} parent=1 // pred_region
      _
    $region37: #{greedy_search_decode.1} parent=1 // pred_fallthru
      _
    // Predicated region
    $region38: #{greedy_search_decode.1} parent=1 // pred_check
      _
    $region39: #{greedy_search_decode.1} parent=1 // pred_check_branch
      %94 = sbr.rel (0) target = $region41
    $region40: #{greedy_search_decode.1} parent=1 // pred_region
      _
    $region41: #{greedy_search_decode.1} parent=1 // pred_fallthru
      _
    // Predicated region
    $region42: #{greedy_search_decode.1} parent=1 // pred_check
      _
    $region43: #{greedy_search_decode.1} parent=1 // pred_check_branch
      %96 = sbr.rel (0) target = $region45
    $region44: #{greedy_search_decode.1} parent=1 // pred_region
      %s98 = ssub.s32 2048, 2048
      %99 = vsyncadd [#allocation14], %s98
      %s100 = sshll.u32 [#allocation13], 4
      %s101 = int_to_ptr.vmem [resolvable:$true] %s100
      %106 = dma.hbm_to_vmem [thread:$0]  %s10, 2048, %s101, [#allocation14], 64, 64, 4
    $region45: #{greedy_search_decode.1} parent=1 // pred_fallthru
      _
    // Predicated region
    $region46: #{greedy_search_decode.1} parent=1 // pred_check
      _
    $region47: #{greedy_search_decode.1} parent=1 // pred_check_branch
      %108 = sbr.rel (0) target = $region49
    $region48: #{greedy_search_decode.1} parent=1 // pred_region
      _
    $region49: #{greedy_search_decode.1} parent=1 // pred_fallthru
      _
    // Predicated region
    $region50: #{greedy_search_decode.1} parent=1 // pred_check
      _
    $region51: #{greedy_search_decode.1} parent=1 // pred_check_branch
      %110 = sbr.rel (0) target = $region53
    $region52: #{greedy_search_decode.1} parent=1 // pred_region
      %s112 = ssub.s32 2048, 2048
      %113 = vsyncadd [#allocation14], %s112
      %s114 = sshll.u32 [#allocation15], 4
      %s115 = int_to_ptr.vmem [resolvable:$true] %s114
      %120 = dma.hbm_to_vmem [thread:$0]  %s12, 2048, %s115, [#allocation14], 128, 128, 8
    $region53: #{greedy_search_decode.1} parent=1 // pred_fallthru
      _
    // Predicated region
    $region54: #{greedy_search_decode.1} parent=1 // pred_check
      _
    $region55: #{greedy_search_decode.1} parent=1 // pred_check_branch
      %122 = sbr.rel (0) target = $region57
    $region56: #{greedy_search_decode.1} parent=1 // pred_region
      _
    $region57: #{greedy_search_decode.1} parent=1 // pred_fallthru
      _
    // Predicated region
    $region58: #{greedy_search_decode.1} parent=1 // pred_check
      _
    $region59: #{greedy_search_decode.1} parent=1 // pred_check_branch
      %124 = sbr.rel (0) target = $region61
    $region60: #{greedy_search_decode.1} parent=1 // pred_region
      %125 = dma.done [#allocation6], 4096
    $region61: #{greedy_search_decode.1} parent=1 // pred_fallthru
      _
    // Predicated region
    $region62: #{greedy_search_decode.1} parent=1 // pred_check
      _
    $region63: #{greedy_search_decode.1} parent=1 // pred_check_branch
      %127 = sbr.rel (0) target = $region65
    $region64: #{greedy_search_decode.1} parent=1 // pred_region
      %128 = dma.done [#allocation8], 3072
    $region65: #{greedy_search_decode.1} parent=1 // pred_fallthru
      _
    // Predicated region
    $region66: #{greedy_search_decode.1} parent=1 // pred_check
      _
    $region67: #{greedy_search_decode.1} parent=1 // pred_check_branch
      %130 = sbr.rel (0) target = $region69
    $region68: #{greedy_search_decode.1} parent=1 // pred_region
      %131 = dma.done [#allocation8], 3072
    $region69: #{greedy_search_decode.1} parent=1 // pred_fallthru
      _
    // Predicated region
    $region70: #{greedy_search_decode.1} parent=1 // pred_check
      _
    $region71: #{greedy_search_decode.1} parent=1 // pred_check_branch
      %133 = sbr.rel (0) target = $region73
    $region72: #{greedy_search_decode.1} parent=1 // pred_region
      %134 = dma.done [#allocation11], 3072
    $region73: #{greedy_search_decode.1} parent=1 // pred_fallthru
      _
    // Predicated region
    $region74: #{greedy_search_decode.1} parent=1 // pred_check
      _
    $region75: #{greedy_search_decode.1} parent=1 // pred_check_branch
      %136 = sbr.rel (0) target = $region77
    $region76: #{greedy_search_decode.1} parent=1 // pred_region
      %137 = dma.done [#allocation11], 3072
    $region77: #{greedy_search_decode.1} parent=1 // pred_fallthru
      _
    // Predicated region
    $region78: #{greedy_search_decode.1} parent=1 // pred_check
      _
    $region79: #{greedy_search_decode.1} parent=1 // pred_check_branch
      %139 = sbr.rel (0) target = $region81
    $region80: #{greedy_search_decode.1} parent=1 // pred_region
      %140 = dma.done [#allocation14], 2048
    $region81: #{greedy_search_decode.1} parent=1 // pred_fallthru
      _
    // Predicated region
    $region82: #{greedy_search_decode.1} parent=1 // pred_check
      _
    $region83: #{greedy_search_decode.1} parent=1 // pred_check_branch
      %142 = sbr.rel (0) target = $region85
    $region84: #{greedy_search_decode.1} parent=1 // pred_region
      %143 = dma.done [#allocation14], 2048
    $region85: #{greedy_search_decode.1} parent=1 // pred_fallthru
      _
    %v145 = vld [vmem:[%s0] sm:$0xf]
    %v146 = vld [vmem:[#allocation7] sm:$0xff]
    %v147 = vld [vmem:[#allocation7 + $0x8] sm:$0xf]
    %v148 = vld [vmem:[#allocation7 + $0xc] sm:$0xff]
    %v149 = vld [vmem:[#allocation7 + $0x14] sm:$0xf]
    %v150 = vld [vmem:[#allocation7 + $0x18] sm:$0xff]
    %v151 = vld [vmem:[#allocation7 + $0x20] sm:$0xf]
    %v152 = vld [vmem:[#allocation7 + $0x24] sm:$0xff]
    %v153 = vld [vmem:[#allocation7 + $0x2c] sm:$0xf]
    %v154 = vld [vmem:[#allocation7 + $0x30] sm:$0xff]
    %v155 = vld [vmem:[#allocation7 + $0x38] sm:$0xf]
    %v156 = vld [vmem:[#allocation7 + $0x3c] sm:$0xff]
    %v157 = vld [vmem:[#allocation7 + $0x44] sm:$0xf]
    %v158 = vld [vmem:[#allocation7 + $0x48] sm:$0xff]
    %v159 = vld [vmem:[#allocation7 + $0x50] sm:$0xf]
    %v160 = vld [vmem:[#allocation7 + $0x54] sm:$0xff]
    %v161 = vld [vmem:[#allocation7 + $0x5c] sm:$0xf]
    %v162 = vld [vmem:[#allocation7 + $0x60] sm:$0xff]
    %v163 = vld [vmem:[#allocation7 + $0x68] sm:$0xf]
    %v164 = vld [vmem:[#allocation7 + $0x6c] sm:$0xff]
    %v165 = vld [vmem:[#allocation7 + $0x74] sm:$0xf]
    %v166 = vld [vmem:[#allocation7 + $0x78] sm:$0xff]
    %v167 = vld [vmem:[#allocation7 + $0x80] sm:$0xf]
    %v168 = vld [vmem:[#allocation7 + $0x84] sm:$0xff]
    %v169 = vld [vmem:[#allocation7 + $0x8c] sm:$0xf]
    %v170 = vld [vmem:[#allocation7 + $0x90] sm:$0xff]
    %v171 = vld [vmem:[#allocation7 + $0x98] sm:$0xf]
    %v172 = vld [vmem:[#allocation7 + $0x9c] sm:$0xff]
    %v173 = vld [vmem:[#allocation7 + $0xa4] sm:$0xf]
    %v174 = vld [vmem:[#allocation7 + $0xa8] sm:$0xff]
    %v175 = vld [vmem:[#allocation7 + $0xb0] sm:$0xf]
    %v176 = vld [vmem:[#allocation7 + $0xb4] sm:$0xff]
    %v177 = vld [vmem:[#allocation7 + $0xbc] sm:$0xf]
    %v178 = vld [vmem:[%s4] sm:$0x7]
    %v180 = vlaneseq
    %v181 = vshrl.u32 %v180, 7
    %v182 = vsub.s32 0, %v181
    %v183 = vrot.slane %v178, %v182
    %v184 = vlaneseq
    %v185 = vshrl.u32 %v184, 7
    %v186 = vsub.s32 1, %v185
    %v187 = vrot.slane %v178, %v186
    %v188 = vlaneseq
    %v189 = vshrl.u32 %v188, 7
    %v190 = vsub.s32 2, %v189
    %v191 = vrot.slane %v178, %v190
    %v227 = vunpack.c.l.b16 %v146
    %v228 = vunpack.c.h.b16 %v146
    %v229 = vunpack.c.l.b16 %v147
    %v230 = vunpack.c.l.b16 %v148
    %v231 = vunpack.c.h.b16 %v148
    %v232 = vunpack.c.l.b16 %v149
    %v233 = vunpack.c.l.b16 %v150
    %v234 = vunpack.c.h.b16 %v150
    %v235 = vunpack.c.l.b16 %v151
    %v236 = vunpack.c.l.b16 %v152
    %v237 = vunpack.c.h.b16 %v152
    %v238 = vunpack.c.l.b16 %v153
    %v239 = vunpack.c.l.b16 %v154
    %v240 = vunpack.c.h.b16 %v154
    %v241 = vunpack.c.l.b16 %v155
    %v242 = vunpack.c.l.b16 %v156
    %v243 = vunpack.c.h.b16 %v156
    %v244 = vunpack.c.l.b16 %v157
    %v245 = vunpack.c.l.b16 %v158
    %v246 = vunpack.c.h.b16 %v158
    %v247 = vunpack.c.l.b16 %v159
    %v248 = vunpack.c.l.b16 %v160
    %v249 = vunpack.c.h.b16 %v160
    %v250 = vunpack.c.l.b16 %v161
    %v251 = vunpack.c.l.b16 %v162
    %v252 = vunpack.c.h.b16 %v162
    %v253 = vunpack.c.l.b16 %v163
    %v254 = vunpack.c.l.b16 %v164
    %v255 = vunpack.c.h.b16 %v164
    %v256 = vunpack.c.l.b16 %v165
    %v257 = vunpack.c.l.b16 %v166
    %v258 = vunpack.c.h.b16 %v166
    %v259 = vunpack.c.l.b16 %v167
    %v260 = vunpack.c.l.b16 %v168
    %v261 = vunpack.c.h.b16 %v168
    %v262 = vunpack.c.l.b16 %v169
    %v263 = vunpack.c.l.b16 %v170
    %v264 = vunpack.c.h.b16 %v170
    %v265 = vunpack.c.l.b16 %v171
    %v266 = vunpack.c.l.b16 %v172
    %v267 = vunpack.c.h.b16 %v172
    %v268 = vunpack.c.l.b16 %v173
    %v269 = vunpack.c.l.b16 %v174
    %v270 = vunpack.c.h.b16 %v174
    %v271 = vunpack.c.l.b16 %v175
    %v272 = vunpack.c.l.b16 %v176
    %v273 = vunpack.c.h.b16 %v176
    %v274 = vunpack.c.l.b16 %v177
    %v275 = vpack.c.b16 %v230, %v227
    %v276 = vpack.c.b16 %v231, %v228
    %v277 = vpack.c.b16 %v232, %v229
    %v278 = vpack.c.b16 %v236, %v233
    %v279 = vpack.c.b16 %v237, %v234
    %v280 = vpack.c.b16 %v238, %v235
    %v281 = vpack.c.b16 %v242, %v239
    %v282 = vpack.c.b16 %v243, %v240
    %v283 = vpack.c.b16 %v244, %v241
    %v284 = vpack.c.b16 %v248, %v245
    %v285 = vpack.c.b16 %v249, %v246
    %v286 = vpack.c.b16 %v250, %v247
    %v287 = vpack.c.b16 %v254, %v251
    %v288 = vpack.c.b16 %v255, %v252
    %v289 = vpack.c.b16 %v256, %v253
    %v290 = vpack.c.b16 %v260, %v257
    %v291 = vpack.c.b16 %v261, %v258
    %v292 = vpack.c.b16 %v262, %v259
    %v293 = vpack.c.b16 %v266, %v263
    %v294 = vpack.c.b16 %v267, %v264
    %v295 = vpack.c.b16 %v268, %v265
    %v296 = vpack.c.b16 %v272, %v269
    %v297 = vpack.c.b16 %v273, %v270
    %v298 = vpack.c.b16 %v274, %v271
    %323 = vmatprep.subr.bf16.mxu0 %v297
    %324 = vmatpush1.bf16.msra.mxu0 %v296
    %325 = vmatprep.subr.bf16.mxu0 %v294
    %326 = vmatpush1.bf16.msra.mxu0 %v293
    %327 = vmatprep.subr.bf16.mxu0 %v291
    %328 = vmatpush1.bf16.msra.mxu0 %v290
    %329 = vmatprep.subr.bf16.mxu0 %v288
    %330 = vmatpush1.bf16.msra.mxu0 %v287
    %331 = vmatprep.subr.bf16.mxu0 %v285
    %332 = vmatpush1.bf16.msra.mxu0 %v284
    %333 = vmatprep.subr.bf16.mxu0 %v282
    %334 = vmatpush1.bf16.msra.mxu0 %v281
    %335 = vmatprep.subr.bf16.mxu0 %v279
    %336 = vmatpush1.bf16.msra.mxu0 %v278
    %337 = vmatprep.subr.bf16.mxu0 %v276
    %338 = vmatpush1.bf16.msra.mxu0 %v275
    %339 = vmatprep.subr.bf16.mxu0 0
    %340 = vmatpush2.bf16.msra.mxu0 0
    %341 = vmatprep.subr.bf16.mxu0 0
    %342 = vmatpush2.bf16.msra.mxu0 0
    %343 = vmatprep.subr.bf16.mxu0 0
    %344 = vmatpush2.bf16.msra.mxu0 0
    %345 = vmatprep.subr.bf16.mxu0 0
    %346 = vmatpush2.bf16.msra.mxu0 0
    %347 = vmatprep.subr.bf16.mxu0 0
    %348 = vmatpush2.bf16.msra.mxu0 0
    %349 = vmatprep.subr.bf16.mxu0 0
    %350 = vmatpush2.bf16.msra.mxu0 0
    %351 = vmatprep.subr.bf16.mxu0 0
    %352 = vmatpush2.bf16.msra.mxu0 0
    %353 = vmatprep.subr.bf16.mxu0 0
    %354 = vmatpush2.bf16.msra.mxu0 0
    %355 = vmatprep.mubr.bf16.mxu0 0
    %356 = vmatmul.mubr.bf16.gmra.mxu0 %v145
    %v357 = vpop.f32.mrf.mxu0
    %v358 = vadd.f32 %v183, %v357
    %v359 = vpop.f32.mrf.mxu0
    %v360 = vadd.f32 %v187, %v359
    %v361 = vpop.f32.mrf.mxu0
    %v362 = vpop.f32.mrf.mxu0
    %363 = vdwg.mxu0
    %364 = vmatprep.subr.bf16.mxu0 0
    %365 = vmatpush1.bf16.msra.mxu0 %v298
    %366 = vmatprep.subr.bf16.mxu0 0
    %367 = vmatpush1.bf16.msra.mxu0 %v295
    %368 = vmatprep.subr.bf16.mxu0 0
    %369 = vmatpush1.bf16.msra.mxu0 %v292
    %370 = vmatprep.subr.bf16.mxu0 0
    %371 = vmatpush1.bf16.msra.mxu0 %v289
    %372 = vmatprep.subr.bf16.mxu0 0
    %373 = vmatpush1.bf16.msra.mxu0 %v286
    %374 = vmatprep.subr.bf16.mxu0 0
    %375 = vmatpush1.bf16.msra.mxu0 %v283
    %376 = vmatprep.subr.bf16.mxu0 0
    %377 = vmatpush1.bf16.msra.mxu0 %v280
    %378 = vmatprep.subr.bf16.mxu0 0
    %379 = vmatpush1.bf16.msra.mxu0 %v277
    %380 = vmatprep.subr.bf16.mxu0 0
    %381 = vmatpush2.bf16.msra.mxu0 0
    %382 = vmatprep.subr.bf16.mxu0 0
    %383 = vmatpush2.bf16.msra.mxu0 0
    %384 = vmatprep.subr.bf16.mxu0 0
    %385 = vmatpush2.bf16.msra.mxu0 0
    %386 = vmatprep.subr.bf16.mxu0 0
    %387 = vmatpush2.bf16.msra.mxu0 0
    %388 = vmatprep.subr.bf16.mxu0 0
    %389 = vmatpush2.bf16.msra.mxu0 0
    %390 = vmatprep.subr.bf16.mxu0 0
    %391 = vmatpush2.bf16.msra.mxu0 0
    %392 = vmatprep.subr.bf16.mxu0 0
    %393 = vmatpush2.bf16.msra.mxu0 0
    %394 = vmatprep.subr.bf16.mxu0 0
    %395 = vmatpush2.bf16.msra.mxu0 0
    %396 = vmatprep.mubr.bf16.mxu0 0
    %397 = vmatmul.mubr.bf16.gmra.mxu0 %v145
    %v398 = vpop.f32.mrf.mxu0
    %v399 = vadd.f32 %v191, %v398
    %v400 = vpop.f32.mrf.mxu0
    %v401 = vpop.f32.mrf.mxu0
    %v402 = vpop.f32.mrf.mxu0
    %403 = vdwg.mxu0
    %404 = vst [vmem:[#allocation3] sm:$0xff] %v358
    %405 = vst [vmem:[#allocation3 + $0x8] sm:$0xff] %v360
    %406 = vst [vmem:[#allocation3 + $0x10] sm:$0xff] %v399
    %v407 = vld [vmem:[#allocation9] sm:$0xff]
    %v408 = vld [vmem:[#allocation9 + $0x8] sm:$0xf]
    %v409 = vld [vmem:[#allocation9 + $0xc] sm:$0xff]
    %v410 = vld [vmem:[#allocation9 + $0x14] sm:$0xf]
    %v411 = vld [vmem:[#allocation9 + $0x18] sm:$0xff]
    %v412 = vld [vmem:[#allocation9 + $0x20] sm:$0xf]
    %v413 = vld [vmem:[#allocation9 + $0x24] sm:$0xff]
    %v414 = vld [vmem:[#allocation9 + $0x2c] sm:$0xf]
    %v415 = vld [vmem:[#allocation9 + $0x30] sm:$0xff]
    %v416 = vld [vmem:[#allocation9 + $0x38] sm:$0xf]
    %v417 = vld [vmem:[#allocation9 + $0x3c] sm:$0xff]
    %v418 = vld [vmem:[#allocation9 + $0x44] sm:$0xf]
    %v419 = vld [vmem:[#allocation9 + $0x48] sm:$0xff]
    %v420 = vld [vmem:[#allocation9 + $0x50] sm:$0xf]
    %v421 = vld [vmem:[#allocation9 + $0x54] sm:$0xff]
    %v422 = vld [vmem:[#allocation9 + $0x5c] sm:$0xf]
    %v423 = vld [vmem:[#allocation9 + $0x60] sm:$0xff]
    %v424 = vld [vmem:[#allocation9 + $0x68] sm:$0xf]
    %v425 = vld [vmem:[#allocation9 + $0x6c] sm:$0xff]
    %v426 = vld [vmem:[#allocation9 + $0x74] sm:$0xf]
    %v427 = vld [vmem:[#allocation9 + $0x78] sm:$0xff]
    %v428 = vld [vmem:[#allocation9 + $0x80] sm:$0xf]
    %v429 = vld [vmem:[#allocation9 + $0x84] sm:$0xff]
    %v430 = vld [vmem:[#allocation9 + $0x8c] sm:$0xf]
    %v431 = vld [vmem:[#allocation9 + $0x90] sm:$0xff]
    %v432 = vld [vmem:[#allocation9 + $0x98] sm:$0xf]
    %v433 = vld [vmem:[#allocation9 + $0x9c] sm:$0xff]
    %v434 = vld [vmem:[#allocation9 + $0xa4] sm:$0xf]
    %v435 = vld [vmem:[#allocation9 + $0xa8] sm:$0xff]
    %v436 = vld [vmem:[#allocation9 + $0xb0] sm:$0xf]
    %v437 = vld [vmem:[#allocation9 + $0xb4] sm:$0xff]
    %v438 = vld [vmem:[#allocation9 + $0xbc] sm:$0xf]
    %v439 = vld [vmem:[%s5] sm:$0x7]
    %v440 = vld [vmem:[#allocation3] ss:$8 sm:$0x7]
    %v473 = vunpack.c.l.b16 %v407
    %v474 = vunpack.c.h.b16 %v407
    %v475 = vunpack.c.l.b16 %v408
    %v476 = vunpack.c.l.b16 %v409
    %v477 = vunpack.c.h.b16 %v409
    %v478 = vunpack.c.l.b16 %v410
    %v479 = vunpack.c.l.b16 %v411
    %v480 = vunpack.c.h.b16 %v411
    %v481 = vunpack.c.l.b16 %v412
    %v482 = vunpack.c.l.b16 %v413
    %v483 = vunpack.c.h.b16 %v413
    %v484 = vunpack.c.l.b16 %v414
    %v485 = vunpack.c.l.b16 %v415
    %v486 = vunpack.c.h.b16 %v415
    %v487 = vunpack.c.l.b16 %v416
    %v488 = vunpack.c.l.b16 %v417
    %v489 = vunpack.c.h.b16 %v417
    %v490 = vunpack.c.l.b16 %v418
    %v491 = vunpack.c.l.b16 %v419
    %v492 = vunpack.c.h.b16 %v419
    %v493 = vunpack.c.l.b16 %v420
    %v494 = vunpack.c.l.b16 %v421
    %v495 = vunpack.c.h.b16 %v421
    %v496 = vunpack.c.l.b16 %v422
    %v497 = vunpack.c.l.b16 %v423
    %v498 = vunpack.c.h.b16 %v423
    %v499 = vunpack.c.l.b16 %v424
    %v500 = vunpack.c.l.b16 %v425
    %v501 = vunpack.c.h.b16 %v425
    %v502 = vunpack.c.l.b16 %v426
    %v503 = vunpack.c.l.b16 %v427
    %v504 = vunpack.c.h.b16 %v427
    %v505 = vunpack.c.l.b16 %v428
    %v506 = vunpack.c.l.b16 %v429
    %v507 = vunpack.c.h.b16 %v429
    %v508 = vunpack.c.l.b16 %v430
    %v509 = vunpack.c.l.b16 %v431
    %v510 = vunpack.c.h.b16 %v431
    %v511 = vunpack.c.l.b16 %v432
    %v512 = vunpack.c.l.b16 %v433
    %v513 = vunpack.c.h.b16 %v433
    %v514 = vunpack.c.l.b16 %v434
    %v515 = vunpack.c.l.b16 %v435
    %v516 = vunpack.c.h.b16 %v435
    %v517 = vunpack.c.l.b16 %v436
    %v518 = vunpack.c.l.b16 %v437
    %v519 = vunpack.c.h.b16 %v437
    %v520 = vunpack.c.l.b16 %v438
    %v521 = vpack.c.b16 %v476, %v473
    %v522 = vpack.c.b16 %v477, %v474
    %v523 = vpack.c.b16 %v478, %v475
    %v524 = vpack.c.b16 %v482, %v479
    %v525 = vpack.c.b16 %v483, %v480
    %v526 = vpack.c.b16 %v484, %v481
    %v527 = vpack.c.b16 %v488, %v485
    %v528 = vpack.c.b16 %v489, %v486
    %v529 = vpack.c.b16 %v490, %v487
    %v530 = vpack.c.b16 %v494, %v491
    %v531 = vpack.c.b16 %v495, %v492
    %v532 = vpack.c.b16 %v496, %v493
    %v533 = vpack.c.b16 %v500, %v497
    %v534 = vpack.c.b16 %v501, %v498
    %v535 = vpack.c.b16 %v502, %v499
    %v536 = vpack.c.b16 %v506, %v503
    %v537 = vpack.c.b16 %v507, %v504
    %v538 = vpack.c.b16 %v508, %v505
    %v539 = vpack.c.b16 %v512, %v509
    %v540 = vpack.c.b16 %v513, %v510
    %v541 = vpack.c.b16 %v514, %v511
    %v542 = vpack.c.b16 %v518, %v515
    %v543 = vpack.c.b16 %v519, %v516
    %v544 = vpack.c.b16 %v520, %v517
    %v570 = vlaneseq
    %v571 = vshrl.u32 %v570, 7
    %v572 = vsub.s32 0, %v571
    %v573 = vrot.slane %v439, %v572
    %v574 = vlaneseq
    %v575 = vshrl.u32 %v574, 7
    %v576 = vsub.s32 1, %v575
    %v577 = vrot.slane %v439, %v576
    %v578 = vlaneseq
    %v579 = vshrl.u32 %v578, 7
    %v580 = vsub.s32 2, %v579
    %v581 = vrot.slane %v439, %v580
    %585 = vmatprep.subr.bf16.mxu0 %v543
    %586 = vmatpush1.bf16.msra.mxu0 %v542
    %587 = vmatprep.subr.bf16.mxu0 %v540
    %588 = vmatpush1.bf16.msra.mxu0 %v539
    %589 = vmatprep.subr.bf16.mxu0 %v537
    %590 = vmatpush1.bf16.msra.mxu0 %v536
    %591 = vmatprep.subr.bf16.mxu0 %v534
    %592 = vmatpush1.bf16.msra.mxu0 %v533
    %593 = vmatprep.subr.bf16.mxu0 %v531
    %594 = vmatpush1.bf16.msra.mxu0 %v530
    %595 = vmatprep.subr.bf16.mxu0 %v528
    %596 = vmatpush1.bf16.msra.mxu0 %v527
    %597 = vmatprep.subr.bf16.mxu0 %v525
    %598 = vmatpush1.bf16.msra.mxu0 %v524
    %599 = vmatprep.subr.bf16.mxu0 %v522
    %600 = vmatpush1.bf16.msra.mxu0 %v521
    %601 = vmatprep.subr.bf16.mxu0 0
    %602 = vmatpush2.bf16.msra.mxu0 0
    %603 = vmatprep.subr.bf16.mxu0 0
    %604 = vmatpush2.bf16.msra.mxu0 0
    %605 = vmatprep.subr.bf16.mxu0 0
    %606 = vmatpush2.bf16.msra.mxu0 0
    %607 = vmatprep.subr.bf16.mxu0 0
    %608 = vmatpush2.bf16.msra.mxu0 0
    %609 = vmatprep.subr.bf16.mxu0 0
    %610 = vmatpush2.bf16.msra.mxu0 0
    %611 = vmatprep.subr.bf16.mxu0 0
    %612 = vmatpush2.bf16.msra.mxu0 0
    %613 = vmatprep.subr.bf16.mxu0 0
    %614 = vmatpush2.bf16.msra.mxu0 0
    %615 = vmatprep.subr.bf16.mxu0 0
    %616 = vmatpush2.bf16.msra.mxu0 0
    %617 = vmatprep.mubr.bf16.mxu0 0
    %618 = vmatmul.mubr.bf16.gmra.mxu0 0
    %v619 = vpop.f32.mrf.mxu0
    %v620 = vadd.f32 %v573, %v619
    %v621 = vpop.f32.mrf.mxu0
    %v622 = vadd.f32 %v577, %v621
    %v623 = vpop.f32.mrf.mxu0
    %v624 = vpop.f32.mrf.mxu0
    %625 = vdwg.mxu0
    %626 = vmatprep.subr.bf16.mxu0 0
    %627 = vmatpush1.bf16.msra.mxu0 %v544
    %628 = vmatprep.subr.bf16.mxu0 0
    %629 = vmatpush1.bf16.msra.mxu0 %v541
    %630 = vmatprep.subr.bf16.mxu0 0
    %631 = vmatpush1.bf16.msra.mxu0 %v538
    %632 = vmatprep.subr.bf16.mxu0 0
    %633 = vmatpush1.bf16.msra.mxu0 %v535
    %634 = vmatprep.subr.bf16.mxu0 0
    %635 = vmatpush1.bf16.msra.mxu0 %v532
    %636 = vmatprep.subr.bf16.mxu0 0
    %637 = vmatpush1.bf16.msra.mxu0 %v529
    %638 = vmatprep.subr.bf16.mxu0 0
    %639 = vmatpush1.bf16.msra.mxu0 %v526
    %640 = vmatprep.subr.bf16.mxu0 0
    %641 = vmatpush1.bf16.msra.mxu0 %v523
    %642 = vmatprep.subr.bf16.mxu0 0
    %643 = vmatpush2.bf16.msra.mxu0 0
    %644 = vmatprep.subr.bf16.mxu0 0
    %645 = vmatpush2.bf16.msra.mxu0 0
    %646 = vmatprep.subr.bf16.mxu0 0
    %647 = vmatpush2.bf16.msra.mxu0 0
    %648 = vmatprep.subr.bf16.mxu0 0
    %649 = vmatpush2.bf16.msra.mxu0 0
    %650 = vmatprep.subr.bf16.mxu0 0
    %651 = vmatpush2.bf16.msra.mxu0 0
    %652 = vmatprep.subr.bf16.mxu0 0
    %653 = vmatpush2.bf16.msra.mxu0 0
    %654 = vmatprep.subr.bf16.mxu0 0
    %655 = vmatpush2.bf16.msra.mxu0 0
    %656 = vmatprep.subr.bf16.mxu0 0
    %657 = vmatpush2.bf16.msra.mxu0 0
    %658 = vmatprep.mubr.bf16.mxu0 0
    %659 = vmatmul.mubr.bf16.gmra.mxu0 0
    %v660 = vpop.f32.mrf.mxu0
    %v661 = vadd.f32 %v581, %v660
    %v662 = vpop.f32.mrf.mxu0
    %v663 = vpop.f32.mrf.mxu0
    %v664 = vpop.f32.mrf.mxu0
    %665 = vdwg.mxu0
    %v666 = vadd.f32 %v440, %v620
    %v667 = vxor.u32 %v666, 2147483648
    %v668 = vmul.f32 %v667, 1.442695
    %v669 = vpow.pop %v668
    %v670 = vadd.f32 %v669, 1.0
    %v671 = vrcp.pop %v670
    %v672 = vmul.f32 1.0, %v671
    %v674 = vrot.slane %v440, 1
    %v676 = vadd.f32 %v674, %v622
    %v677 = vxor.u32 %v676, 2147483648
    %v678 = vmul.f32 %v677, 1.442695
    %v679 = vpow.pop %v678
    %v680 = vadd.f32 %v679, 1.0
    %v681 = vrcp.pop %v680
    %v682 = vmul.f32 1.0, %v681
    %v683 = vmul.f32 %v672, %v661
    %v684 = vrot.slane %v440, 2
    %v686 = vadd.f32 %v684, %v683
    %v687 = vtanh.pop %v686
    %v688 = vsub.f32 1.0, %v682
    %v689 = vmul.f32 %v688, %v687
    %v690 = vmul.f32 %v682, 0.0
    %v691 = vadd.f32 %v689, %v690
    %692 = vst [vmem:[#allocation2] sm:$0x1] %v691
    %s693 = scalar_lea.vmem [#allocation3], 1
    %v694 = vld [vmem:[%s693] ss:$8 sm:$0x7]
    %v695 = vpack.c.bf16 %v691, %v691
    %696 = vmatprep.subr.bf16.mxu0 %v543
    %697 = vmatpush1.bf16.msra.mxu0 %v542
    %698 = vmatprep.subr.bf16.mxu0 %v540
    %699 = vmatpush1.bf16.msra.mxu0 %v539
    %700 = vmatprep.subr.bf16.mxu0 %v537
    %701 = vmatpush1.bf16.msra.mxu0 %v536
    %702 = vmatprep.subr.bf16.mxu0 %v534
    %703 = vmatpush1.bf16.msra.mxu0 %v533
    %704 = vmatprep.subr.bf16.mxu0 %v531
    %705 = vmatpush1.bf16.msra.mxu0 %v530
    %706 = vmatprep.subr.bf16.mxu0 %v528
    %707 = vmatpush1.bf16.msra.mxu0 %v527
    %708 = vmatprep.subr.bf16.mxu0 %v525
    %709 = vmatpush1.bf16.msra.mxu0 %v524
    %710 = vmatprep.subr.bf16.mxu0 %v522
    %711 = vmatpush1.bf16.msra.mxu0 %v521
    %712 = vmatprep.subr.bf16.mxu0 0
    %713 = vmatpush2.bf16.msra.mxu0 0
    %714 = vmatprep.subr.bf16.mxu0 0
    %715 = vmatpush2.bf16.msra.mxu0 0
    %716 = vmatprep.subr.bf16.mxu0 0
    %717 = vmatpush2.bf16.msra.mxu0 0
    %718 = vmatprep.subr.bf16.mxu0 0
    %719 = vmatpush2.bf16.msra.mxu0 0
    %720 = vmatprep.subr.bf16.mxu0 0
    %721 = vmatpush2.bf16.msra.mxu0 0
    %722 = vmatprep.subr.bf16.mxu0 0
    %723 = vmatpush2.bf16.msra.mxu0 0
    %724 = vmatprep.subr.bf16.mxu0 0
    %725 = vmatpush2.bf16.msra.mxu0 0
    %726 = vmatprep.subr.bf16.mxu0 0
    %727 = vmatpush2.bf16.msra.mxu0 0
    %728 = vmatprep.mubr.bf16.mxu0 0
    %729 = vmatmul.mubr.bf16.gmra.mxu0 %v695
    %v730 = vpop.f32.mrf.mxu0
    %v731 = vadd.f32 %v573, %v730
    %v732 = vpop.f32.mrf.mxu0
    %v733 = vadd.f32 %v577, %v732
    %v734 = vpop.f32.mrf.mxu0
    %v735 = vpop.f32.mrf.mxu0
    %736 = vdwg.mxu0
    %737 = vmatprep.subr.bf16.mxu0 0
    %738 = vmatpush1.bf16.msra.mxu0 %v544
    %739 = vmatprep.subr.bf16.mxu0 0
    %740 = vmatpush1.bf16.msra.mxu0 %v541
    %741 = vmatprep.subr.bf16.mxu0 0
    %742 = vmatpush1.bf16.msra.mxu0 %v538
    %743 = vmatprep.subr.bf16.mxu0 0
    %744 = vmatpush1.bf16.msra.mxu0 %v535
    %745 = vmatprep.subr.bf16.mxu0 0
    %746 = vmatpush1.bf16.msra.mxu0 %v532
    %747 = vmatprep.subr.bf16.mxu0 0
    %748 = vmatpush1.bf16.msra.mxu0 %v529
    %749 = vmatprep.subr.bf16.mxu0 0
    %750 = vmatpush1.bf16.msra.mxu0 %v526
    %751 = vmatprep.subr.bf16.mxu0 0
    %752 = vmatpush1.bf16.msra.mxu0 %v523
    %753 = vmatprep.subr.bf16.mxu0 0
    %754 = vmatpush2.bf16.msra.mxu0 0
    %755 = vmatprep.subr.bf16.mxu0 0
    %756 = vmatpush2.bf16.msra.mxu0 0
    %757 = vmatprep.subr.bf16.mxu0 0
    %758 = vmatpush2.bf16.msra.mxu0 0
    %759 = vmatprep.subr.bf16.mxu0 0
    %760 = vmatpush2.bf16.msra.mxu0 0
    %761 = vmatprep.subr.bf16.mxu0 0
    %762 = vmatpush2.bf16.msra.mxu0 0
    %763 = vmatprep.subr.bf16.mxu0 0
    %764 = vmatpush2.bf16.msra.mxu0 0
    %765 = vmatprep.subr.bf16.mxu0 0
    %766 = vmatpush2.bf16.msra.mxu0 0
    %767 = vmatprep.subr.bf16.mxu0 0
    %768 = vmatpush2.bf16.msra.mxu0 0
    %769 = vmatprep.mubr.bf16.mxu0 0
    %770 = vmatmul.mubr.bf16.gmra.mxu0 %v695
    %v771 = vpop.f32.mrf.mxu0
    %v772 = vadd.f32 %v581, %v771
    %v773 = vpop.f32.mrf.mxu0
    %v774 = vpop.f32.mrf.mxu0
    %v775 = vpop.f32.mrf.mxu0
    %776 = vdwg.mxu0
    %v777 = vadd.f32 %v694, %v731
    %v778 = vxor.u32 %v777, 2147483648
    %v779 = vmul.f32 %v778, 1.442695
    %v780 = vpow.pop %v779
    %v781 = vadd.f32 %v780, 1.0
    %v782 = vrcp.pop %v781
    %v783 = vmul.f32 1.0, %v782
    %v785 = vrot.slane %v694, 1
    %v787 = vadd.f32 %v785, %v733
    %v788 = vxor.u32 %v787, 2147483648
    %v789 = vmul.f32 %v788, 1.442695
    %v790 = vpow.pop %v789
    %v791 = vadd.f32 %v790, 1.0
    %v792 = vrcp.pop %v791
    %v793 = vmul.f32 1.0, %v792
    %v794 = vmul.f32 %v783, %v772
    %v795 = vrot.slane %v694, 2
    %v797 = vadd.f32 %v795, %v794
    %v798 = vtanh.pop %v797
    %v799 = vsub.f32 1.0, %v793
    %v800 = vmul.f32 %v799, %v798
    %v801 = vmul.f32 %v793, %v691
    %v802 = vadd.f32 %v800, %v801
    %803 = vst [vmem:[#allocation2 + $0x1] sm:$0x1] %v802
    %s804 = scalar_lea.vmem [#allocation3], 2
    %v805 = vld [vmem:[%s804] ss:$8 sm:$0x7]
    %v806 = vpack.c.bf16 %v802, %v802
    %807 = vmatprep.subr.bf16.mxu0 %v543
    %808 = vmatpush1.bf16.msra.mxu0 %v542
    %809 = vmatprep.subr.bf16.mxu0 %v540
    %810 = vmatpush1.bf16.msra.mxu0 %v539
    %811 = vmatprep.subr.bf16.mxu0 %v537
    %812 = vmatpush1.bf16.msra.mxu0 %v536
    %813 = vmatprep.subr.bf16.mxu0 %v534
    %814 = vmatpush1.bf16.msra.mxu0 %v533
    %815 = vmatprep.subr.bf16.mxu0 %v531
    %816 = vmatpush1.bf16.msra.mxu0 %v530
    %817 = vmatprep.subr.bf16.mxu0 %v528
    %818 = vmatpush1.bf16.msra.mxu0 %v527
    %819 = vmatprep.subr.bf16.mxu0 %v525
    %820 = vmatpush1.bf16.msra.mxu0 %v524
    %821 = vmatprep.subr.bf16.mxu0 %v522
    %822 = vmatpush1.bf16.msra.mxu0 %v521
    %823 = vmatprep.subr.bf16.mxu0 0
    %824 = vmatpush2.bf16.msra.mxu0 0
    %825 = vmatprep.subr.bf16.mxu0 0
    %826 = vmatpush2.bf16.msra.mxu0 0
    %827 = vmatprep.subr.bf16.mxu0 0
    %828 = vmatpush2.bf16.msra.mxu0 0
    %829 = vmatprep.subr.bf16.mxu0 0
    %830 = vmatpush2.bf16.msra.mxu0 0
    %831 = vmatprep.subr.bf16.mxu0 0
    %832 = vmatpush2.bf16.msra.mxu0 0
    %833 = vmatprep.subr.bf16.mxu0 0
    %834 = vmatpush2.bf16.msra.mxu0 0
    %835 = vmatprep.subr.bf16.mxu0 0
    %836 = vmatpush2.bf16.msra.mxu0 0
    %837 = vmatprep.subr.bf16.mxu0 0
    %838 = vmatpush2.bf16.msra.mxu0 0
    %839 = vmatprep.mubr.bf16.mxu0 0
    %840 = vmatmul.mubr.bf16.gmra.mxu0 %v806
    %v841 = vpop.f32.mrf.mxu0
    %v842 = vadd.f32 %v573, %v841
    %v843 = vpop.f32.mrf.mxu0
    %v844 = vadd.f32 %v577, %v843
    %v845 = vpop.f32.mrf.mxu0
    %v846 = vpop.f32.mrf.mxu0
    %847 = vdwg.mxu0
    %848 = vmatprep.subr.bf16.mxu0 0
    %849 = vmatpush1.bf16.msra.mxu0 %v544
    %850 = vmatprep.subr.bf16.mxu0 0
    %851 = vmatpush1.bf16.msra.mxu0 %v541
    %852 = vmatprep.subr.bf16.mxu0 0
    %853 = vmatpush1.bf16.msra.mxu0 %v538
    %854 = vmatprep.subr.bf16.mxu0 0
    %855 = vmatpush1.bf16.msra.mxu0 %v535
    %856 = vmatprep.subr.bf16.mxu0 0
    %857 = vmatpush1.bf16.msra.mxu0 %v532
    %858 = vmatprep.subr.bf16.mxu0 0
    %859 = vmatpush1.bf16.msra.mxu0 %v529
    %860 = vmatprep.subr.bf16.mxu0 0
    %861 = vmatpush1.bf16.msra.mxu0 %v526
    %862 = vmatprep.subr.bf16.mxu0 0
    %863 = vmatpush1.bf16.msra.mxu0 %v523
    %864 = vmatprep.subr.bf16.mxu0 0
    %865 = vmatpush2.bf16.msra.mxu0 0
    %866 = vmatprep.subr.bf16.mxu0 0
    %867 = vmatpush2.bf16.msra.mxu0 0
    %868 = vmatprep.subr.bf16.mxu0 0
    %869 = vmatpush2.bf16.msra.mxu0 0
    %870 = vmatprep.subr.bf16.mxu0 0
    %871 = vmatpush2.bf16.msra.mxu0 0
    %872 = vmatprep.subr.bf16.mxu0 0
    %873 = vmatpush2.bf16.msra.mxu0 0
    %874 = vmatprep.subr.bf16.mxu0 0
    %875 = vmatpush2.bf16.msra.mxu0 0
    %876 = vmatprep.subr.bf16.mxu0 0
    %877 = vmatpush2.bf16.msra.mxu0 0
    %878 = vmatprep.subr.bf16.mxu0 0
    %879 = vmatpush2.bf16.msra.mxu0 0
    %880 = vmatprep.mubr.bf16.mxu0 0
    %881 = vmatmul.mubr.bf16.gmra.mxu0 %v806
    %v882 = vpop.f32.mrf.mxu0
    %v883 = vadd.f32 %v581, %v882
    %v884 = vpop.f32.mrf.mxu0
    %v885 = vpop.f32.mrf.mxu0
    %v886 = vpop.f32.mrf.mxu0
    %887 = vdwg.mxu0
    %v888 = vadd.f32 %v805, %v842
    %v889 = vxor.u32 %v888, 2147483648
    %v890 = vmul.f32 %v889, 1.442695
    %v891 = vpow.pop %v890
    %v892 = vadd.f32 %v891, 1.0
    %v893 = vrcp.pop %v892
    %v894 = vmul.f32 1.0, %v893
    %v896 = vrot.slane %v805, 1
    %v898 = vadd.f32 %v896, %v844
    %v899 = vxor.u32 %v898, 2147483648
    %v900 = vmul.f32 %v899, 1.442695
    %v901 = vpow.pop %v900
    %v902 = vadd.f32 %v901, 1.0
    %v903 = vrcp.pop %v902
    %v904 = vmul.f32 1.0, %v903
    %v905 = vmul.f32 %v894, %v883
    %v906 = vrot.slane %v805, 2
    %v908 = vadd.f32 %v906, %v905
    %v909 = vtanh.pop %v908
    %v910 = vsub.f32 1.0, %v904
    %v911 = vmul.f32 %v910, %v909
    %v912 = vmul.f32 %v904, %v802
    %v913 = vadd.f32 %v911, %v912
    %914 = vst [vmem:[#allocation2 + $0x2] sm:$0x1] %v913
    %s915 = scalar_lea.vmem [#allocation3], 3
    %v916 = vld [vmem:[%s915] ss:$8 sm:$0x7]
    %v917 = vpack.c.bf16 %v913, %v913
    %918 = vmatprep.subr.bf16.mxu0 %v543
    %919 = vmatpush1.bf16.msra.mxu0 %v542
    %920 = vmatprep.subr.bf16.mxu0 %v540
    %921 = vmatpush1.bf16.msra.mxu0 %v539
    %922 = vmatprep.subr.bf16.mxu0 %v537
    %923 = vmatpush1.bf16.msra.mxu0 %v536
    %924 = vmatprep.subr.bf16.mxu0 %v534
    %925 = vmatpush1.bf16.msra.mxu0 %v533
    %926 = vmatprep.subr.bf16.mxu0 %v531
    %927 = vmatpush1.bf16.msra.mxu0 %v530
    %928 = vmatprep.subr.bf16.mxu0 %v528
    %929 = vmatpush1.bf16.msra.mxu0 %v527
    %930 = vmatprep.subr.bf16.mxu0 %v525
    %931 = vmatpush1.bf16.msra.mxu0 %v524
    %932 = vmatprep.subr.bf16.mxu0 %v522
    %933 = vmatpush1.bf16.msra.mxu0 %v521
    %934 = vmatprep.subr.bf16.mxu0 0
    %935 = vmatpush2.bf16.msra.mxu0 0
    %936 = vmatprep.subr.bf16.mxu0 0
    %937 = vmatpush2.bf16.msra.mxu0 0
    %938 = vmatprep.subr.bf16.mxu0 0
    %939 = vmatpush2.bf16.msra.mxu0 0
    %940 = vmatprep.subr.bf16.mxu0 0
    %941 = vmatpush2.bf16.msra.mxu0 0
    %942 = vmatprep.subr.bf16.mxu0 0
    %943 = vmatpush2.bf16.msra.mxu0 0
    %944 = vmatprep.subr.bf16.mxu0 0
    %945 = vmatpush2.bf16.msra.mxu0 0
    %946 = vmatprep.subr.bf16.mxu0 0
    %947 = vmatpush2.bf16.msra.mxu0 0
    %948 = vmatprep.subr.bf16.mxu0 0
    %949 = vmatpush2.bf16.msra.mxu0 0
    %950 = vmatprep.mubr.bf16.mxu0 0
    %951 = vmatmul.mubr.bf16.gmra.mxu0 %v917
    %v952 = vpop.f32.mrf.mxu0
    %v953 = vadd.f32 %v573, %v952
    %v954 = vpop.f32.mrf.mxu0
    %v955 = vadd.f32 %v577, %v954
    %v956 = vpop.f32.mrf.mxu0
    %v957 = vpop.f32.mrf.mxu0
    %958 = vdwg.mxu0
    %959 = vmatprep.subr.bf16.mxu0 0
    %960 = vmatpush1.bf16.msra.mxu0 %v544
    %961 = vmatprep.subr.bf16.mxu0 0
    %962 = vmatpush1.bf16.msra.mxu0 %v541
    %963 = vmatprep.subr.bf16.mxu0 0
    %964 = vmatpush1.bf16.msra.mxu0 %v538
    %965 = vmatprep.subr.bf16.mxu0 0
    %966 = vmatpush1.bf16.msra.mxu0 %v535
    %967 = vmatprep.subr.bf16.mxu0 0
    %968 = vmatpush1.bf16.msra.mxu0 %v532
    %969 = vmatprep.subr.bf16.mxu0 0
    %970 = vmatpush1.bf16.msra.mxu0 %v529
    %971 = vmatprep.subr.bf16.mxu0 0
    %972 = vmatpush1.bf16.msra.mxu0 %v526
    %973 = vmatprep.subr.bf16.mxu0 0
    %974 = vmatpush1.bf16.msra.mxu0 %v523
    %975 = vmatprep.subr.bf16.mxu0 0
    %976 = vmatpush2.bf16.msra.mxu0 0
    %977 = vmatprep.subr.bf16.mxu0 0
    %978 = vmatpush2.bf16.msra.mxu0 0
    %979 = vmatprep.subr.bf16.mxu0 0
    %980 = vmatpush2.bf16.msra.mxu0 0
    %981 = vmatprep.subr.bf16.mxu0 0
    %982 = vmatpush2.bf16.msra.mxu0 0
    %983 = vmatprep.subr.bf16.mxu0 0
    %984 = vmatpush2.bf16.msra.mxu0 0
    %985 = vmatprep.subr.bf16.mxu0 0
    %986 = vmatpush2.bf16.msra.mxu0 0
    %987 = vmatprep.subr.bf16.mxu0 0
    %988 = vmatpush2.bf16.msra.mxu0 0
    %989 = vmatprep.subr.bf16.mxu0 0
    %990 = vmatpush2.bf16.msra.mxu0 0
    %991 = vmatprep.mubr.bf16.mxu0 0
    %992 = vmatmul.mubr.bf16.gmra.mxu0 %v917
    %v993 = vpop.f32.mrf.mxu0
    %v994 = vadd.f32 %v581, %v993
    %v995 = vpop.f32.mrf.mxu0
    %v996 = vpop.f32.mrf.mxu0
    %v997 = vpop.f32.mrf.mxu0
    %998 = vdwg.mxu0
    %v999 = vadd.f32 %v916, %v953
    %v1000 = vxor.u32 %v999, 2147483648
    %v1001 = vmul.f32 %v1000, 1.442695
    %v1002 = vpow.pop %v1001
    %v1003 = vadd.f32 %v1002, 1.0
    %v1004 = vrcp.pop %v1003
    %v1005 = vmul.f32 1.0, %v1004
    %v1007 = vrot.slane %v916, 1
    %v1009 = vadd.f32 %v1007, %v955
    %v1010 = vxor.u32 %v1009, 2147483648
    %v1011 = vmul.f32 %v1010, 1.442695
    %v1012 = vpow.pop %v1011
    %v1013 = vadd.f32 %v1012, 1.0
    %v1014 = vrcp.pop %v1013
    %v1015 = vmul.f32 1.0, %v1014
    %v1016 = vmul.f32 %v1005, %v994
    %v1017 = vrot.slane %v916, 2
    %v1019 = vadd.f32 %v1017, %v1016
    %v1020 = vtanh.pop %v1019
    %v1021 = vsub.f32 1.0, %v1015
    %v1022 = vmul.f32 %v1021, %v1020
    %v1023 = vmul.f32 %v1015, %v913
    %v1024 = vadd.f32 %v1022, %v1023
    %1025 = vst [vmem:[#allocation2 + $0x3] sm:$0x1] %v1024
    %s1026 = scalar_lea.vmem [#allocation3], 4
    %v1027 = vld [vmem:[%s1026] ss:$8 sm:$0x7]
    %v1028 = vpack.c.bf16 %v1024, %v1024
    %1029 = vmatprep.subr.bf16.mxu0 %v543
    %1030 = vmatpush1.bf16.msra.mxu0 %v542
    %1031 = vmatprep.subr.bf16.mxu0 %v540
    %1032 = vmatpush1.bf16.msra.mxu0 %v539
    %1033 = vmatprep.subr.bf16.mxu0 %v537
    %1034 = vmatpush1.bf16.msra.mxu0 %v536
    %1035 = vmatprep.subr.bf16.mxu0 %v534
    %1036 = vmatpush1.bf16.msra.mxu0 %v533
    %1037 = vmatprep.subr.bf16.mxu0 %v531
    %1038 = vmatpush1.bf16.msra.mxu0 %v530
    %1039 = vmatprep.subr.bf16.mxu0 %v528
    %1040 = vmatpush1.bf16.msra.mxu0 %v527
    %1041 = vmatprep.subr.bf16.mxu0 %v525
    %1042 = vmatpush1.bf16.msra.mxu0 %v524
    %1043 = vmatprep.subr.bf16.mxu0 %v522
    %1044 = vmatpush1.bf16.msra.mxu0 %v521
    %1045 = vmatprep.subr.bf16.mxu0 0
    %1046 = vmatpush2.bf16.msra.mxu0 0
    %1047 = vmatprep.subr.bf16.mxu0 0
    %1048 = vmatpush2.bf16.msra.mxu0 0
    %1049 = vmatprep.subr.bf16.mxu0 0
    %1050 = vmatpush2.bf16.msra.mxu0 0
    %1051 = vmatprep.subr.bf16.mxu0 0
    %1052 = vmatpush2.bf16.msra.mxu0 0
    %1053 = vmatprep.subr.bf16.mxu0 0
    %1054 = vmatpush2.bf16.msra.mxu0 0
    %1055 = vmatprep.subr.bf16.mxu0 0
    %1056 = vmatpush2.bf16.msra.mxu0 0
    %1057 = vmatprep.subr.bf16.mxu0 0
    %1058 = vmatpush2.bf16.msra.mxu0 0
    %1059 = vmatprep.subr.bf16.mxu0 0
    %1060 = vmatpush2.bf16.msra.mxu0 0
    %1061 = vmatprep.mubr.bf16.mxu0 0
    %1062 = vmatmul.mubr.bf16.gmra.mxu0 %v1028
    %v1063 = vpop.f32.mrf.mxu0
    %v1064 = vadd.f32 %v573, %v1063
    %v1065 = vpop.f32.mrf.mxu0
    %v1066 = vadd.f32 %v577, %v1065
    %v1067 = vpop.f32.mrf.mxu0
    %v1068 = vpop.f32.mrf.mxu0
    %1069 = vdwg.mxu0
    %1070 = vmatprep.subr.bf16.mxu0 0
    %1071 = vmatpush1.bf16.msra.mxu0 %v544
    %1072 = vmatprep.subr.bf16.mxu0 0
    %1073 = vmatpush1.bf16.msra.mxu0 %v541
    %1074 = vmatprep.subr.bf16.mxu0 0
    %1075 = vmatpush1.bf16.msra.mxu0 %v538
    %1076 = vmatprep.subr.bf16.mxu0 0
    %1077 = vmatpush1.bf16.msra.mxu0 %v535
    %1078 = vmatprep.subr.bf16.mxu0 0
    %1079 = vmatpush1.bf16.msra.mxu0 %v532
    %1080 = vmatprep.subr.bf16.mxu0 0
    %1081 = vmatpush1.bf16.msra.mxu0 %v529
    %1082 = vmatprep.subr.bf16.mxu0 0
    %1083 = vmatpush1.bf16.msra.mxu0 %v526
    %1084 = vmatprep.subr.bf16.mxu0 0
    %1085 = vmatpush1.bf16.msra.mxu0 %v523
    %1086 = vmatprep.subr.bf16.mxu0 0
    %1087 = vmatpush2.bf16.msra.mxu0 0
    %1088 = vmatprep.subr.bf16.mxu0 0
    %1089 = vmatpush2.bf16.msra.mxu0 0
    %1090 = vmatprep.subr.bf16.mxu0 0
    %1091 = vmatpush2.bf16.msra.mxu0 0
    %1092 = vmatprep.subr.bf16.mxu0 0
    %1093 = vmatpush2.bf16.msra.mxu0 0
    %1094 = vmatprep.subr.bf16.mxu0 0
    %1095 = vmatpush2.bf16.msra.mxu0 0
    %1096 = vmatprep.subr.bf16.mxu0 0
    %1097 = vmatpush2.bf16.msra.mxu0 0
    %1098 = vmatprep.subr.bf16.mxu0 0
    %1099 = vmatpush2.bf16.msra.mxu0 0
    %1100 = vmatprep.subr.bf16.mxu0 0
    %1101 = vmatpush2.bf16.msra.mxu0 0
    %1102 = vmatprep.mubr.bf16.mxu0 0
    %1103 = vmatmul.mubr.bf16.gmra.mxu0 %v1028
    %v1104 = vpop.f32.mrf.mxu0
    %v1105 = vadd.f32 %v581, %v1104
    %v1106 = vpop.f32.mrf.mxu0
    %v1107 = vpop.f32.mrf.mxu0
    %v1108 = vpop.f32.mrf.mxu0
    %1109 = vdwg.mxu0
    %v1110 = vadd.f32 %v1027, %v1064
    %v1111 = vxor.u32 %v1110, 2147483648
    %v1112 = vmul.f32 %v1111, 1.442695
    %v1113 = vpow.pop %v1112
    %v1114 = vadd.f32 %v1113, 1.0
    %v1115 = vrcp.pop %v1114
    %v1116 = vmul.f32 1.0, %v1115
    %v1118 = vrot.slane %v1027, 1
    %v1120 = vadd.f32 %v1118, %v1066
    %v1121 = vxor.u32 %v1120, 2147483648
    %v1122 = vmul.f32 %v1121, 1.442695
    %v1123 = vpow.pop %v1122
    %v1124 = vadd.f32 %v1123, 1.0
    %v1125 = vrcp.pop %v1124
    %v1126 = vmul.f32 1.0, %v1125
    %v1127 = vmul.f32 %v1116, %v1105
    %v1128 = vrot.slane %v1027, 2
    %v1130 = vadd.f32 %v1128, %v1127
    %v1131 = vtanh.pop %v1130
    %v1132 = vsub.f32 1.0, %v1126
    %v1133 = vmul.f32 %v1132, %v1131
    %v1134 = vmul.f32 %v1126, %v1024
    %v1135 = vadd.f32 %v1133, %v1134
    %1136 = vst [vmem:[#allocation2 + $0x4] sm:$0x1] %v1135
    %s1137 = scalar_lea.vmem [#allocation3], 5
    %v1138 = vld [vmem:[%s1137] ss:$8 sm:$0x7]
    %v1139 = vpack.c.bf16 %v1135, %v1135
    %1140 = vmatprep.subr.bf16.mxu0 %v543
    %1141 = vmatpush1.bf16.msra.mxu0 %v542
    %1142 = vmatprep.subr.bf16.mxu0 %v540
    %1143 = vmatpush1.bf16.msra.mxu0 %v539
    %1144 = vmatprep.subr.bf16.mxu0 %v537
    %1145 = vmatpush1.bf16.msra.mxu0 %v536
    %1146 = vmatprep.subr.bf16.mxu0 %v534
    %1147 = vmatpush1.bf16.msra.mxu0 %v533
    %1148 = vmatprep.subr.bf16.mxu0 %v531
    %1149 = vmatpush1.bf16.msra.mxu0 %v530
    %1150 = vmatprep.subr.bf16.mxu0 %v528
    %1151 = vmatpush1.bf16.msra.mxu0 %v527
    %1152 = vmatprep.subr.bf16.mxu0 %v525
    %1153 = vmatpush1.bf16.msra.mxu0 %v524
    %1154 = vmatprep.subr.bf16.mxu0 %v522
    %1155 = vmatpush1.bf16.msra.mxu0 %v521
    %1156 = vmatprep.subr.bf16.mxu0 0
    %1157 = vmatpush2.bf16.msra.mxu0 0
    %1158 = vmatprep.subr.bf16.mxu0 0
    %1159 = vmatpush2.bf16.msra.mxu0 0
    %1160 = vmatprep.subr.bf16.mxu0 0
    %1161 = vmatpush2.bf16.msra.mxu0 0
    %1162 = vmatprep.subr.bf16.mxu0 0
    %1163 = vmatpush2.bf16.msra.mxu0 0
    %1164 = vmatprep.subr.bf16.mxu0 0
    %1165 = vmatpush2.bf16.msra.mxu0 0
    %1166 = vmatprep.subr.bf16.mxu0 0
    %1167 = vmatpush2.bf16.msra.mxu0 0
    %1168 = vmatprep.subr.bf16.mxu0 0
    %1169 = vmatpush2.bf16.msra.mxu0 0
    %1170 = vmatprep.subr.bf16.mxu0 0
    %1171 = vmatpush2.bf16.msra.mxu0 0
    %1172 = vmatprep.mubr.bf16.mxu0 0
    %1173 = vmatmul.mubr.bf16.gmra.mxu0 %v1139
    %v1174 = vpop.f32.mrf.mxu0
    %v1175 = vadd.f32 %v573, %v1174
    %v1176 = vpop.f32.mrf.mxu0
    %v1177 = vadd.f32 %v577, %v1176
    %v1178 = vpop.f32.mrf.mxu0
    %v1179 = vpop.f32.mrf.mxu0
    %1180 = vdwg.mxu0
    %1181 = vmatprep.subr.bf16.mxu0 0
    %1182 = vmatpush1.bf16.msra.mxu0 %v544
    %1183 = vmatprep.subr.bf16.mxu0 0
    %1184 = vmatpush1.bf16.msra.mxu0 %v541
    %1185 = vmatprep.subr.bf16.mxu0 0
    %1186 = vmatpush1.bf16.msra.mxu0 %v538
    %1187 = vmatprep.subr.bf16.mxu0 0
    %1188 = vmatpush1.bf16.msra.mxu0 %v535
    %1189 = vmatprep.subr.bf16.mxu0 0
    %1190 = vmatpush1.bf16.msra.mxu0 %v532
    %1191 = vmatprep.subr.bf16.mxu0 0
    %1192 = vmatpush1.bf16.msra.mxu0 %v529
    %1193 = vmatprep.subr.bf16.mxu0 0
    %1194 = vmatpush1.bf16.msra.mxu0 %v526
    %1195 = vmatprep.subr.bf16.mxu0 0
    %1196 = vmatpush1.bf16.msra.mxu0 %v523
    %1197 = vmatprep.subr.bf16.mxu0 0
    %1198 = vmatpush2.bf16.msra.mxu0 0
    %1199 = vmatprep.subr.bf16.mxu0 0
    %1200 = vmatpush2.bf16.msra.mxu0 0
    %1201 = vmatprep.subr.bf16.mxu0 0
    %1202 = vmatpush2.bf16.msra.mxu0 0
    %1203 = vmatprep.subr.bf16.mxu0 0
    %1204 = vmatpush2.bf16.msra.mxu0 0
    %1205 = vmatprep.subr.bf16.mxu0 0
    %1206 = vmatpush2.bf16.msra.mxu0 0
    %1207 = vmatprep.subr.bf16.mxu0 0
    %1208 = vmatpush2.bf16.msra.mxu0 0
    %1209 = vmatprep.subr.bf16.mxu0 0
    %1210 = vmatpush2.bf16.msra.mxu0 0
    %1211 = vmatprep.subr.bf16.mxu0 0
    %1212 = vmatpush2.bf16.msra.mxu0 0
    %1213 = vmatprep.mubr.bf16.mxu0 0
    %1214 = vmatmul.mubr.bf16.gmra.mxu0 %v1139
    %v1215 = vpop.f32.mrf.mxu0
    %v1216 = vadd.f32 %v581, %v1215
    %v1217 = vpop.f32.mrf.mxu0
    %v1218 = vpop.f32.mrf.mxu0
    %v1219 = vpop.f32.mrf.mxu0
    %1220 = vdwg.mxu0
    %v1221 = vadd.f32 %v1138, %v1175
    %v1222 = vxor.u32 %v1221, 2147483648
    %v1223 = vmul.f32 %v1222, 1.442695
    %v1224 = vpow.pop %v1223
    %v1225 = vadd.f32 %v1224, 1.0
    %v1226 = vrcp.pop %v1225
    %v1227 = vmul.f32 1.0, %v1226
    %v1229 = vrot.slane %v1138, 1
    %v1231 = vadd.f32 %v1229, %v1177
    %v1232 = vxor.u32 %v1231, 2147483648
    %v1233 = vmul.f32 %v1232, 1.442695
    %v1234 = vpow.pop %v1233
    %v1235 = vadd.f32 %v1234, 1.0
    %v1236 = vrcp.pop %v1235
    %v1237 = vmul.f32 1.0, %v1236
    %v1238 = vmul.f32 %v1227, %v1216
    %v1239 = vrot.slane %v1138, 2
    %v1241 = vadd.f32 %v1239, %v1238
    %v1242 = vtanh.pop %v1241
    %v1243 = vsub.f32 1.0, %v1237
    %v1244 = vmul.f32 %v1243, %v1242
    %v1245 = vmul.f32 %v1237, %v1135
    %v1246 = vadd.f32 %v1244, %v1245
    %1247 = vst [vmem:[#allocation2 + $0x5] sm:$0x1] %v1246
    %s1248 = scalar_lea.vmem [#allocation3], 6
    %v1249 = vld [vmem:[%s1248] ss:$8 sm:$0x7]
    %v1250 = vpack.c.bf16 %v1246, %v1246
    %1251 = vmatprep.subr.bf16.mxu0 %v543
    %1252 = vmatpush1.bf16.msra.mxu0 %v542
    %1253 = vmatprep.subr.bf16.mxu0 %v540
    %1254 = vmatpush1.bf16.msra.mxu0 %v539
    %1255 = vmatprep.subr.bf16.mxu0 %v537
    %1256 = vmatpush1.bf16.msra.mxu0 %v536
    %1257 = vmatprep.subr.bf16.mxu0 %v534
    %1258 = vmatpush1.bf16.msra.mxu0 %v533
    %1259 = vmatprep.subr.bf16.mxu0 %v531
    %1260 = vmatpush1.bf16.msra.mxu0 %v530
    %1261 = vmatprep.subr.bf16.mxu0 %v528
    %1262 = vmatpush1.bf16.msra.mxu0 %v527
    %1263 = vmatprep.subr.bf16.mxu0 %v525
    %1264 = vmatpush1.bf16.msra.mxu0 %v524
    %1265 = vmatprep.subr.bf16.mxu0 %v522
    %1266 = vmatpush1.bf16.msra.mxu0 %v521
    %1267 = vmatprep.subr.bf16.mxu0 0
    %1268 = vmatpush2.bf16.msra.mxu0 0
    %1269 = vmatprep.subr.bf16.mxu0 0
    %1270 = vmatpush2.bf16.msra.mxu0 0
    %1271 = vmatprep.subr.bf16.mxu0 0
    %1272 = vmatpush2.bf16.msra.mxu0 0
    %1273 = vmatprep.subr.bf16.mxu0 0
    %1274 = vmatpush2.bf16.msra.mxu0 0
    %1275 = vmatprep.subr.bf16.mxu0 0
    %1276 = vmatpush2.bf16.msra.mxu0 0
    %1277 = vmatprep.subr.bf16.mxu0 0
    %1278 = vmatpush2.bf16.msra.mxu0 0
    %1279 = vmatprep.subr.bf16.mxu0 0
    %1280 = vmatpush2.bf16.msra.mxu0 0
    %1281 = vmatprep.subr.bf16.mxu0 0
    %1282 = vmatpush2.bf16.msra.mxu0 0
    %1283 = vmatprep.mubr.bf16.mxu0 0
    %1284 = vmatmul.mubr.bf16.gmra.mxu0 %v1250
    %v1285 = vpop.f32.mrf.mxu0
    %v1286 = vadd.f32 %v573, %v1285
    %v1287 = vpop.f32.mrf.mxu0
    %v1288 = vadd.f32 %v577, %v1287
    %v1289 = vpop.f32.mrf.mxu0
    %v1290 = vpop.f32.mrf.mxu0
    %1291 = vdwg.mxu0
    %1292 = vmatprep.subr.bf16.mxu0 0
    %1293 = vmatpush1.bf16.msra.mxu0 %v544
    %1294 = vmatprep.subr.bf16.mxu0 0
    %1295 = vmatpush1.bf16.msra.mxu0 %v541
    %1296 = vmatprep.subr.bf16.mxu0 0
    %1297 = vmatpush1.bf16.msra.mxu0 %v538
    %1298 = vmatprep.subr.bf16.mxu0 0
    %1299 = vmatpush1.bf16.msra.mxu0 %v535
    %1300 = vmatprep.subr.bf16.mxu0 0
    %1301 = vmatpush1.bf16.msra.mxu0 %v532
    %1302 = vmatprep.subr.bf16.mxu0 0
    %1303 = vmatpush1.bf16.msra.mxu0 %v529
    %1304 = vmatprep.subr.bf16.mxu0 0
    %1305 = vmatpush1.bf16.msra.mxu0 %v526
    %1306 = vmatprep.subr.bf16.mxu0 0
    %1307 = vmatpush1.bf16.msra.mxu0 %v523
    %1308 = vmatprep.subr.bf16.mxu0 0
    %1309 = vmatpush2.bf16.msra.mxu0 0
    %1310 = vmatprep.subr.bf16.mxu0 0
    %1311 = vmatpush2.bf16.msra.mxu0 0
    %1312 = vmatprep.subr.bf16.mxu0 0
    %1313 = vmatpush2.bf16.msra.mxu0 0
    %1314 = vmatprep.subr.bf16.mxu0 0
    %1315 = vmatpush2.bf16.msra.mxu0 0
    %1316 = vmatprep.subr.bf16.mxu0 0
    %1317 = vmatpush2.bf16.msra.mxu0 0
    %1318 = vmatprep.subr.bf16.mxu0 0
    %1319 = vmatpush2.bf16.msra.mxu0 0
    %1320 = vmatprep.subr.bf16.mxu0 0
    %1321 = vmatpush2.bf16.msra.mxu0 0
    %1322 = vmatprep.subr.bf16.mxu0 0
    %1323 = vmatpush2.bf16.msra.mxu0 0
    %1324 = vmatprep.mubr.bf16.mxu0 0
    %1325 = vmatmul.mubr.bf16.gmra.mxu0 %v1250
    %v1326 = vpop.f32.mrf.mxu0
    %v1327 = vadd.f32 %v581, %v1326
    %v1328 = vpop.f32.mrf.mxu0
    %v1329 = vpop.f32.mrf.mxu0
    %v1330 = vpop.f32.mrf.mxu0
    %1331 = vdwg.mxu0
    %v1332 = vadd.f32 %v1249, %v1286
    %v1333 = vxor.u32 %v1332, 2147483648
    %v1334 = vmul.f32 %v1333, 1.442695
    %v1335 = vpow.pop %v1334
    %v1336 = vadd.f32 %v1335, 1.0
    %v1337 = vrcp.pop %v1336
    %v1338 = vmul.f32 1.0, %v1337
    %v1340 = vrot.slane %v1249, 1
    %v1342 = vadd.f32 %v1340, %v1288
    %v1343 = vxor.u32 %v1342, 2147483648
    %v1344 = vmul.f32 %v1343, 1.442695
    %v1345 = vpow.pop %v1344
    %v1346 = vadd.f32 %v1345, 1.0
    %v1347 = vrcp.pop %v1346
    %v1348 = vmul.f32 1.0, %v1347
    %v1349 = vmul.f32 %v1338, %v1327
    %v1350 = vrot.slane %v1249, 2
    %v1352 = vadd.f32 %v1350, %v1349
    %v1353 = vtanh.pop %v1352
    %v1354 = vsub.f32 1.0, %v1348
    %v1355 = vmul.f32 %v1354, %v1353
    %v1356 = vmul.f32 %v1348, %v1246
    %v1357 = vadd.f32 %v1355, %v1356
    %1358 = vst [vmem:[#allocation2 + $0x6] sm:$0x1] %v1357
    %s1359 = scalar_lea.vmem [#allocation3], 7
    %v1360 = vld [vmem:[%s1359] ss:$8 sm:$0x7]
    %v1361 = vpack.c.bf16 %v1357, %v1357
    %1362 = vmatprep.subr.bf16.mxu0 %v543
    %1363 = vmatpush1.bf16.msra.mxu0 %v542
    %1364 = vmatprep.subr.bf16.mxu0 %v540
    %1365 = vmatpush1.bf16.msra.mxu0 %v539
    %1366 = vmatprep.subr.bf16.mxu0 %v537
    %1367 = vmatpush1.bf16.msra.mxu0 %v536
    %1368 = vmatprep.subr.bf16.mxu0 %v534
    %1369 = vmatpush1.bf16.msra.mxu0 %v533
    %1370 = vmatprep.subr.bf16.mxu0 %v531
    %1371 = vmatpush1.bf16.msra.mxu0 %v530
    %1372 = vmatprep.subr.bf16.mxu0 %v528
    %1373 = vmatpush1.bf16.msra.mxu0 %v527
    %1374 = vmatprep.subr.bf16.mxu0 %v525
    %1375 = vmatpush1.bf16.msra.mxu0 %v524
    %1376 = vmatprep.subr.bf16.mxu0 %v522
    %1377 = vmatpush1.bf16.msra.mxu0 %v521
    %1378 = vmatprep.subr.bf16.mxu0 0
    %1379 = vmatpush2.bf16.msra.mxu0 0
    %1380 = vmatprep.subr.bf16.mxu0 0
    %1381 = vmatpush2.bf16.msra.mxu0 0
    %1382 = vmatprep.subr.bf16.mxu0 0
    %1383 = vmatpush2.bf16.msra.mxu0 0
    %1384 = vmatprep.subr.bf16.mxu0 0
    %1385 = vmatpush2.bf16.msra.mxu0 0
    %1386 = vmatprep.subr.bf16.mxu0 0
    %1387 = vmatpush2.bf16.msra.mxu0 0
    %1388 = vmatprep.subr.bf16.mxu0 0
    %1389 = vmatpush2.bf16.msra.mxu0 0
    %1390 = vmatprep.subr.bf16.mxu0 0
    %1391 = vmatpush2.bf16.msra.mxu0 0
    %1392 = vmatprep.subr.bf16.mxu0 0
    %1393 = vmatpush2.bf16.msra.mxu0 0
    %1394 = vmatprep.mubr.bf16.mxu0 0
    %1395 = vmatmul.mubr.bf16.gmra.mxu0 %v1361
    %v1396 = vpop.f32.mrf.mxu0
    %v1397 = vadd.f32 %v573, %v1396
    %v1398 = vpop.f32.mrf.mxu0
    %v1399 = vadd.f32 %v577, %v1398
    %v1400 = vpop.f32.mrf.mxu0
    %v1401 = vpop.f32.mrf.mxu0
    %1402 = vdwg.mxu0
    %1403 = vmatprep.subr.bf16.mxu0 0
    %1404 = vmatpush1.bf16.msra.mxu0 %v544
    %1405 = vmatprep.subr.bf16.mxu0 0
    %1406 = vmatpush1.bf16.msra.mxu0 %v541
    %1407 = vmatprep.subr.bf16.mxu0 0
    %1408 = vmatpush1.bf16.msra.mxu0 %v538
    %1409 = vmatprep.subr.bf16.mxu0 0
    %1410 = vmatpush1.bf16.msra.mxu0 %v535
    %1411 = vmatprep.subr.bf16.mxu0 0
    %1412 = vmatpush1.bf16.msra.mxu0 %v532
    %1413 = vmatprep.subr.bf16.mxu0 0
    %1414 = vmatpush1.bf16.msra.mxu0 %v529
    %1415 = vmatprep.subr.bf16.mxu0 0
    %1416 = vmatpush1.bf16.msra.mxu0 %v526
    %1417 = vmatprep.subr.bf16.mxu0 0
    %1418 = vmatpush1.bf16.msra.mxu0 %v523
    %1419 = vmatprep.subr.bf16.mxu0 0
    %1420 = vmatpush2.bf16.msra.mxu0 0
    %1421 = vmatprep.subr.bf16.mxu0 0
    %1422 = vmatpush2.bf16.msra.mxu0 0
    %1423 = vmatprep.subr.bf16.mxu0 0
    %1424 = vmatpush2.bf16.msra.mxu0 0
    %1425 = vmatprep.subr.bf16.mxu0 0
    %1426 = vmatpush2.bf16.msra.mxu0 0
    %1427 = vmatprep.subr.bf16.mxu0 0
    %1428 = vmatpush2.bf16.msra.mxu0 0
    %1429 = vmatprep.subr.bf16.mxu0 0
    %1430 = vmatpush2.bf16.msra.mxu0 0
    %1431 = vmatprep.subr.bf16.mxu0 0
    %1432 = vmatpush2.bf16.msra.mxu0 0
    %1433 = vmatprep.subr.bf16.mxu0 0
    %1434 = vmatpush2.bf16.msra.mxu0 0
    %1435 = vmatprep.mubr.bf16.mxu0 0
    %1436 = vmatmul.mubr.bf16.gmra.mxu0 %v1361
    %v1437 = vpop.f32.mrf.mxu0
    %v1438 = vadd.f32 %v581, %v1437
    %v1439 = vpop.f32.mrf.mxu0
    %v1440 = vpop.f32.mrf.mxu0
    %v1441 = vpop.f32.mrf.mxu0
    %1442 = vdwg.mxu0
    %v1443 = vadd.f32 %v1360, %v1397
    %v1444 = vxor.u32 %v1443, 2147483648
    %v1445 = vmul.f32 %v1444, 1.442695
    %v1446 = vpow.pop %v1445
    %v1447 = vadd.f32 %v1446, 1.0
    %v1448 = vrcp.pop %v1447
    %v1449 = vmul.f32 1.0, %v1448
    %v1451 = vrot.slane %v1360, 1
    %v1453 = vadd.f32 %v1451, %v1399
    %v1454 = vxor.u32 %v1453, 2147483648
    %v1455 = vmul.f32 %v1454, 1.442695
    %v1456 = vpow.pop %v1455
    %v1457 = vadd.f32 %v1456, 1.0
    %v1458 = vrcp.pop %v1457
    %v1459 = vmul.f32 1.0, %v1458
    %v1460 = vmul.f32 %v1449, %v1438
    %v1461 = vrot.slane %v1360, 2
    %v1463 = vadd.f32 %v1461, %v1460
    %v1464 = vtanh.pop %v1463
    %v1465 = vsub.f32 1.0, %v1459
    %v1466 = vmul.f32 %v1465, %v1464
    %v1467 = vmul.f32 %v1459, %v1357
    %v1468 = vadd.f32 %v1466, %v1467
    %1469 = vst [vmem:[#allocation2 + $0x7] sm:$0x1] %v1468
    %v1470 = vld [vmem:[#allocation10] sm:$0xff]
    %v1471 = vld [vmem:[#allocation10 + $0x8] sm:$0xf]
    %v1472 = vld [vmem:[#allocation10 + $0xc] sm:$0xff]
    %v1473 = vld [vmem:[#allocation10 + $0x14] sm:$0xf]
    %v1474 = vld [vmem:[#allocation10 + $0x18] sm:$0xff]
    %v1475 = vld [vmem:[#allocation10 + $0x20] sm:$0xf]
    %v1476 = vld [vmem:[#allocation10 + $0x24] sm:$0xff]
    %v1477 = vld [vmem:[#allocation10 + $0x2c] sm:$0xf]
    %v1478 = vld [vmem:[#allocation10 + $0x30] sm:$0xff]
    %v1479 = vld [vmem:[#allocation10 + $0x38] sm:$0xf]
    %v1480 = vld [vmem:[#allocation10 + $0x3c] sm:$0xff]
    %v1481 = vld [vmem:[#allocation10 + $0x44] sm:$0xf]
    %v1482 = vld [vmem:[#allocation10 + $0x48] sm:$0xff]
    %v1483 = vld [vmem:[#allocation10 + $0x50] sm:$0xf]
    %v1484 = vld [vmem:[#allocation10 + $0x54] sm:$0xff]
    %v1485 = vld [vmem:[#allocation10 + $0x5c] sm:$0xf]
    %v1486 = vld [vmem:[#allocation10 + $0x60] sm:$0xff]
    %v1487 = vld [vmem:[#allocation10 + $0x68] sm:$0xf]
    %v1488 = vld [vmem:[#allocation10 + $0x6c] sm:$0xff]
    %v1489 = vld [vmem:[#allocation10 + $0x74] sm:$0xf]
    %v1490 = vld [vmem:[#allocation10 + $0x78] sm:$0xff]
    %v1491 = vld [vmem:[#allocation10 + $0x80] sm:$0xf]
    %v1492 = vld [vmem:[#allocation10 + $0x84] sm:$0xff]
    %v1493 = vld [vmem:[#allocation10 + $0x8c] sm:$0xf]
    %v1494 = vld [vmem:[#allocation10 + $0x90] sm:$0xff]
    %v1495 = vld [vmem:[#allocation10 + $0x98] sm:$0xf]
    %v1496 = vld [vmem:[#allocation10 + $0x9c] sm:$0xff]
    %v1497 = vld [vmem:[#allocation10 + $0xa4] sm:$0xf]
    %v1498 = vld [vmem:[#allocation10 + $0xa8] sm:$0xff]
    %v1499 = vld [vmem:[#allocation10 + $0xb0] sm:$0xf]
    %v1500 = vld [vmem:[#allocation10 + $0xb4] sm:$0xff]
    %v1501 = vld [vmem:[#allocation10 + $0xbc] sm:$0xf]
    %v1502 = vld [vmem:[#allocation12] sm:$0xff]
    %v1503 = vld [vmem:[#allocation12 + $0x8] sm:$0xf]
    %v1504 = vld [vmem:[#allocation12 + $0xc] sm:$0xff]
    %v1505 = vld [vmem:[#allocation12 + $0x14] sm:$0xf]
    %v1506 = vld [vmem:[#allocation12 + $0x18] sm:$0xff]
    %v1507 = vld [vmem:[#allocation12 + $0x20] sm:$0xf]
    %v1508 = vld [vmem:[#allocation12 + $0x24] sm:$0xff]
    %v1509 = vld [vmem:[#allocation12 + $0x2c] sm:$0xf]
    %v1510 = vld [vmem:[#allocation12 + $0x30] sm:$0xff]
    %v1511 = vld [vmem:[#allocation12 + $0x38] sm:$0xf]
    %v1512 = vld [vmem:[#allocation12 + $0x3c] sm:$0xff]
    %v1513 = vld [vmem:[#allocation12 + $0x44] sm:$0xf]
    %v1514 = vld [vmem:[#allocation12 + $0x48] sm:$0xff]
    %v1515 = vld [vmem:[#allocation12 + $0x50] sm:$0xf]
    %v1516 = vld [vmem:[#allocation12 + $0x54] sm:$0xff]
    %v1517 = vld [vmem:[#allocation12 + $0x5c] sm:$0xf]
    %v1518 = vld [vmem:[#allocation12 + $0x60] sm:$0xff]
    %v1519 = vld [vmem:[#allocation12 + $0x68] sm:$0xf]
    %v1520 = vld [vmem:[#allocation12 + $0x6c] sm:$0xff]
    %v1521 = vld [vmem:[#allocation12 + $0x74] sm:$0xf]
    %v1522 = vld [vmem:[#allocation12 + $0x78] sm:$0xff]
    %v1523 = vld [vmem:[#allocation12 + $0x80] sm:$0xf]
    %v1524 = vld [vmem:[#allocation12 + $0x84] sm:$0xff]
    %v1525 = vld [vmem:[#allocation12 + $0x8c] sm:$0xf]
    %v1526 = vld [vmem:[#allocation12 + $0x90] sm:$0xff]
    %v1527 = vld [vmem:[#allocation12 + $0x98] sm:$0xf]
    %v1528 = vld [vmem:[#allocation12 + $0x9c] sm:$0xff]
    %v1529 = vld [vmem:[#allocation12 + $0xa4] sm:$0xf]
    %v1530 = vld [vmem:[#allocation12 + $0xa8] sm:$0xff]
    %v1531 = vld [vmem:[#allocation12 + $0xb0] sm:$0xf]
    %v1532 = vld [vmem:[#allocation12 + $0xb4] sm:$0xff]
    %v1533 = vld [vmem:[#allocation12 + $0xbc] sm:$0xf]
    %v1534 = vld [vmem:[%s8] sm:$0x7]
    %v1535 = vld [vmem:[%s9] sm:$0x7]
    %v1536 = vld [vmem:[#allocation13] sm:$0xf]
    %v1537 = vld [vmem:[#allocation13 + $0x4] sm:$0xf]
    %v1538 = vld [vmem:[#allocation13 + $0x8] sm:$0xf]
    %v1539 = vld [vmem:[#allocation13 + $0xc] sm:$0xf]
    %v1540 = vld [vmem:[#allocation13 + $0x10] sm:$0xf]
    %v1541 = vld [vmem:[#allocation13 + $0x14] sm:$0xf]
    %v1542 = vld [vmem:[#allocation13 + $0x18] sm:$0xf]
    %v1543 = vld [vmem:[#allocation13 + $0x1c] sm:$0xf]
    %v1544 = vld [vmem:[#allocation13 + $0x20] sm:$0xf]
    %v1545 = vld [vmem:[#allocation13 + $0x24] sm:$0xf]
    %v1546 = vld [vmem:[#allocation13 + $0x28] sm:$0xf]
    %v1547 = vld [vmem:[#allocation13 + $0x2c] sm:$0xf]
    %v1548 = vld [vmem:[#allocation13 + $0x30] sm:$0xf]
    %v1549 = vld [vmem:[#allocation13 + $0x34] sm:$0xf]
    %v1550 = vld [vmem:[#allocation13 + $0x38] sm:$0xf]
    %v1551 = vld [vmem:[#allocation13 + $0x3c] sm:$0xf]
    %v1552 = vld [vmem:[#allocation13 + $0x40] sm:$0xf]
    %v1553 = vld [vmem:[#allocation13 + $0x44] sm:$0xf]
    %v1554 = vld [vmem:[#allocation13 + $0x48] sm:$0xf]
    %v1555 = vld [vmem:[#allocation13 + $0x4c] sm:$0xf]
    %v1556 = vld [vmem:[#allocation13 + $0x50] sm:$0xf]
    %v1557 = vld [vmem:[#allocation13 + $0x54] sm:$0xf]
    %v1558 = vld [vmem:[#allocation13 + $0x58] sm:$0xf]
    %v1559 = vld [vmem:[#allocation13 + $0x5c] sm:$0xf]
    %v1560 = vld [vmem:[#allocation13 + $0x60] sm:$0xf]
    %v1561 = vld [vmem:[#allocation13 + $0x64] sm:$0xf]
    %v1562 = vld [vmem:[#allocation13 + $0x68] sm:$0xf]
    %v1563 = vld [vmem:[#allocation13 + $0x6c] sm:$0xf]
    %v1564 = vld [vmem:[#allocation13 + $0x70] sm:$0xf]
    %v1565 = vld [vmem:[#allocation13 + $0x74] sm:$0xf]
    %v1566 = vld [vmem:[#allocation13 + $0x78] sm:$0xf]
    %v1567 = vld [vmem:[#allocation13 + $0x7c] sm:$0xf]
    %v1568 = vld [vmem:[%s11] sm:$0x1]
    %v1569 = vld [vmem:[#allocation15] sm:$0xff]
    %v1570 = vld [vmem:[#allocation15 + $0x8] sm:$0xff]
    %v1571 = vld [vmem:[#allocation15 + $0x10] sm:$0xff]
    %v1572 = vld [vmem:[#allocation15 + $0x18] sm:$0xff]
    %v1573 = vld [vmem:[#allocation15 + $0x20] sm:$0xff]
    %v1574 = vld [vmem:[#allocation15 + $0x28] sm:$0xff]
    %v1575 = vld [vmem:[#allocation15 + $0x30] sm:$0xff]
    %v1576 = vld [vmem:[#allocation15 + $0x38] sm:$0xff]
    %v1577 = vld [vmem:[#allocation15 + $0x40] sm:$0xff]
    %v1578 = vld [vmem:[#allocation15 + $0x48] sm:$0xff]
    %v1579 = vld [vmem:[#allocation15 + $0x50] sm:$0xff]
    %v1580 = vld [vmem:[#allocation15 + $0x58] sm:$0xff]
    %v1581 = vld [vmem:[#allocation15 + $0x60] sm:$0xff]
    %v1582 = vld [vmem:[#allocation15 + $0x68] sm:$0xff]
    %v1583 = vld [vmem:[#allocation15 + $0x70] sm:$0xff]
    %v1584 = vld [vmem:[#allocation15 + $0x78] sm:$0xff]
    %v1585 = vld [vmem:[%s13] sm:$0x3]
    %v1586 = vld [vmem:[#allocation2] sm:$0xff]
    %v1587 = vld [vmem:[#allocation5 + $0x1] sm:$0x1]
    %v1588 = vpack.c.bf16 %v1587, %v1587
    %v1621 = vunpack.c.l.b16 %v1470
    %v1622 = vunpack.c.h.b16 %v1470
    %v1623 = vunpack.c.l.b16 %v1471
    %v1624 = vunpack.c.l.b16 %v1472
    %v1625 = vunpack.c.h.b16 %v1472
    %v1626 = vunpack.c.l.b16 %v1473
    %v1627 = vunpack.c.l.b16 %v1474
    %v1628 = vunpack.c.h.b16 %v1474
    %v1629 = vunpack.c.l.b16 %v1475
    %v1630 = vunpack.c.l.b16 %v1476
    %v1631 = vunpack.c.h.b16 %v1476
    %v1632 = vunpack.c.l.b16 %v1477
    %v1633 = vunpack.c.l.b16 %v1478
    %v1634 = vunpack.c.h.b16 %v1478
    %v1635 = vunpack.c.l.b16 %v1479
    %v1636 = vunpack.c.l.b16 %v1480
    %v1637 = vunpack.c.h.b16 %v1480
    %v1638 = vunpack.c.l.b16 %v1481
    %v1639 = vunpack.c.l.b16 %v1482
    %v1640 = vunpack.c.h.b16 %v1482
    %v1641 = vunpack.c.l.b16 %v1483
    %v1642 = vunpack.c.l.b16 %v1484
    %v1643 = vunpack.c.h.b16 %v1484
    %v1644 = vunpack.c.l.b16 %v1485
    %v1645 = vunpack.c.l.b16 %v1486
    %v1646 = vunpack.c.h.b16 %v1486
    %v1647 = vunpack.c.l.b16 %v1487
    %v1648 = vunpack.c.l.b16 %v1488
    %v1649 = vunpack.c.h.b16 %v1488
    %v1650 = vunpack.c.l.b16 %v1489
    %v1651 = vunpack.c.l.b16 %v1490
    %v1652 = vunpack.c.h.b16 %v1490
    %v1653 = vunpack.c.l.b16 %v1491
    %v1654 = vunpack.c.l.b16 %v1492
    %v1655 = vunpack.c.h.b16 %v1492
    %v1656 = vunpack.c.l.b16 %v1493
    %v1657 = vunpack.c.l.b16 %v1494
    %v1658 = vunpack.c.h.b16 %v1494
    %v1659 = vunpack.c.l.b16 %v1495
    %v1660 = vunpack.c.l.b16 %v1496
    %v1661 = vunpack.c.h.b16 %v1496
    %v1662 = vunpack.c.l.b16 %v1497
    %v1663 = vunpack.c.l.b16 %v1498
    %v1664 = vunpack.c.h.b16 %v1498
    %v1665 = vunpack.c.l.b16 %v1499
    %v1666 = vunpack.c.l.b16 %v1500
    %v1667 = vunpack.c.h.b16 %v1500
    %v1668 = vunpack.c.l.b16 %v1501
    %v1669 = vpack.c.b16 %v1624, %v1621
    %v1670 = vpack.c.b16 %v1625, %v1622
    %v1671 = vpack.c.b16 %v1626, %v1623
    %v1672 = vpack.c.b16 %v1630, %v1627
    %v1673 = vpack.c.b16 %v1631, %v1628
    %v1674 = vpack.c.b16 %v1632, %v1629
    %v1675 = vpack.c.b16 %v1636, %v1633
    %v1676 = vpack.c.b16 %v1637, %v1634
    %v1677 = vpack.c.b16 %v1638, %v1635
    %v1678 = vpack.c.b16 %v1642, %v1639
    %v1679 = vpack.c.b16 %v1643, %v1640
    %v1680 = vpack.c.b16 %v1644, %v1641
    %v1681 = vpack.c.b16 %v1648, %v1645
    %v1682 = vpack.c.b16 %v1649, %v1646
    %v1683 = vpack.c.b16 %v1650, %v1647
    %v1684 = vpack.c.b16 %v1654, %v1651
    %v1685 = vpack.c.b16 %v1655, %v1652
    %v1686 = vpack.c.b16 %v1656, %v1653
    %v1687 = vpack.c.b16 %v1660, %v1657
    %v1688 = vpack.c.b16 %v1661, %v1658
    %v1689 = vpack.c.b16 %v1662, %v1659
    %v1690 = vpack.c.b16 %v1666, %v1663
    %v1691 = vpack.c.b16 %v1667, %v1664
    %v1692 = vpack.c.b16 %v1668, %v1665
    %v1718 = vlaneseq
    %v1719 = vshrl.u32 %v1718, 7
    %v1720 = vsub.s32 0, %v1719
    %v1721 = vrot.slane %v1534, %v1720
    %v1722 = vlaneseq
    %v1723 = vshrl.u32 %v1722, 7
    %v1724 = vsub.s32 1, %v1723
    %v1725 = vrot.slane %v1534, %v1724
    %v1726 = vlaneseq
    %v1727 = vshrl.u32 %v1726, 7
    %v1728 = vsub.s32 2, %v1727
    %v1729 = vrot.slane %v1534, %v1728
    %1733 = vmatprep.subr.bf16.mxu0 %v1691
    %1734 = vmatpush1.bf16.msra.mxu0 %v1690
    %1735 = vmatprep.subr.bf16.mxu0 %v1688
    %1736 = vmatpush1.bf16.msra.mxu0 %v1687
    %1737 = vmatprep.subr.bf16.mxu0 %v1685
    %1738 = vmatpush1.bf16.msra.mxu0 %v1684
    %1739 = vmatprep.subr.bf16.mxu0 %v1682
    %1740 = vmatpush1.bf16.msra.mxu0 %v1681
    %1741 = vmatprep.subr.bf16.mxu0 %v1679
    %1742 = vmatpush1.bf16.msra.mxu0 %v1678
    %1743 = vmatprep.subr.bf16.mxu0 %v1676
    %1744 = vmatpush1.bf16.msra.mxu0 %v1675
    %1745 = vmatprep.subr.bf16.mxu0 %v1673
    %1746 = vmatpush1.bf16.msra.mxu0 %v1672
    %1747 = vmatprep.subr.bf16.mxu0 %v1670
    %1748 = vmatpush1.bf16.msra.mxu0 %v1669
    %1749 = vmatprep.subr.bf16.mxu0 0
    %1750 = vmatpush2.bf16.msra.mxu0 0
    %1751 = vmatprep.subr.bf16.mxu0 0
    %1752 = vmatpush2.bf16.msra.mxu0 0
    %1753 = vmatprep.subr.bf16.mxu0 0
    %1754 = vmatpush2.bf16.msra.mxu0 0
    %1755 = vmatprep.subr.bf16.mxu0 0
    %1756 = vmatpush2.bf16.msra.mxu0 0
    %1757 = vmatprep.subr.bf16.mxu0 0
    %1758 = vmatpush2.bf16.msra.mxu0 0
    %1759 = vmatprep.subr.bf16.mxu0 0
    %1760 = vmatpush2.bf16.msra.mxu0 0
    %1761 = vmatprep.subr.bf16.mxu0 0
    %1762 = vmatpush2.bf16.msra.mxu0 0
    %1763 = vmatprep.subr.bf16.mxu0 0
    %1764 = vmatpush2.bf16.msra.mxu0 0
    %1765 = vmatprep.mubr.bf16.mxu0 0
    %1766 = vmatmul.mubr.bf16.gmra.mxu0 %v1588
    %v1767 = vpop.f32.mrf.mxu0
    %v1768 = vadd.f32 %v1721, %v1767
    %v1769 = vpop.f32.mrf.mxu0
    %v1770 = vadd.f32 %v1725, %v1769
    %v1771 = vpop.f32.mrf.mxu0
    %v1772 = vpop.f32.mrf.mxu0
    %1773 = vdwg.mxu0
    %1774 = vmatprep.subr.bf16.mxu0 0
    %1775 = vmatpush1.bf16.msra.mxu0 %v1692
    %1776 = vmatprep.subr.bf16.mxu0 0
    %1777 = vmatpush1.bf16.msra.mxu0 %v1689
    %1778 = vmatprep.subr.bf16.mxu0 0
    %1779 = vmatpush1.bf16.msra.mxu0 %v1686
    %1780 = vmatprep.subr.bf16.mxu0 0
    %1781 = vmatpush1.bf16.msra.mxu0 %v1683
    %1782 = vmatprep.subr.bf16.mxu0 0
    %1783 = vmatpush1.bf16.msra.mxu0 %v1680
    %1784 = vmatprep.subr.bf16.mxu0 0
    %1785 = vmatpush1.bf16.msra.mxu0 %v1677
    %1786 = vmatprep.subr.bf16.mxu0 0
    %1787 = vmatpush1.bf16.msra.mxu0 %v1674
    %1788 = vmatprep.subr.bf16.mxu0 0
    %1789 = vmatpush1.bf16.msra.mxu0 %v1671
    %1790 = vmatprep.subr.bf16.mxu0 0
    %1791 = vmatpush2.bf16.msra.mxu0 0
    %1792 = vmatprep.subr.bf16.mxu0 0
    %1793 = vmatpush2.bf16.msra.mxu0 0
    %1794 = vmatprep.subr.bf16.mxu0 0
    %1795 = vmatpush2.bf16.msra.mxu0 0
    %1796 = vmatprep.subr.bf16.mxu0 0
    %1797 = vmatpush2.bf16.msra.mxu0 0
    %1798 = vmatprep.subr.bf16.mxu0 0
    %1799 = vmatpush2.bf16.msra.mxu0 0
    %1800 = vmatprep.subr.bf16.mxu0 0
    %1801 = vmatpush2.bf16.msra.mxu0 0
    %1802 = vmatprep.subr.bf16.mxu0 0
    %1803 = vmatpush2.bf16.msra.mxu0 0
    %1804 = vmatprep.subr.bf16.mxu0 0
    %1805 = vmatpush2.bf16.msra.mxu0 0
    %1806 = vmatprep.mubr.bf16.mxu0 0
    %1807 = vmatmul.mubr.bf16.gmra.mxu0 %v1588
    %v1808 = vpop.f32.mrf.mxu0
    %v1809 = vadd.f32 %v1729, %v1808
    %v1810 = vpop.f32.mrf.mxu0
    %v1811 = vpop.f32.mrf.mxu0
    %v1812 = vpop.f32.mrf.mxu0
    %1813 = vdwg.mxu0
    %v1814 = vpack.c.bf16 %v1468, %v1468
    %v1847 = vunpack.c.l.b16 %v1502
    %v1848 = vunpack.c.h.b16 %v1502
    %v1849 = vunpack.c.l.b16 %v1503
    %v1850 = vunpack.c.l.b16 %v1504
    %v1851 = vunpack.c.h.b16 %v1504
    %v1852 = vunpack.c.l.b16 %v1505
    %v1853 = vunpack.c.l.b16 %v1506
    %v1854 = vunpack.c.h.b16 %v1506
    %v1855 = vunpack.c.l.b16 %v1507
    %v1856 = vunpack.c.l.b16 %v1508
    %v1857 = vunpack.c.h.b16 %v1508
    %v1858 = vunpack.c.l.b16 %v1509
    %v1859 = vunpack.c.l.b16 %v1510
    %v1860 = vunpack.c.h.b16 %v1510
    %v1861 = vunpack.c.l.b16 %v1511
    %v1862 = vunpack.c.l.b16 %v1512
    %v1863 = vunpack.c.h.b16 %v1512
    %v1864 = vunpack.c.l.b16 %v1513
    %v1865 = vunpack.c.l.b16 %v1514
    %v1866 = vunpack.c.h.b16 %v1514
    %v1867 = vunpack.c.l.b16 %v1515
    %v1868 = vunpack.c.l.b16 %v1516
    %v1869 = vunpack.c.h.b16 %v1516
    %v1870 = vunpack.c.l.b16 %v1517
    %v1871 = vunpack.c.l.b16 %v1518
    %v1872 = vunpack.c.h.b16 %v1518
    %v1873 = vunpack.c.l.b16 %v1519
    %v1874 = vunpack.c.l.b16 %v1520
    %v1875 = vunpack.c.h.b16 %v1520
    %v1876 = vunpack.c.l.b16 %v1521
    %v1877 = vunpack.c.l.b16 %v1522
    %v1878 = vunpack.c.h.b16 %v1522
    %v1879 = vunpack.c.l.b16 %v1523
    %v1880 = vunpack.c.l.b16 %v1524
    %v1881 = vunpack.c.h.b16 %v1524
    %v1882 = vunpack.c.l.b16 %v1525
    %v1883 = vunpack.c.l.b16 %v1526
    %v1884 = vunpack.c.h.b16 %v1526
    %v1885 = vunpack.c.l.b16 %v1527
    %v1886 = vunpack.c.l.b16 %v1528
    %v1887 = vunpack.c.h.b16 %v1528
    %v1888 = vunpack.c.l.b16 %v1529
    %v1889 = vunpack.c.l.b16 %v1530
    %v1890 = vunpack.c.h.b16 %v1530
    %v1891 = vunpack.c.l.b16 %v1531
    %v1892 = vunpack.c.l.b16 %v1532
    %v1893 = vunpack.c.h.b16 %v1532
    %v1894 = vunpack.c.l.b16 %v1533
    %v1895 = vpack.c.b16 %v1850, %v1847
    %v1896 = vpack.c.b16 %v1851, %v1848
    %v1897 = vpack.c.b16 %v1852, %v1849
    %v1898 = vpack.c.b16 %v1856, %v1853
    %v1899 = vpack.c.b16 %v1857, %v1854
    %v1900 = vpack.c.b16 %v1858, %v1855
    %v1901 = vpack.c.b16 %v1862, %v1859
    %v1902 = vpack.c.b16 %v1863, %v1860
    %v1903 = vpack.c.b16 %v1864, %v1861
    %v1904 = vpack.c.b16 %v1868, %v1865
    %v1905 = vpack.c.b16 %v1869, %v1866
    %v1906 = vpack.c.b16 %v1870, %v1867
    %v1907 = vpack.c.b16 %v1874, %v1871
    %v1908 = vpack.c.b16 %v1875, %v1872
    %v1909 = vpack.c.b16 %v1876, %v1873
    %v1910 = vpack.c.b16 %v1880, %v1877
    %v1911 = vpack.c.b16 %v1881, %v1878
    %v1912 = vpack.c.b16 %v1882, %v1879
    %v1913 = vpack.c.b16 %v1886, %v1883
    %v1914 = vpack.c.b16 %v1887, %v1884
    %v1915 = vpack.c.b16 %v1888, %v1885
    %v1916 = vpack.c.b16 %v1892, %v1889
    %v1917 = vpack.c.b16 %v1893, %v1890
    %v1918 = vpack.c.b16 %v1894, %v1891
    %v1944 = vlaneseq
    %v1945 = vshrl.u32 %v1944, 7
    %v1946 = vsub.s32 0, %v1945
    %v1947 = vrot.slane %v1535, %v1946
    %v1948 = vlaneseq
    %v1949 = vshrl.u32 %v1948, 7
    %v1950 = vsub.s32 1, %v1949
    %v1951 = vrot.slane %v1535, %v1950
    %v1952 = vlaneseq
    %v1953 = vshrl.u32 %v1952, 7
    %v1954 = vsub.s32 2, %v1953
    %v1955 = vrot.slane %v1535, %v1954
    %1959 = vmatprep.subr.bf16.mxu0 %v1917
    %1960 = vmatpush1.bf16.msra.mxu0 %v1916
    %1961 = vmatprep.subr.bf16.mxu0 %v1914
    %1962 = vmatpush1.bf16.msra.mxu0 %v1913
    %1963 = vmatprep.subr.bf16.mxu0 %v1911
    %1964 = vmatpush1.bf16.msra.mxu0 %v1910
    %1965 = vmatprep.subr.bf16.mxu0 %v1908
    %1966 = vmatpush1.bf16.msra.mxu0 %v1907
    %1967 = vmatprep.subr.bf16.mxu0 %v1905
    %1968 = vmatpush1.bf16.msra.mxu0 %v1904
    %1969 = vmatprep.subr.bf16.mxu0 %v1902
    %1970 = vmatpush1.bf16.msra.mxu0 %v1901
    %1971 = vmatprep.subr.bf16.mxu0 %v1899
    %1972 = vmatpush1.bf16.msra.mxu0 %v1898
    %1973 = vmatprep.subr.bf16.mxu0 %v1896
    %1974 = vmatpush1.bf16.msra.mxu0 %v1895
    %1975 = vmatprep.subr.bf16.mxu0 0
    %1976 = vmatpush2.bf16.msra.mxu0 0
    %1977 = vmatprep.subr.bf16.mxu0 0
    %1978 = vmatpush2.bf16.msra.mxu0 0
    %1979 = vmatprep.subr.bf16.mxu0 0
    %1980 = vmatpush2.bf16.msra.mxu0 0
    %1981 = vmatprep.subr.bf16.mxu0 0
    %1982 = vmatpush2.bf16.msra.mxu0 0
    %1983 = vmatprep.subr.bf16.mxu0 0
    %1984 = vmatpush2.bf16.msra.mxu0 0
    %1985 = vmatprep.subr.bf16.mxu0 0
    %1986 = vmatpush2.bf16.msra.mxu0 0
    %1987 = vmatprep.subr.bf16.mxu0 0
    %1988 = vmatpush2.bf16.msra.mxu0 0
    %1989 = vmatprep.subr.bf16.mxu0 0
    %1990 = vmatpush2.bf16.msra.mxu0 0
    %1991 = vmatprep.mubr.bf16.mxu0 0
    %1992 = vmatmul.mubr.bf16.gmra.mxu0 %v1814
    %v1993 = vpop.f32.mrf.mxu0
    %v1994 = vadd.f32 %v1947, %v1993
    %v1995 = vpop.f32.mrf.mxu0
    %v1996 = vadd.f32 %v1951, %v1995
    %v1997 = vpop.f32.mrf.mxu0
    %v1998 = vpop.f32.mrf.mxu0
    %1999 = vdwg.mxu0
    %2000 = vmatprep.subr.bf16.mxu0 0
    %2001 = vmatpush1.bf16.msra.mxu0 %v1918
    %2002 = vmatprep.subr.bf16.mxu0 0
    %2003 = vmatpush1.bf16.msra.mxu0 %v1915
    %2004 = vmatprep.subr.bf16.mxu0 0
    %2005 = vmatpush1.bf16.msra.mxu0 %v1912
    %2006 = vmatprep.subr.bf16.mxu0 0
    %2007 = vmatpush1.bf16.msra.mxu0 %v1909
    %2008 = vmatprep.subr.bf16.mxu0 0
    %2009 = vmatpush1.bf16.msra.mxu0 %v1906
    %2010 = vmatprep.subr.bf16.mxu0 0
    %2011 = vmatpush1.bf16.msra.mxu0 %v1903
    %2012 = vmatprep.subr.bf16.mxu0 0
    %2013 = vmatpush1.bf16.msra.mxu0 %v1900
    %2014 = vmatprep.subr.bf16.mxu0 0
    %2015 = vmatpush1.bf16.msra.mxu0 %v1897
    %2016 = vmatprep.subr.bf16.mxu0 0
    %2017 = vmatpush2.bf16.msra.mxu0 0
    %2018 = vmatprep.subr.bf16.mxu0 0
    %2019 = vmatpush2.bf16.msra.mxu0 0
    %2020 = vmatprep.subr.bf16.mxu0 0
    %2021 = vmatpush2.bf16.msra.mxu0 0
    %2022 = vmatprep.subr.bf16.mxu0 0
    %2023 = vmatpush2.bf16.msra.mxu0 0
    %2024 = vmatprep.subr.bf16.mxu0 0
    %2025 = vmatpush2.bf16.msra.mxu0 0
    %2026 = vmatprep.subr.bf16.mxu0 0
    %2027 = vmatpush2.bf16.msra.mxu0 0
    %2028 = vmatprep.subr.bf16.mxu0 0
    %2029 = vmatpush2.bf16.msra.mxu0 0
    %2030 = vmatprep.subr.bf16.mxu0 0
    %2031 = vmatpush2.bf16.msra.mxu0 0
    %2032 = vmatprep.mubr.bf16.mxu0 0
    %2033 = vmatmul.mubr.bf16.gmra.mxu0 %v1814
    %v2034 = vpop.f32.mrf.mxu0
    %v2035 = vadd.f32 %v1955, %v2034
    %v2036 = vpop.f32.mrf.mxu0
    %v2037 = vpop.f32.mrf.mxu0
    %v2038 = vpop.f32.mrf.mxu0
    %2039 = vdwg.mxu0
    %v2040 = vadd.f32 %v1768, %v1994
    %v2041 = vxor.u32 %v2040, 2147483648
    %v2042 = vmul.f32 %v2041, 1.442695
    %v2043 = vpow.pop %v2042
    %v2044 = vadd.f32 %v2043, 1.0
    %v2045 = vrcp.pop %v2044
    %v2046 = vmul.f32 1.0, %v2045
    %v2047 = vadd.f32 %v1770, %v1996
    %v2048 = vxor.u32 %v2047, 2147483648
    %v2049 = vmul.f32 %v2048, 1.442695
    %v2050 = vpow.pop %v2049
    %v2051 = vadd.f32 %v2050, 1.0
    %v2052 = vrcp.pop %v2051
    %v2053 = vmul.f32 1.0, %v2052
    %v2054 = vmul.f32 %v2046, %v2035
    %v2055 = vadd.f32 %v1809, %v2054
    %v2056 = vtanh.pop %v2055
    %v2057 = vsub.f32 1.0, %v2053
    %v2058 = vmul.f32 %v2057, %v2056
    %v2059 = vmul.f32 %v2053, %v1468
    %v2060 = vadd.f32 %v2058, %v2059
    %2061 = vmatprep.subr.mxu0 0.0
    %2062 = vmatpush1.xpose.msra.mxu0 0.0
    %2063 = vmatprep.subr.mxu0 0.0
    %2064 = vmatpush1.xpose.msra.mxu0 0.0
    %2065 = vmatprep.subr.mxu0 0.0
    %2066 = vmatpush1.xpose.msra.mxu0 0.0
    %2067 = vmatprep.subr.mxu0 0.0
    %2068 = vmatpush1.xpose.msra.mxu0 0.0
    %2069 = vmatprep.subr.mxu0 0.0
    %2070 = vmatpush1.xpose.msra.mxu0 0.0
    %2071 = vmatprep.subr.mxu0 0.0
    %2072 = vmatpush1.xpose.msra.mxu0 0.0
    %2073 = vmatprep.subr.mxu0 0.0
    %2074 = vmatpush1.xpose.msra.mxu0 0.0
    %2075 = vmatprep.subr.mxu0 0.0
    %2076 = vmatpush1.xpose.msra.mxu0 0.0
    %2077 = vmatprep.subr.mxu0 0.0
    %2078 = vmatpush1.xpose.msra.mxu0 0.0
    %2079 = vmatprep.subr.mxu0 0.0
    %2080 = vmatpush1.xpose.msra.mxu0 0.0
    %2081 = vmatprep.subr.mxu0 0.0
    %2082 = vmatpush1.xpose.msra.mxu0 0.0
    %2083 = vmatprep.subr.mxu0 0.0
    %2084 = vmatpush1.xpose.msra.mxu0 0.0
    %2085 = vmatprep.subr.mxu0 0.0
    %2086 = vmatpush1.xpose.msra.mxu0 0.0
    %2087 = vmatprep.subr.mxu0 0.0
    %2088 = vmatpush1.xpose.msra.mxu0 0.0
    %2089 = vmatprep.subr.mxu0 0.0
    %2090 = vmatpush1.xpose.msra.mxu0 0.0
    %2091 = vmatprep.subr.mxu0 0.0
    %2092 = vmatpush1.xpose.msra.mxu0 %v1586
    %2093 = vmatprep.subr.mxu0 0.0
    %2094 = vmatpush2.xpose.msra.mxu0 0.0
    %2095 = vmatprep.subr.mxu0 0.0
    %2096 = vmatpush2.xpose.msra.mxu0 0.0
    %2097 = vmatprep.subr.mxu0 0.0
    %2098 = vmatpush2.xpose.msra.mxu0 0.0
    %2099 = vmatprep.subr.mxu0 0.0
    %2100 = vmatpush2.xpose.msra.mxu0 0.0
    %2101 = vmatprep.subr.mxu0 0.0
    %2102 = vmatpush2.xpose.msra.mxu0 0.0
    %2103 = vmatprep.subr.mxu0 0.0
    %2104 = vmatpush2.xpose.msra.mxu0 0.0
    %2105 = vmatprep.subr.mxu0 0.0
    %2106 = vmatpush2.xpose.msra.mxu0 0.0
    %2107 = vmatprep.subr.mxu0 0.0
    %2108 = vmatpush2.xpose.msra.mxu0 0.0
    %2109 = vmatprep.subr.mxu0 0.0
    %2110 = vmatpush2.xpose.msra.mxu0 0.0
    %2111 = vmatprep.subr.mxu0 0.0
    %2112 = vmatpush2.xpose.msra.mxu0 0.0
    %2113 = vmatprep.subr.mxu0 0.0
    %2114 = vmatpush2.xpose.msra.mxu0 0.0
    %2115 = vmatprep.subr.mxu0 0.0
    %2116 = vmatpush2.xpose.msra.mxu0 0.0
    %2117 = vmatprep.subr.mxu0 0.0
    %2118 = vmatpush2.xpose.msra.mxu0 0.0
    %2119 = vmatprep.subr.mxu0 0.0
    %2120 = vmatpush2.xpose.msra.mxu0 0.0
    %2121 = vmatprep.subr.mxu0 0.0
    %2122 = vmatpush2.xpose.msra.mxu0 0.0
    %2123 = vmatprep.subr.mxu0 0.0
    %2124 = vmatpush2.xpose.msra.mxu0 0.0
    %2125 = vmatprep.mubr.f32.mxu0 0.0
    %2126 = vmatmul.mubr.f32.gmra.mxu0 %v2060
    %v2127 = vpop.f32.mrf.mxu0
    %v2128 = vadd.f32 0.0, %v2127
    %v2129 = vpop.f32.mrf.mxu0
    %2130 = vdwg.mxu0
    %vm2131 = vcmask 57344
    %v2132 = vsel %vm2131, %v2128, -inf
    %2133 = vmax.xlane.f32.xlu0 %v2132
    %v2134 = vpop.xlane.xlu0 %2133
    %v2135 = vsub.f32 %v2128, %v2134
    %v2136 = vmul.f32 %v2135, 1.442695
    %v2137 = vpow.pop %v2136
    %v2138 = vsel %vm2131, %v2137, 0.0
    %2139 = vadd.xlane.f32.xlu0 %v2138
    %v2140 = vpop.xlane.xlu0 %2139
    %v2141 = vrcp.pop %v2140
    %v2142 = vmul.f32 %v2137, %v2141
    %vm2143 = vcmask 64512
    %v2145 = vsel %vm2143, %v2142, 0
    %2147 = vmatprep.subr.mxu0 0.0
    %2148 = vmatpush1.msra.mxu0 0.0
    %2149 = vmatprep.subr.mxu0 0.0
    %2150 = vmatpush1.msra.mxu0 0.0
    %2151 = vmatprep.subr.mxu0 0.0
    %2152 = vmatpush1.msra.mxu0 0.0
    %2153 = vmatprep.subr.mxu0 0.0
    %2154 = vmatpush1.msra.mxu0 0.0
    %2155 = vmatprep.subr.mxu0 0.0
    %2156 = vmatpush1.msra.mxu0 0.0
    %2157 = vmatprep.subr.mxu0 0.0
    %2158 = vmatpush1.msra.mxu0 0.0
    %2159 = vmatprep.subr.mxu0 0.0
    %2160 = vmatpush1.msra.mxu0 0.0
    %2161 = vmatprep.subr.mxu0 0.0
    %2162 = vmatpush1.msra.mxu0 0.0
    %2163 = vmatprep.subr.mxu0 0.0
    %2164 = vmatpush1.msra.mxu0 0.0
    %2165 = vmatprep.subr.mxu0 0.0
    %2166 = vmatpush1.msra.mxu0 0.0
    %2167 = vmatprep.subr.mxu0 0.0
    %2168 = vmatpush1.msra.mxu0 0.0
    %2169 = vmatprep.subr.mxu0 0.0
    %2170 = vmatpush1.msra.mxu0 0.0
    %2171 = vmatprep.subr.mxu0 0.0
    %2172 = vmatpush1.msra.mxu0 0.0
    %2173 = vmatprep.subr.mxu0 0.0
    %2174 = vmatpush1.msra.mxu0 0.0
    %2175 = vmatprep.subr.mxu0 0.0
    %2176 = vmatpush1.msra.mxu0 0.0
    %2177 = vmatprep.subr.mxu0 0.0
    %2178 = vmatpush1.msra.mxu0 %v1586
    %2179 = vmatprep.subr.mxu0 0.0
    %2180 = vmatpush2.msra.mxu0 0.0
    %2181 = vmatprep.subr.mxu0 0.0
    %2182 = vmatpush2.msra.mxu0 0.0
    %2183 = vmatprep.subr.mxu0 0.0
    %2184 = vmatpush2.msra.mxu0 0.0
    %2185 = vmatprep.subr.mxu0 0.0
    %2186 = vmatpush2.msra.mxu0 0.0
    %2187 = vmatprep.subr.mxu0 0.0
    %2188 = vmatpush2.msra.mxu0 0.0
    %2189 = vmatprep.subr.mxu0 0.0
    %2190 = vmatpush2.msra.mxu0 0.0
    %2191 = vmatprep.subr.mxu0 0.0
    %2192 = vmatpush2.msra.mxu0 0.0
    %2193 = vmatprep.subr.mxu0 0.0
    %2194 = vmatpush2.msra.mxu0 0.0
    %2195 = vmatprep.subr.mxu0 0.0
    %2196 = vmatpush2.msra.mxu0 0.0
    %2197 = vmatprep.subr.mxu0 0.0
    %2198 = vmatpush2.msra.mxu0 0.0
    %2199 = vmatprep.subr.mxu0 0.0
    %2200 = vmatpush2.msra.mxu0 0.0
    %2201 = vmatprep.subr.mxu0 0.0
    %2202 = vmatpush2.msra.mxu0 0.0
    %2203 = vmatprep.subr.mxu0 0.0
    %2204 = vmatpush2.msra.mxu0 0.0
    %2205 = vmatprep.subr.mxu0 0.0
    %2206 = vmatpush2.msra.mxu0 0.0
    %2207 = vmatprep.subr.mxu0 0.0
    %2208 = vmatpush2.msra.mxu0 0.0
    %2209 = vmatprep.subr.mxu0 0.0
    %2210 = vmatpush2.msra.mxu0 0.0
    %2211 = vmatprep.mubr.f32.mxu0 0.0
    %2212 = vmatmul.mubr.f32.gmra.mxu0 %v2145
    %v2213 = vpop.f32.mrf.mxu0
    %v2214 = vadd.f32 0.0, %v2213
    %v2215 = vpop.f32.mrf.mxu0
    %2216 = vdwg.mxu0
    %v2217 = vpack.c.bf16 %v2060, %v2060
    %v2218 = vpack.c.bf16 %v2214, %v2214
    %v2251 = vunpack.c.l.b16 %v1536
    %v2252 = vunpack.c.l.b16 %v1537
    %v2253 = vunpack.c.l.b16 %v1538
    %v2254 = vunpack.c.l.b16 %v1539
    %v2255 = vunpack.c.l.b16 %v1540
    %v2256 = vunpack.c.l.b16 %v1541
    %v2257 = vunpack.c.l.b16 %v1542
    %v2258 = vunpack.c.l.b16 %v1543
    %v2259 = vunpack.c.l.b16 %v1544
    %v2260 = vunpack.c.l.b16 %v1545
    %v2261 = vunpack.c.l.b16 %v1546
    %v2262 = vunpack.c.l.b16 %v1547
    %v2263 = vunpack.c.l.b16 %v1548
    %v2264 = vunpack.c.l.b16 %v1549
    %v2265 = vunpack.c.l.b16 %v1550
    %v2266 = vunpack.c.l.b16 %v1551
    %v2267 = vunpack.c.l.b16 %v1552
    %v2268 = vunpack.c.l.b16 %v1553
    %v2269 = vunpack.c.l.b16 %v1554
    %v2270 = vunpack.c.l.b16 %v1555
    %v2271 = vunpack.c.l.b16 %v1556
    %v2272 = vunpack.c.l.b16 %v1557
    %v2273 = vunpack.c.l.b16 %v1558
    %v2274 = vunpack.c.l.b16 %v1559
    %v2275 = vunpack.c.l.b16 %v1560
    %v2276 = vunpack.c.l.b16 %v1561
    %v2277 = vunpack.c.l.b16 %v1562
    %v2278 = vunpack.c.l.b16 %v1563
    %v2279 = vunpack.c.l.b16 %v1564
    %v2280 = vunpack.c.l.b16 %v1565
    %v2281 = vunpack.c.l.b16 %v1566
    %v2282 = vunpack.c.l.b16 %v1567
    %v2283 = vpack.c.b16 %v2252, %v2251
    %v2284 = vpack.c.b16 %v2254, %v2253
    %v2285 = vpack.c.b16 %v2256, %v2255
    %v2286 = vpack.c.b16 %v2258, %v2257
    %v2287 = vpack.c.b16 %v2260, %v2259
    %v2288 = vpack.c.b16 %v2262, %v2261
    %v2289 = vpack.c.b16 %v2264, %v2263
    %v2290 = vpack.c.b16 %v2266, %v2265
    %v2291 = vpack.c.b16 %v2268, %v2267
    %v2292 = vpack.c.b16 %v2270, %v2269
    %v2293 = vpack.c.b16 %v2272, %v2271
    %v2294 = vpack.c.b16 %v2274, %v2273
    %v2295 = vpack.c.b16 %v2276, %v2275
    %v2296 = vpack.c.b16 %v2278, %v2277
    %v2297 = vpack.c.b16 %v2280, %v2279
    %v2298 = vpack.c.b16 %v2282, %v2281
    %2315 = vmatprep.subr.bf16.mxu0 0
    %2316 = vmatpush1.bf16.msra.mxu0 %v2290
    %2317 = vmatprep.subr.bf16.mxu0 0
    %2318 = vmatpush1.bf16.msra.mxu0 %v2289
    %2319 = vmatprep.subr.bf16.mxu0 0
    %2320 = vmatpush1.bf16.msra.mxu0 %v2288
    %2321 = vmatprep.subr.bf16.mxu0 0
    %2322 = vmatpush1.bf16.msra.mxu0 %v2287
    %2323 = vmatprep.subr.bf16.mxu0 0
    %2324 = vmatpush1.bf16.msra.mxu0 %v2286
    %2325 = vmatprep.subr.bf16.mxu0 0
    %2326 = vmatpush1.bf16.msra.mxu0 %v2285
    %2327 = vmatprep.subr.bf16.mxu0 0
    %2328 = vmatpush1.bf16.msra.mxu0 %v2284
    %2329 = vmatprep.subr.bf16.mxu0 0
    %2330 = vmatpush1.bf16.msra.mxu0 %v2283
    %2331 = vmatprep.subr.bf16.mxu0 0
    %2332 = vmatpush2.bf16.msra.mxu0 %v2298
    %2333 = vmatprep.subr.bf16.mxu0 0
    %2334 = vmatpush2.bf16.msra.mxu0 %v2297
    %2335 = vmatprep.subr.bf16.mxu0 0
    %2336 = vmatpush2.bf16.msra.mxu0 %v2296
    %2337 = vmatprep.subr.bf16.mxu0 0
    %2338 = vmatpush2.bf16.msra.mxu0 %v2295
    %2339 = vmatprep.subr.bf16.mxu0 0
    %2340 = vmatpush2.bf16.msra.mxu0 %v2294
    %2341 = vmatprep.subr.bf16.mxu0 0
    %2342 = vmatpush2.bf16.msra.mxu0 %v2293
    %2343 = vmatprep.subr.bf16.mxu0 0
    %2344 = vmatpush2.bf16.msra.mxu0 %v2292
    %2345 = vmatprep.subr.bf16.mxu0 0
    %2346 = vmatpush2.bf16.msra.mxu0 %v2291
    %2347 = vmatprep.mubr.bf16.mxu0 %v2218
    %2348 = vmatmul.mubr.bf16.gmra.mxu0 %v2217
    %v2349 = vpop.f32.mrf.mxu0
    %v2350 = vadd.f32 %v1568, %v2349
    %v2351 = vpop.f32.mrf.mxu0
    %v2352 = vpop.f32.mrf.mxu0
    %v2353 = vpop.f32.mrf.mxu0
    %2354 = vdwg.mxu0
    %v2355 = vtanh.pop %v2350
    %v2356 = vpack.c.bf16 %v2355, %v2355
    %v2373 = vunpack.c.l.b16 %v1569
    %v2374 = vunpack.c.h.b16 %v1569
    %v2375 = vunpack.c.l.b16 %v1570
    %v2376 = vunpack.c.h.b16 %v1570
    %v2377 = vunpack.c.l.b16 %v1571
    %v2378 = vunpack.c.h.b16 %v1571
    %v2379 = vunpack.c.l.b16 %v1572
    %v2380 = vunpack.c.h.b16 %v1572
    %v2381 = vunpack.c.l.b16 %v1573
    %v2382 = vunpack.c.h.b16 %v1573
    %v2383 = vunpack.c.l.b16 %v1574
    %v2384 = vunpack.c.h.b16 %v1574
    %v2385 = vunpack.c.l.b16 %v1575
    %v2386 = vunpack.c.h.b16 %v1575
    %v2387 = vunpack.c.l.b16 %v1576
    %v2388 = vunpack.c.h.b16 %v1576
    %v2389 = vunpack.c.l.b16 %v1577
    %v2390 = vunpack.c.h.b16 %v1577
    %v2391 = vunpack.c.l.b16 %v1578
    %v2392 = vunpack.c.h.b16 %v1578
    %v2393 = vunpack.c.l.b16 %v1579
    %v2394 = vunpack.c.h.b16 %v1579
    %v2395 = vunpack.c.l.b16 %v1580
    %v2396 = vunpack.c.h.b16 %v1580
    %v2397 = vunpack.c.l.b16 %v1581
    %v2398 = vunpack.c.h.b16 %v1581
    %v2399 = vunpack.c.l.b16 %v1582
    %v2400 = vunpack.c.h.b16 %v1582
    %v2401 = vunpack.c.l.b16 %v1583
    %v2402 = vunpack.c.h.b16 %v1583
    %v2403 = vunpack.c.l.b16 %v1584
    %v2404 = vunpack.c.h.b16 %v1584
    %v2405 = vpack.c.b16 %v2375, %v2373
    %v2406 = vpack.c.b16 %v2376, %v2374
    %v2407 = vpack.c.b16 %v2379, %v2377
    %v2408 = vpack.c.b16 %v2380, %v2378
    %v2409 = vpack.c.b16 %v2383, %v2381
    %v2410 = vpack.c.b16 %v2384, %v2382
    %v2411 = vpack.c.b16 %v2387, %v2385
    %v2412 = vpack.c.b16 %v2388, %v2386
    %v2413 = vpack.c.b16 %v2391, %v2389
    %v2414 = vpack.c.b16 %v2392, %v2390
    %v2415 = vpack.c.b16 %v2395, %v2393
    %v2416 = vpack.c.b16 %v2396, %v2394
    %v2417 = vpack.c.b16 %v2399, %v2397
    %v2418 = vpack.c.b16 %v2400, %v2398
    %v2419 = vpack.c.b16 %v2403, %v2401
    %v2420 = vpack.c.b16 %v2404, %v2402
    %v2438 = vlaneseq
    %v2439 = vshrl.u32 %v2438, 7
    %v2440 = vsub.s32 0, %v2439
    %v2441 = vrot.slane %v1585, %v2440
    %v2442 = vlaneseq
    %v2443 = vshrl.u32 %v2442, 7
    %v2444 = vsub.s32 1, %v2443
    %v2445 = vrot.slane %v1585, %v2444
    %2448 = vmatprep.subr.bf16.mxu0 %v2420
    %2449 = vmatpush1.bf16.msra.mxu0 %v2419
    %2450 = vmatprep.subr.bf16.mxu0 %v2418
    %2451 = vmatpush1.bf16.msra.mxu0 %v2417
    %2452 = vmatprep.subr.bf16.mxu0 %v2416
    %2453 = vmatpush1.bf16.msra.mxu0 %v2415
    %2454 = vmatprep.subr.bf16.mxu0 %v2414
    %2455 = vmatpush1.bf16.msra.mxu0 %v2413
    %2456 = vmatprep.subr.bf16.mxu0 %v2412
    %2457 = vmatpush1.bf16.msra.mxu0 %v2411
    %2458 = vmatprep.subr.bf16.mxu0 %v2410
    %2459 = vmatpush1.bf16.msra.mxu0 %v2409
    %2460 = vmatprep.subr.bf16.mxu0 %v2408
    %2461 = vmatpush1.bf16.msra.mxu0 %v2407
    %2462 = vmatprep.subr.bf16.mxu0 %v2406
    %2463 = vmatpush1.bf16.msra.mxu0 %v2405
    %2464 = vmatprep.subr.bf16.mxu0 0
    %2465 = vmatpush2.bf16.msra.mxu0 0
    %2466 = vmatprep.subr.bf16.mxu0 0
    %2467 = vmatpush2.bf16.msra.mxu0 0
    %2468 = vmatprep.subr.bf16.mxu0 0
    %2469 = vmatpush2.bf16.msra.mxu0 0
    %2470 = vmatprep.subr.bf16.mxu0 0
    %2471 = vmatpush2.bf16.msra.mxu0 0
    %2472 = vmatprep.subr.bf16.mxu0 0
    %2473 = vmatpush2.bf16.msra.mxu0 0
    %2474 = vmatprep.subr.bf16.mxu0 0
    %2475 = vmatpush2.bf16.msra.mxu0 0
    %2476 = vmatprep.subr.bf16.mxu0 0
    %2477 = vmatpush2.bf16.msra.mxu0 0
    %2478 = vmatprep.subr.bf16.mxu0 0
    %2479 = vmatpush2.bf16.msra.mxu0 0
    %2480 = vmatprep.mubr.bf16.mxu0 0
    %2481 = vmatmul.mubr.bf16.gmra.mxu0 %v2356
    %v2482 = vpop.f32.mrf.mxu0
    %v2483 = vadd.f32 %v2441, %v2482
    %v2484 = vpop.f32.mrf.mxu0
    %v2485 = vadd.f32 %v2445, %v2484
    %v2486 = vpop.f32.mrf.mxu0
    %v2487 = vpop.f32.mrf.mxu0
    %2488 = vdwg.mxu0
    %vm2489 = vcmask 1040384
    %v2490 = vsel %vm2489, %v2483, -inf
    %v2491 = vsel %vm2489, %v2485, -inf
    %v2492 = vmax.f32 %v2490, %v2491
    %2493 = vmax.xlane.f32.xlu0 %v2492
    %v2494 = vpop.xlane.xlu0 %2493
    %v2495 = vlaneseq
    %v2496 = vand.u32 %v2495, 127
    %v2497 = vadd.s32 %v2496, 128
    %vm2498 = vcmp.ge.f32.partialorder %v2483, %v2494
    %vm2499 = vcmp.ge.f32.partialorder %v2485, %v2494
    %v2500 = vsel %vm2498, %v2496, 256
    %v2501 = vsel %vm2499, %v2497, 256
    %v2502 = vsel %vm2489, %v2500, 2147483647
    %v2503 = vsel %vm2489, %v2501, 2147483647
    %vm2504 = vcmp.lt.s32.totalorder %v2502, %v2503
    %v2505 = vsel %vm2504, %v2502, %v2503
    %v2506 = vand.u32 %v2505, 65535
    %v2507 = vshra.s32 %v2505, 16
    %v2508 = vcvt.s32.f32 %v2506
    %v2509 = vcvt.s32.f32 %v2507
    %2510 = vmin.xlane.f32.xlu0 %v2509
    %v2511 = vpop.xlane.xlu0 %2510
    %vm2512 = vcmp.eq.f32.partialorder %v2509, %v2511
    %v2513 = vsel %vm2512, %v2508, inf
    %2514 = vmin.xlane.f32.xlu0 %v2513
    %v2515 = vpop.xlane.xlu0 %2514
    %v2516 = vcvt.f32.s32 %v2515
    %v2517 = vcvt.f32.s32 %v2511
    %v2518 = vshll.u32 %v2517, 16
    %v2519 = vadd.s32 %v2518, %v2516
    %v2520 = vsub.f32 %v2483, %v2494
    %v2521 = vsub.f32 %v2485, %v2494
    %v2522 = vmul.f32 %v2520, 1.442695
    %v2523 = vpow.pop %v2522
    %v2524 = vmul.f32 %v2521, 1.442695
    %v2525 = vpow.pop %v2524
    %v2526 = vsel %vm2489, %v2523, 0.0
    %v2527 = vsel %vm2489, %v2525, 0.0
    %v2528 = vadd.f32 %v2526, %v2527
    %2529 = vadd.xlane.f32.xlu0 %v2528
    %v2530 = vpop.xlane.xlu0 %2529
    %v2531 = vrcp.pop %v2530
    %v2532 = vmul.f32 1.0, %v2531
    %vm2533 = vcmask 0
    %2534 = vst.msk [vmem:[#allocation4] sm:$0x1] %vm2533, %v2519
    %v2535 = vld [vmem:[#allocation4] sm:$0x1]
    %s2536 = vtos %v2535
    %v2537 = vstv %s2536
    %2538 = vst [vmem:[%s14] sm:$0x1] %v2537
    %2539 = vst [vmem:[%s15] sm:$0x1] %v2532
    %s2540 = scalar_lea.vmem [#allocation5], %s2536
    %v2541 = vld [vmem:[%s2540] sm:$0x1]
    %v2542 = vpack.c.bf16 %v2541, %v2541
    %2543 = vmatprep.subr.bf16.mxu0 %v1691
    %2544 = vmatpush1.bf16.msra.mxu0 %v1690
    %2545 = vmatprep.subr.bf16.mxu0 %v1688
    %2546 = vmatpush1.bf16.msra.mxu0 %v1687
    %2547 = vmatprep.subr.bf16.mxu0 %v1685
    %2548 = vmatpush1.bf16.msra.mxu0 %v1684
    %2549 = vmatprep.subr.bf16.mxu0 %v1682
    %2550 = vmatpush1.bf16.msra.mxu0 %v1681
    %2551 = vmatprep.subr.bf16.mxu0 %v1679
    %2552 = vmatpush1.bf16.msra.mxu0 %v1678
    %2553 = vmatprep.subr.bf16.mxu0 %v1676
    %2554 = vmatpush1.bf16.msra.mxu0 %v1675
    %2555 = vmatprep.subr.bf16.mxu0 %v1673
    %2556 = vmatpush1.bf16.msra.mxu0 %v1672
    %2557 = vmatprep.subr.bf16.mxu0 %v1670
    %2558 = vmatpush1.bf16.msra.mxu0 %v1669
    %2559 = vmatprep.subr.bf16.mxu0 0
    %2560 = vmatpush2.bf16.msra.mxu0 0
    %2561 = vmatprep.subr.bf16.mxu0 0
    %2562 = vmatpush2.bf16.msra.mxu0 0
    %2563 = vmatprep.subr.bf16.mxu0 0
    %2564 = vmatpush2.bf16.msra.mxu0 0
    %2565 = vmatprep.subr.bf16.mxu0 0
    %2566 = vmatpush2.bf16.msra.mxu0 0
    %2567 = vmatprep.subr.bf16.mxu0 0
    %2568 = vmatpush2.bf16.msra.mxu0 0
    %2569 = vmatprep.subr.bf16.mxu0 0
    %2570 = vmatpush2.bf16.msra.mxu0 0
    %2571 = vmatprep.subr.bf16.mxu0 0
    %2572 = vmatpush2.bf16.msra.mxu0 0
    %2573 = vmatprep.subr.bf16.mxu0 0
    %2574 = vmatpush2.bf16.msra.mxu0 0
    %2575 = vmatprep.mubr.bf16.mxu0 0
    %2576 = vmatmul.mubr.bf16.gmra.mxu0 %v2542
    %v2577 = vpop.f32.mrf.mxu0
    %v2578 = vadd.f32 %v1721, %v2577
    %v2579 = vpop.f32.mrf.mxu0
    %v2580 = vadd.f32 %v1725, %v2579
    %v2581 = vpop.f32.mrf.mxu0
    %v2582 = vpop.f32.mrf.mxu0
    %2583 = vdwg.mxu0
    %2584 = vmatprep.subr.bf16.mxu0 0
    %2585 = vmatpush1.bf16.msra.mxu0 %v1692
    %2586 = vmatprep.subr.bf16.mxu0 0
    %2587 = vmatpush1.bf16.msra.mxu0 %v1689
    %2588 = vmatprep.subr.bf16.mxu0 0
    %2589 = vmatpush1.bf16.msra.mxu0 %v1686
    %2590 = vmatprep.subr.bf16.mxu0 0
    %2591 = vmatpush1.bf16.msra.mxu0 %v1683
    %2592 = vmatprep.subr.bf16.mxu0 0
    %2593 = vmatpush1.bf16.msra.mxu0 %v1680
    %2594 = vmatprep.subr.bf16.mxu0 0
    %2595 = vmatpush1.bf16.msra.mxu0 %v1677
    %2596 = vmatprep.subr.bf16.mxu0 0
    %2597 = vmatpush1.bf16.msra.mxu0 %v1674
    %2598 = vmatprep.subr.bf16.mxu0 0
    %2599 = vmatpush1.bf16.msra.mxu0 %v1671
    %2600 = vmatprep.subr.bf16.mxu0 0
    %2601 = vmatpush2.bf16.msra.mxu0 0
    %2602 = vmatprep.subr.bf16.mxu0 0
    %2603 = vmatpush2.bf16.msra.mxu0 0
    %2604 = vmatprep.subr.bf16.mxu0 0
    %2605 = vmatpush2.bf16.msra.mxu0 0
    %2606 = vmatprep.subr.bf16.mxu0 0
    %2607 = vmatpush2.bf16.msra.mxu0 0
    %2608 = vmatprep.subr.bf16.mxu0 0
    %2609 = vmatpush2.bf16.msra.mxu0 0
    %2610 = vmatprep.subr.bf16.mxu0 0
    %2611 = vmatpush2.bf16.msra.mxu0 0
    %2612 = vmatprep.subr.bf16.mxu0 0
    %2613 = vmatpush2.bf16.msra.mxu0 0
    %2614 = vmatprep.subr.bf16.mxu0 0
    %2615 = vmatpush2.bf16.msra.mxu0 0
    %2616 = vmatprep.mubr.bf16.mxu0 0
    %2617 = vmatmul.mubr.bf16.gmra.mxu0 %v2542
    %v2618 = vpop.f32.mrf.mxu0
    %v2619 = vadd.f32 %v1729, %v2618
    %v2620 = vpop.f32.mrf.mxu0
    %v2621 = vpop.f32.mrf.mxu0
    %v2622 = vpop.f32.mrf.mxu0
    %2623 = vdwg.mxu0
    %2624 = vmatprep.subr.bf16.mxu0 %v1917
    %2625 = vmatpush1.bf16.msra.mxu0 %v1916
    %2626 = vmatprep.subr.bf16.mxu0 %v1914
    %2627 = vmatpush1.bf16.msra.mxu0 %v1913
    %2628 = vmatprep.subr.bf16.mxu0 %v1911
    %2629 = vmatpush1.bf16.msra.mxu0 %v1910
    %2630 = vmatprep.subr.bf16.mxu0 %v1908
    %2631 = vmatpush1.bf16.msra.mxu0 %v1907
    %2632 = vmatprep.subr.bf16.mxu0 %v1905
    %2633 = vmatpush1.bf16.msra.mxu0 %v1904
    %2634 = vmatprep.subr.bf16.mxu0 %v1902
    %2635 = vmatpush1.bf16.msra.mxu0 %v1901
    %2636 = vmatprep.subr.bf16.mxu0 %v1899
    %2637 = vmatpush1.bf16.msra.mxu0 %v1898
    %2638 = vmatprep.subr.bf16.mxu0 %v1896
    %2639 = vmatpush1.bf16.msra.mxu0 %v1895
    %2640 = vmatprep.subr.bf16.mxu0 0
    %2641 = vmatpush2.bf16.msra.mxu0 0
    %2642 = vmatprep.subr.bf16.mxu0 0
    %2643 = vmatpush2.bf16.msra.mxu0 0
    %2644 = vmatprep.subr.bf16.mxu0 0
    %2645 = vmatpush2.bf16.msra.mxu0 0
    %2646 = vmatprep.subr.bf16.mxu0 0
    %2647 = vmatpush2.bf16.msra.mxu0 0
    %2648 = vmatprep.subr.bf16.mxu0 0
    %2649 = vmatpush2.bf16.msra.mxu0 0
    %2650 = vmatprep.subr.bf16.mxu0 0
    %2651 = vmatpush2.bf16.msra.mxu0 0
    %2652 = vmatprep.subr.bf16.mxu0 0
    %2653 = vmatpush2.bf16.msra.mxu0 0
    %2654 = vmatprep.subr.bf16.mxu0 0
    %2655 = vmatpush2.bf16.msra.mxu0 0
    %2656 = vmatprep.mubr.bf16.mxu0 0
    %2657 = vmatmul.mubr.bf16.gmra.mxu0 %v2217
    %v2658 = vpop.f32.mrf.mxu0
    %v2659 = vadd.f32 %v1947, %v2658
    %v2660 = vpop.f32.mrf.mxu0
    %v2661 = vadd.f32 %v1951, %v2660
    %v2662 = vpop.f32.mrf.mxu0
    %v2663 = vpop.f32.mrf.mxu0
    %2664 = vdwg.mxu0
    %2665 = vmatprep.subr.bf16.mxu0 0
    %2666 = vmatpush1.bf16.msra.mxu0 %v1918
    %2667 = vmatprep.subr.bf16.mxu0 0
    %2668 = vmatpush1.bf16.msra.mxu0 %v1915
    %2669 = vmatprep.subr.bf16.mxu0 0
    %2670 = vmatpush1.bf16.msra.mxu0 %v1912
    %2671 = vmatprep.subr.bf16.mxu0 0
    %2672 = vmatpush1.bf16.msra.mxu0 %v1909
    %2673 = vmatprep.subr.bf16.mxu0 0
    %2674 = vmatpush1.bf16.msra.mxu0 %v1906
    %2675 = vmatprep.subr.bf16.mxu0 0
    %2676 = vmatpush1.bf16.msra.mxu0 %v1903
    %2677 = vmatprep.subr.bf16.mxu0 0
    %2678 = vmatpush1.bf16.msra.mxu0 %v1900
    %2679 = vmatprep.subr.bf16.mxu0 0
    %2680 = vmatpush1.bf16.msra.mxu0 %v1897
    %2681 = vmatprep.subr.bf16.mxu0 0
    %2682 = vmatpush2.bf16.msra.mxu0 0
    %2683 = vmatprep.subr.bf16.mxu0 0
    %2684 = vmatpush2.bf16.msra.mxu0 0
    %2685 = vmatprep.subr.bf16.mxu0 0
    %2686 = vmatpush2.bf16.msra.mxu0 0
    %2687 = vmatprep.subr.bf16.mxu0 0
    %2688 = vmatpush2.bf16.msra.mxu0 0
    %2689 = vmatprep.subr.bf16.mxu0 0
    %2690 = vmatpush2.bf16.msra.mxu0 0
    %2691 = vmatprep.subr.bf16.mxu0 0
    %2692 = vmatpush2.bf16.msra.mxu0 0
    %2693 = vmatprep.subr.bf16.mxu0 0
    %2694 = vmatpush2.bf16.msra.mxu0 0
    %2695 = vmatprep.subr.bf16.mxu0 0
    %2696 = vmatpush2.bf16.msra.mxu0 0
    %2697 = vmatprep.mubr.bf16.mxu0 0
    %2698 = vmatmul.mubr.bf16.gmra.mxu0 %v2217
    %v2699 = vpop.f32.mrf.mxu0
    %v2700 = vadd.f32 %v1955, %v2699
    %v2701 = vpop.f32.mrf.mxu0
    %v2702 = vpop.f32.mrf.mxu0
    %v2703 = vpop.f32.mrf.mxu0
    %2704 = vdwg.mxu0
    %v2705 = vadd.f32 %v2578, %v2659
    %v2706 = vxor.u32 %v2705, 2147483648
    %v2707 = vmul.f32 %v2706, 1.442695
    %v2708 = vpow.pop %v2707
    %v2709 = vadd.f32 %v2708, 1.0
    %v2710 = vrcp.pop %v2709
    %v2711 = vmul.f32 1.0, %v2710
    %v2712 = vadd.f32 %v2580, %v2661
    %v2713 = vxor.u32 %v2712, 2147483648
    %v2714 = vmul.f32 %v2713, 1.442695
    %v2715 = vpow.pop %v2714
    %v2716 = vadd.f32 %v2715, 1.0
    %v2717 = vrcp.pop %v2716
    %v2718 = vmul.f32 1.0, %v2717
    %v2719 = vmul.f32 %v2711, %v2700
    %v2720 = vadd.f32 %v2619, %v2719
    %v2721 = vtanh.pop %v2720
    %v2722 = vsub.f32 1.0, %v2718
    %v2723 = vmul.f32 %v2722, %v2721
    %v2724 = vmul.f32 %v2718, %v2060
    %v2725 = vadd.f32 %v2723, %v2724
    %2726 = vmatprep.subr.mxu0 0.0
    %2727 = vmatpush1.xpose.msra.mxu0 0.0
    %2728 = vmatprep.subr.mxu0 0.0
    %2729 = vmatpush1.xpose.msra.mxu0 0.0
    %2730 = vmatprep.subr.mxu0 0.0
    %2731 = vmatpush1.xpose.msra.mxu0 0.0
    %2732 = vmatprep.subr.mxu0 0.0
    %2733 = vmatpush1.xpose.msra.mxu0 0.0
    %2734 = vmatprep.subr.mxu0 0.0
    %2735 = vmatpush1.xpose.msra.mxu0 0.0
    %2736 = vmatprep.subr.mxu0 0.0
    %2737 = vmatpush1.xpose.msra.mxu0 0.0
    %2738 = vmatprep.subr.mxu0 0.0
    %2739 = vmatpush1.xpose.msra.mxu0 0.0
    %2740 = vmatprep.subr.mxu0 0.0
    %2741 = vmatpush1.xpose.msra.mxu0 0.0
    %2742 = vmatprep.subr.mxu0 0.0
    %2743 = vmatpush1.xpose.msra.mxu0 0.0
    %2744 = vmatprep.subr.mxu0 0.0
    %2745 = vmatpush1.xpose.msra.mxu0 0.0
    %2746 = vmatprep.subr.mxu0 0.0
    %2747 = vmatpush1.xpose.msra.mxu0 0.0
    %2748 = vmatprep.subr.mxu0 0.0
    %2749 = vmatpush1.xpose.msra.mxu0 0.0
    %2750 = vmatprep.subr.mxu0 0.0
    %2751 = vmatpush1.xpose.msra.mxu0 0.0
    %2752 = vmatprep.subr.mxu0 0.0
    %2753 = vmatpush1.xpose.msra.mxu0 0.0
    %2754 = vmatprep.subr.mxu0 0.0
    %2755 = vmatpush1.xpose.msra.mxu0 0.0
    %2756 = vmatprep.subr.mxu0 0.0
    %2757 = vmatpush1.xpose.msra.mxu0 %v1586
    %2758 = vmatprep.subr.mxu0 0.0
    %2759 = vmatpush2.xpose.msra.mxu0 0.0
    %2760 = vmatprep.subr.mxu0 0.0
    %2761 = vmatpush2.xpose.msra.mxu0 0.0
    %2762 = vmatprep.subr.mxu0 0.0
    %2763 = vmatpush2.xpose.msra.mxu0 0.0
    %2764 = vmatprep.subr.mxu0 0.0
    %2765 = vmatpush2.xpose.msra.mxu0 0.0
    %2766 = vmatprep.subr.mxu0 0.0
    %2767 = vmatpush2.xpose.msra.mxu0 0.0
    %2768 = vmatprep.subr.mxu0 0.0
    %2769 = vmatpush2.xpose.msra.mxu0 0.0
    %2770 = vmatprep.subr.mxu0 0.0
    %2771 = vmatpush2.xpose.msra.mxu0 0.0
    %2772 = vmatprep.subr.mxu0 0.0
    %2773 = vmatpush2.xpose.msra.mxu0 0.0
    %2774 = vmatprep.subr.mxu0 0.0
    %2775 = vmatpush2.xpose.msra.mxu0 0.0
    %2776 = vmatprep.subr.mxu0 0.0
    %2777 = vmatpush2.xpose.msra.mxu0 0.0
    %2778 = vmatprep.subr.mxu0 0.0
    %2779 = vmatpush2.xpose.msra.mxu0 0.0
    %2780 = vmatprep.subr.mxu0 0.0
    %2781 = vmatpush2.xpose.msra.mxu0 0.0
    %2782 = vmatprep.subr.mxu0 0.0
    %2783 = vmatpush2.xpose.msra.mxu0 0.0
    %2784 = vmatprep.subr.mxu0 0.0
    %2785 = vmatpush2.xpose.msra.mxu0 0.0
    %2786 = vmatprep.subr.mxu0 0.0
    %2787 = vmatpush2.xpose.msra.mxu0 0.0
    %2788 = vmatprep.subr.mxu0 0.0
    %2789 = vmatpush2.xpose.msra.mxu0 0.0
    %2790 = vmatprep.mubr.f32.mxu0 0.0
    %2791 = vmatmul.mubr.f32.gmra.mxu0 %v2725
    %v2792 = vpop.f32.mrf.mxu0
    %v2793 = vadd.f32 0.0, %v2792
    %v2794 = vpop.f32.mrf.mxu0
    %2795 = vdwg.mxu0
    %v2796 = vsel %vm2131, %v2793, -inf
    %2797 = vmax.xlane.f32.xlu0 %v2796
    %v2798 = vpop.xlane.xlu0 %2797
    %v2799 = vsub.f32 %v2793, %v2798
    %v2800 = vmul.f32 %v2799, 1.442695
    %v2801 = vpow.pop %v2800
    %v2802 = vsel %vm2131, %v2801, 0.0
    %2803 = vadd.xlane.f32.xlu0 %v2802
    %v2804 = vpop.xlane.xlu0 %2803
    %v2805 = vrcp.pop %v2804
    %v2806 = vmul.f32 %v2801, %v2805
    %v2808 = vsel %vm2143, %v2806, 0
    %2810 = vmatprep.subr.mxu0 0.0
    %2811 = vmatpush1.msra.mxu0 0.0
    %2812 = vmatprep.subr.mxu0 0.0
    %2813 = vmatpush1.msra.mxu0 0.0
    %2814 = vmatprep.subr.mxu0 0.0
    %2815 = vmatpush1.msra.mxu0 0.0
    %2816 = vmatprep.subr.mxu0 0.0
    %2817 = vmatpush1.msra.mxu0 0.0
    %2818 = vmatprep.subr.mxu0 0.0
    %2819 = vmatpush1.msra.mxu0 0.0
    %2820 = vmatprep.subr.mxu0 0.0
    %2821 = vmatpush1.msra.mxu0 0.0
    %2822 = vmatprep.subr.mxu0 0.0
    %2823 = vmatpush1.msra.mxu0 0.0
    %2824 = vmatprep.subr.mxu0 0.0
    %2825 = vmatpush1.msra.mxu0 0.0
    %2826 = vmatprep.subr.mxu0 0.0
    %2827 = vmatpush1.msra.mxu0 0.0
    %2828 = vmatprep.subr.mxu0 0.0
    %2829 = vmatpush1.msra.mxu0 0.0
    %2830 = vmatprep.subr.mxu0 0.0
    %2831 = vmatpush1.msra.mxu0 0.0
    %2832 = vmatprep.subr.mxu0 0.0
    %2833 = vmatpush1.msra.mxu0 0.0
    %2834 = vmatprep.subr.mxu0 0.0
    %2835 = vmatpush1.msra.mxu0 0.0
    %2836 = vmatprep.subr.mxu0 0.0
    %2837 = vmatpush1.msra.mxu0 0.0
    %2838 = vmatprep.subr.mxu0 0.0
    %2839 = vmatpush1.msra.mxu0 0.0
    %2840 = vmatprep.subr.mxu0 0.0
    %2841 = vmatpush1.msra.mxu0 %v1586
    %2842 = vmatprep.subr.mxu0 0.0
    %2843 = vmatpush2.msra.mxu0 0.0
    %2844 = vmatprep.subr.mxu0 0.0
    %2845 = vmatpush2.msra.mxu0 0.0
    %2846 = vmatprep.subr.mxu0 0.0
    %2847 = vmatpush2.msra.mxu0 0.0
    %2848 = vmatprep.subr.mxu0 0.0
    %2849 = vmatpush2.msra.mxu0 0.0
    %2850 = vmatprep.subr.mxu0 0.0
    %2851 = vmatpush2.msra.mxu0 0.0
    %2852 = vmatprep.subr.mxu0 0.0
    %2853 = vmatpush2.msra.mxu0 0.0
    %2854 = vmatprep.subr.mxu0 0.0
    %2855 = vmatpush2.msra.mxu0 0.0
    %2856 = vmatprep.subr.mxu0 0.0
    %2857 = vmatpush2.msra.mxu0 0.0
    %2858 = vmatprep.subr.mxu0 0.0
    %2859 = vmatpush2.msra.mxu0 0.0
    %2860 = vmatprep.subr.mxu0 0.0
    %2861 = vmatpush2.msra.mxu0 0.0
    %2862 = vmatprep.subr.mxu0 0.0
    %2863 = vmatpush2.msra.mxu0 0.0
    %2864 = vmatprep.subr.mxu0 0.0
    %2865 = vmatpush2.msra.mxu0 0.0
    %2866 = vmatprep.subr.mxu0 0.0
    %2867 = vmatpush2.msra.mxu0 0.0
    %2868 = vmatprep.subr.mxu0 0.0
    %2869 = vmatpush2.msra.mxu0 0.0
    %2870 = vmatprep.subr.mxu0 0.0
    %2871 = vmatpush2.msra.mxu0 0.0
    %2872 = vmatprep.subr.mxu0 0.0
    %2873 = vmatpush2.msra.mxu0 0.0
    %2874 = vmatprep.mubr.f32.mxu0 0.0
    %2875 = vmatmul.mubr.f32.gmra.mxu0 %v2808
    %v2876 = vpop.f32.mrf.mxu0
    %v2877 = vadd.f32 0.0, %v2876
    %v2878 = vpop.f32.mrf.mxu0
    %2879 = vdwg.mxu0
    %v2880 = vpack.c.bf16 %v2725, %v2725
    %v2881 = vpack.c.bf16 %v2877, %v2877
    %2882 = vmatprep.subr.bf16.mxu0 0
    %2883 = vmatpush1.bf16.msra.mxu0 %v2290
    %2884 = vmatprep.subr.bf16.mxu0 0
    %2885 = vmatpush1.bf16.msra.mxu0 %v2289
    %2886 = vmatprep.subr.bf16.mxu0 0
    %2887 = vmatpush1.bf16.msra.mxu0 %v2288
    %2888 = vmatprep.subr.bf16.mxu0 0
    %2889 = vmatpush1.bf16.msra.mxu0 %v2287
    %2890 = vmatprep.subr.bf16.mxu0 0
    %2891 = vmatpush1.bf16.msra.mxu0 %v2286
    %2892 = vmatprep.subr.bf16.mxu0 0
    %2893 = vmatpush1.bf16.msra.mxu0 %v2285
    %2894 = vmatprep.subr.bf16.mxu0 0
    %2895 = vmatpush1.bf16.msra.mxu0 %v2284
    %2896 = vmatprep.subr.bf16.mxu0 0
    %2897 = vmatpush1.bf16.msra.mxu0 %v2283
    %2898 = vmatprep.subr.bf16.mxu0 0
    %2899 = vmatpush2.bf16.msra.mxu0 %v2298
    %2900 = vmatprep.subr.bf16.mxu0 0
    %2901 = vmatpush2.bf16.msra.mxu0 %v2297
    %2902 = vmatprep.subr.bf16.mxu0 0
    %2903 = vmatpush2.bf16.msra.mxu0 %v2296
    %2904 = vmatprep.subr.bf16.mxu0 0
    %2905 = vmatpush2.bf16.msra.mxu0 %v2295
    %2906 = vmatprep.subr.bf16.mxu0 0
    %2907 = vmatpush2.bf16.msra.mxu0 %v2294
    %2908 = vmatprep.subr.bf16.mxu0 0
    %2909 = vmatpush2.bf16.msra.mxu0 %v2293
    %2910 = vmatprep.subr.bf16.mxu0 0
    %2911 = vmatpush2.bf16.msra.mxu0 %v2292
    %2912 = vmatprep.subr.bf16.mxu0 0
    %2913 = vmatpush2.bf16.msra.mxu0 %v2291
    %2914 = vmatprep.mubr.bf16.mxu0 %v2881
    %2915 = vmatmul.mubr.bf16.gmra.mxu0 %v2880
    %v2916 = vpop.f32.mrf.mxu0
    %v2917 = vadd.f32 %v1568, %v2916
    %v2918 = vpop.f32.mrf.mxu0
    %v2919 = vpop.f32.mrf.mxu0
    %v2920 = vpop.f32.mrf.mxu0
    %2921 = vdwg.mxu0
    %v2922 = vtanh.pop %v2917
    %v2923 = vpack.c.bf16 %v2922, %v2922
    %2924 = vmatprep.subr.bf16.mxu0 %v2420
    %2925 = vmatpush1.bf16.msra.mxu0 %v2419
    %2926 = vmatprep.subr.bf16.mxu0 %v2418
    %2927 = vmatpush1.bf16.msra.mxu0 %v2417
    %2928 = vmatprep.subr.bf16.mxu0 %v2416
    %2929 = vmatpush1.bf16.msra.mxu0 %v2415
    %2930 = vmatprep.subr.bf16.mxu0 %v2414
    %2931 = vmatpush1.bf16.msra.mxu0 %v2413
    %2932 = vmatprep.subr.bf16.mxu0 %v2412
    %2933 = vmatpush1.bf16.msra.mxu0 %v2411
    %2934 = vmatprep.subr.bf16.mxu0 %v2410
    %2935 = vmatpush1.bf16.msra.mxu0 %v2409
    %2936 = vmatprep.subr.bf16.mxu0 %v2408
    %2937 = vmatpush1.bf16.msra.mxu0 %v2407
    %2938 = vmatprep.subr.bf16.mxu0 %v2406
    %2939 = vmatpush1.bf16.msra.mxu0 %v2405
    %2940 = vmatprep.subr.bf16.mxu0 0
    %2941 = vmatpush2.bf16.msra.mxu0 0
    %2942 = vmatprep.subr.bf16.mxu0 0
    %2943 = vmatpush2.bf16.msra.mxu0 0
    %2944 = vmatprep.subr.bf16.mxu0 0
    %2945 = vmatpush2.bf16.msra.mxu0 0
    %2946 = vmatprep.subr.bf16.mxu0 0
    %2947 = vmatpush2.bf16.msra.mxu0 0
    %2948 = vmatprep.subr.bf16.mxu0 0
    %2949 = vmatpush2.bf16.msra.mxu0 0
    %2950 = vmatprep.subr.bf16.mxu0 0
    %2951 = vmatpush2.bf16.msra.mxu0 0
    %2952 = vmatprep.subr.bf16.mxu0 0
    %2953 = vmatpush2.bf16.msra.mxu0 0
    %2954 = vmatprep.subr.bf16.mxu0 0
    %2955 = vmatpush2.bf16.msra.mxu0 0
    %2956 = vmatprep.mubr.bf16.mxu0 0
    %2957 = vmatmul.mubr.bf16.gmra.mxu0 %v2923
    %v2958 = vpop.f32.mrf.mxu0
    %v2959 = vadd.f32 %v2441, %v2958
    %v2960 = vpop.f32.mrf.mxu0
    %v2961 = vadd.f32 %v2445, %v2960
    %v2962 = vpop.f32.mrf.mxu0
    %v2963 = vpop.f32.mrf.mxu0
    %2964 = vdwg.mxu0
    %v2965 = vsel %vm2489, %v2959, -inf
    %v2966 = vsel %vm2489, %v2961, -inf
    %v2967 = vmax.f32 %v2965, %v2966
    %2968 = vmax.xlane.f32.xlu0 %v2967
    %v2969 = vpop.xlane.xlu0 %2968
    %vm2970 = vcmp.ge.f32.partialorder %v2959, %v2969
    %vm2971 = vcmp.ge.f32.partialorder %v2961, %v2969
    %v2972 = vsel %vm2970, %v2496, 256
    %v2973 = vsel %vm2971, %v2497, 256
    %v2974 = vsel %vm2489, %v2972, 2147483647
    %v2975 = vsel %vm2489, %v2973, 2147483647
    %vm2976 = vcmp.lt.s32.totalorder %v2974, %v2975
    %v2977 = vsel %vm2976, %v2974, %v2975
    %v2978 = vand.u32 %v2977, 65535
    %v2979 = vshra.s32 %v2977, 16
    %v2980 = vcvt.s32.f32 %v2978
    %v2981 = vcvt.s32.f32 %v2979
    %2982 = vmin.xlane.f32.xlu0 %v2981
    %v2983 = vpop.xlane.xlu0 %2982
    %vm2984 = vcmp.eq.f32.partialorder %v2981, %v2983
    %v2985 = vsel %vm2984, %v2980, inf
    %2986 = vmin.xlane.f32.xlu0 %v2985
    %v2987 = vpop.xlane.xlu0 %2986
    %v2988 = vcvt.f32.s32 %v2987
    %v2989 = vcvt.f32.s32 %v2983
    %v2990 = vshll.u32 %v2989, 16
    %v2991 = vadd.s32 %v2990, %v2988
    %v2992 = vsub.f32 %v2959, %v2969
    %v2993 = vsub.f32 %v2961, %v2969
    %v2994 = vmul.f32 %v2992, 1.442695
    %v2995 = vpow.pop %v2994
    %v2996 = vmul.f32 %v2993, 1.442695
    %v2997 = vpow.pop %v2996
    %v2998 = vsel %vm2489, %v2995, 0.0
    %v2999 = vsel %vm2489, %v2997, 0.0
    %v3000 = vadd.f32 %v2998, %v2999
    %3001 = vadd.xlane.f32.xlu0 %v3000
    %v3002 = vpop.xlane.xlu0 %3001
    %v3003 = vrcp.pop %v3002
    %v3004 = vmul.f32 1.0, %v3003
    %3005 = vst.msk [vmem:[#allocation4] sm:$0x1] %vm2533, %v2991
    %v3006 = vld [vmem:[#allocation4] sm:$0x1]
    %s3007 = vtos %v3006
    %v3008 = vstv %s3007
    %3009 = vst [vmem:[%s14 + $0x1] sm:$0x1] %v3008
    %3010 = vst [vmem:[%s15 + $0x1] sm:$0x1] %v3004
    %s3011 = scalar_lea.vmem [#allocation5], %s3007
    %v3012 = vld [vmem:[%s3011] sm:$0x1]
    %v3013 = vpack.c.bf16 %v3012, %v3012
    %3014 = vmatprep.subr.bf16.mxu0 %v1691
    %3015 = vmatpush1.bf16.msra.mxu0 %v1690
    %3016 = vmatprep.subr.bf16.mxu0 %v1688
    %3017 = vmatpush1.bf16.msra.mxu0 %v1687
    %3018 = vmatprep.subr.bf16.mxu0 %v1685
    %3019 = vmatpush1.bf16.msra.mxu0 %v1684
    %3020 = vmatprep.subr.bf16.mxu0 %v1682
    %3021 = vmatpush1.bf16.msra.mxu0 %v1681
    %3022 = vmatprep.subr.bf16.mxu0 %v1679
    %3023 = vmatpush1.bf16.msra.mxu0 %v1678
    %3024 = vmatprep.subr.bf16.mxu0 %v1676
    %3025 = vmatpush1.bf16.msra.mxu0 %v1675
    %3026 = vmatprep.subr.bf16.mxu0 %v1673
    %3027 = vmatpush1.bf16.msra.mxu0 %v1672
    %3028 = vmatprep.subr.bf16.mxu0 %v1670
    %3029 = vmatpush1.bf16.msra.mxu0 %v1669
    %3030 = vmatprep.subr.bf16.mxu0 0
    %3031 = vmatpush2.bf16.msra.mxu0 0
    %3032 = vmatprep.subr.bf16.mxu0 0
    %3033 = vmatpush2.bf16.msra.mxu0 0
    %3034 = vmatprep.subr.bf16.mxu0 0
    %3035 = vmatpush2.bf16.msra.mxu0 0
    %3036 = vmatprep.subr.bf16.mxu0 0
    %3037 = vmatpush2.bf16.msra.mxu0 0
    %3038 = vmatprep.subr.bf16.mxu0 0
    %3039 = vmatpush2.bf16.msra.mxu0 0
    %3040 = vmatprep.subr.bf16.mxu0 0
    %3041 = vmatpush2.bf16.msra.mxu0 0
    %3042 = vmatprep.subr.bf16.mxu0 0
    %3043 = vmatpush2.bf16.msra.mxu0 0
    %3044 = vmatprep.subr.bf16.mxu0 0
    %3045 = vmatpush2.bf16.msra.mxu0 0
    %3046 = vmatprep.mubr.bf16.mxu0 0
    %3047 = vmatmul.mubr.bf16.gmra.mxu0 %v3013
    %v3048 = vpop.f32.mrf.mxu0
    %v3049 = vadd.f32 %v1721, %v3048
    %v3050 = vpop.f32.mrf.mxu0
    %v3051 = vadd.f32 %v1725, %v3050
    %v3052 = vpop.f32.mrf.mxu0
    %v3053 = vpop.f32.mrf.mxu0
    %3054 = vdwg.mxu0
    %3055 = vmatprep.subr.bf16.mxu0 0
    %3056 = vmatpush1.bf16.msra.mxu0 %v1692
    %3057 = vmatprep.subr.bf16.mxu0 0
    %3058 = vmatpush1.bf16.msra.mxu0 %v1689
    %3059 = vmatprep.subr.bf16.mxu0 0
    %3060 = vmatpush1.bf16.msra.mxu0 %v1686
    %3061 = vmatprep.subr.bf16.mxu0 0
    %3062 = vmatpush1.bf16.msra.mxu0 %v1683
    %3063 = vmatprep.subr.bf16.mxu0 0
    %3064 = vmatpush1.bf16.msra.mxu0 %v1680
    %3065 = vmatprep.subr.bf16.mxu0 0
    %3066 = vmatpush1.bf16.msra.mxu0 %v1677
    %3067 = vmatprep.subr.bf16.mxu0 0
    %3068 = vmatpush1.bf16.msra.mxu0 %v1674
    %3069 = vmatprep.subr.bf16.mxu0 0
    %3070 = vmatpush1.bf16.msra.mxu0 %v1671
    %3071 = vmatprep.subr.bf16.mxu0 0
    %3072 = vmatpush2.bf16.msra.mxu0 0
    %3073 = vmatprep.subr.bf16.mxu0 0
    %3074 = vmatpush2.bf16.msra.mxu0 0
    %3075 = vmatprep.subr.bf16.mxu0 0
    %3076 = vmatpush2.bf16.msra.mxu0 0
    %3077 = vmatprep.subr.bf16.mxu0 0
    %3078 = vmatpush2.bf16.msra.mxu0 0
    %3079 = vmatprep.subr.bf16.mxu0 0
    %3080 = vmatpush2.bf16.msra.mxu0 0
    %3081 = vmatprep.subr.bf16.mxu0 0
    %3082 = vmatpush2.bf16.msra.mxu0 0
    %3083 = vmatprep.subr.bf16.mxu0 0
    %3084 = vmatpush2.bf16.msra.mxu0 0
    %3085 = vmatprep.subr.bf16.mxu0 0
    %3086 = vmatpush2.bf16.msra.mxu0 0
    %3087 = vmatprep.mubr.bf16.mxu0 0
    %3088 = vmatmul.mubr.bf16.gmra.mxu0 %v3013
    %v3089 = vpop.f32.mrf.mxu0
    %v3090 = vadd.f32 %v1729, %v3089
    %v3091 = vpop.f32.mrf.mxu0
    %v3092 = vpop.f32.mrf.mxu0
    %v3093 = vpop.f32.mrf.mxu0
    %3094 = vdwg.mxu0
    %3095 = vmatprep.subr.bf16.mxu0 %v1917
    %3096 = vmatpush1.bf16.msra.mxu0 %v1916
    %3097 = vmatprep.subr.bf16.mxu0 %v1914
    %3098 = vmatpush1.bf16.msra.mxu0 %v1913
    %3099 = vmatprep.subr.bf16.mxu0 %v1911
    %3100 = vmatpush1.bf16.msra.mxu0 %v1910
    %3101 = vmatprep.subr.bf16.mxu0 %v1908
    %3102 = vmatpush1.bf16.msra.mxu0 %v1907
    %3103 = vmatprep.subr.bf16.mxu0 %v1905
    %3104 = vmatpush1.bf16.msra.mxu0 %v1904
    %3105 = vmatprep.subr.bf16.mxu0 %v1902
    %3106 = vmatpush1.bf16.msra.mxu0 %v1901
    %3107 = vmatprep.subr.bf16.mxu0 %v1899
    %3108 = vmatpush1.bf16.msra.mxu0 %v1898
    %3109 = vmatprep.subr.bf16.mxu0 %v1896
    %3110 = vmatpush1.bf16.msra.mxu0 %v1895
    %3111 = vmatprep.subr.bf16.mxu0 0
    %3112 = vmatpush2.bf16.msra.mxu0 0
    %3113 = vmatprep.subr.bf16.mxu0 0
    %3114 = vmatpush2.bf16.msra.mxu0 0
    %3115 = vmatprep.subr.bf16.mxu0 0
    %3116 = vmatpush2.bf16.msra.mxu0 0
    %3117 = vmatprep.subr.bf16.mxu0 0
    %3118 = vmatpush2.bf16.msra.mxu0 0
    %3119 = vmatprep.subr.bf16.mxu0 0
    %3120 = vmatpush2.bf16.msra.mxu0 0
    %3121 = vmatprep.subr.bf16.mxu0 0
    %3122 = vmatpush2.bf16.msra.mxu0 0
    %3123 = vmatprep.subr.bf16.mxu0 0
    %3124 = vmatpush2.bf16.msra.mxu0 0
    %3125 = vmatprep.subr.bf16.mxu0 0
    %3126 = vmatpush2.bf16.msra.mxu0 0
    %3127 = vmatprep.mubr.bf16.mxu0 0
    %3128 = vmatmul.mubr.bf16.gmra.mxu0 %v2880
    %v3129 = vpop.f32.mrf.mxu0
    %v3130 = vadd.f32 %v1947, %v3129
    %v3131 = vpop.f32.mrf.mxu0
    %v3132 = vadd.f32 %v1951, %v3131
    %v3133 = vpop.f32.mrf.mxu0
    %v3134 = vpop.f32.mrf.mxu0
    %3135 = vdwg.mxu0
    %3136 = vmatprep.subr.bf16.mxu0 0
    %3137 = vmatpush1.bf16.msra.mxu0 %v1918
    %3138 = vmatprep.subr.bf16.mxu0 0
    %3139 = vmatpush1.bf16.msra.mxu0 %v1915
    %3140 = vmatprep.subr.bf16.mxu0 0
    %3141 = vmatpush1.bf16.msra.mxu0 %v1912
    %3142 = vmatprep.subr.bf16.mxu0 0
    %3143 = vmatpush1.bf16.msra.mxu0 %v1909
    %3144 = vmatprep.subr.bf16.mxu0 0
    %3145 = vmatpush1.bf16.msra.mxu0 %v1906
    %3146 = vmatprep.subr.bf16.mxu0 0
    %3147 = vmatpush1.bf16.msra.mxu0 %v1903
    %3148 = vmatprep.subr.bf16.mxu0 0
    %3149 = vmatpush1.bf16.msra.mxu0 %v1900
    %3150 = vmatprep.subr.bf16.mxu0 0
    %3151 = vmatpush1.bf16.msra.mxu0 %v1897
    %3152 = vmatprep.subr.bf16.mxu0 0
    %3153 = vmatpush2.bf16.msra.mxu0 0
    %3154 = vmatprep.subr.bf16.mxu0 0
    %3155 = vmatpush2.bf16.msra.mxu0 0
    %3156 = vmatprep.subr.bf16.mxu0 0
    %3157 = vmatpush2.bf16.msra.mxu0 0
    %3158 = vmatprep.subr.bf16.mxu0 0
    %3159 = vmatpush2.bf16.msra.mxu0 0
    %3160 = vmatprep.subr.bf16.mxu0 0
    %3161 = vmatpush2.bf16.msra.mxu0 0
    %3162 = vmatprep.subr.bf16.mxu0 0
    %3163 = vmatpush2.bf16.msra.mxu0 0
    %3164 = vmatprep.subr.bf16.mxu0 0
    %3165 = vmatpush2.bf16.msra.mxu0 0
    %3166 = vmatprep.subr.bf16.mxu0 0
    %3167 = vmatpush2.bf16.msra.mxu0 0
    %3168 = vmatprep.mubr.bf16.mxu0 0
    %3169 = vmatmul.mubr.bf16.gmra.mxu0 %v2880
    %v3170 = vpop.f32.mrf.mxu0
    %v3171 = vadd.f32 %v1955, %v3170
    %v3172 = vpop.f32.mrf.mxu0
    %v3173 = vpop.f32.mrf.mxu0
    %v3174 = vpop.f32.mrf.mxu0
    %3175 = vdwg.mxu0
    %v3176 = vadd.f32 %v3049, %v3130
    %v3177 = vxor.u32 %v3176, 2147483648
    %v3178 = vmul.f32 %v3177, 1.442695
    %v3179 = vpow.pop %v3178
    %v3180 = vadd.f32 %v3179, 1.0
    %v3181 = vrcp.pop %v3180
    %v3182 = vmul.f32 1.0, %v3181
    %v3183 = vadd.f32 %v3051, %v3132
    %v3184 = vxor.u32 %v3183, 2147483648
    %v3185 = vmul.f32 %v3184, 1.442695
    %v3186 = vpow.pop %v3185
    %v3187 = vadd.f32 %v3186, 1.0
    %v3188 = vrcp.pop %v3187
    %v3189 = vmul.f32 1.0, %v3188
    %v3190 = vmul.f32 %v3182, %v3171
    %v3191 = vadd.f32 %v3090, %v3190
    %v3192 = vtanh.pop %v3191
    %v3193 = vsub.f32 1.0, %v3189
    %v3194 = vmul.f32 %v3193, %v3192
    %v3195 = vmul.f32 %v3189, %v2725
    %v3196 = vadd.f32 %v3194, %v3195
    %3197 = vmatprep.subr.mxu0 0.0
    %3198 = vmatpush1.xpose.msra.mxu0 0.0
    %3199 = vmatprep.subr.mxu0 0.0
    %3200 = vmatpush1.xpose.msra.mxu0 0.0
    %3201 = vmatprep.subr.mxu0 0.0
    %3202 = vmatpush1.xpose.msra.mxu0 0.0
    %3203 = vmatprep.subr.mxu0 0.0
    %3204 = vmatpush1.xpose.msra.mxu0 0.0
    %3205 = vmatprep.subr.mxu0 0.0
    %3206 = vmatpush1.xpose.msra.mxu0 0.0
    %3207 = vmatprep.subr.mxu0 0.0
    %3208 = vmatpush1.xpose.msra.mxu0 0.0
    %3209 = vmatprep.subr.mxu0 0.0
    %3210 = vmatpush1.xpose.msra.mxu0 0.0
    %3211 = vmatprep.subr.mxu0 0.0
    %3212 = vmatpush1.xpose.msra.mxu0 0.0
    %3213 = vmatprep.subr.mxu0 0.0
    %3214 = vmatpush1.xpose.msra.mxu0 0.0
    %3215 = vmatprep.subr.mxu0 0.0
    %3216 = vmatpush1.xpose.msra.mxu0 0.0
    %3217 = vmatprep.subr.mxu0 0.0
    %3218 = vmatpush1.xpose.msra.mxu0 0.0
    %3219 = vmatprep.subr.mxu0 0.0
    %3220 = vmatpush1.xpose.msra.mxu0 0.0
    %3221 = vmatprep.subr.mxu0 0.0
    %3222 = vmatpush1.xpose.msra.mxu0 0.0
    %3223 = vmatprep.subr.mxu0 0.0
    %3224 = vmatpush1.xpose.msra.mxu0 0.0
    %3225 = vmatprep.subr.mxu0 0.0
    %3226 = vmatpush1.xpose.msra.mxu0 0.0
    %3227 = vmatprep.subr.mxu0 0.0
    %3228 = vmatpush1.xpose.msra.mxu0 %v1586
    %3229 = vmatprep.subr.mxu0 0.0
    %3230 = vmatpush2.xpose.msra.mxu0 0.0
    %3231 = vmatprep.subr.mxu0 0.0
    %3232 = vmatpush2.xpose.msra.mxu0 0.0
    %3233 = vmatprep.subr.mxu0 0.0
    %3234 = vmatpush2.xpose.msra.mxu0 0.0
    %3235 = vmatprep.subr.mxu0 0.0
    %3236 = vmatpush2.xpose.msra.mxu0 0.0
    %3237 = vmatprep.subr.mxu0 0.0
    %3238 = vmatpush2.xpose.msra.mxu0 0.0
    %3239 = vmatprep.subr.mxu0 0.0
    %3240 = vmatpush2.xpose.msra.mxu0 0.0
    %3241 = vmatprep.subr.mxu0 0.0
    %3242 = vmatpush2.xpose.msra.mxu0 0.0
    %3243 = vmatprep.subr.mxu0 0.0
    %3244 = vmatpush2.xpose.msra.mxu0 0.0
    %3245 = vmatprep.subr.mxu0 0.0
    %3246 = vmatpush2.xpose.msra.mxu0 0.0
    %3247 = vmatprep.subr.mxu0 0.0
    %3248 = vmatpush2.xpose.msra.mxu0 0.0
    %3249 = vmatprep.subr.mxu0 0.0
    %3250 = vmatpush2.xpose.msra.mxu0 0.0
    %3251 = vmatprep.subr.mxu0 0.0
    %3252 = vmatpush2.xpose.msra.mxu0 0.0
    %3253 = vmatprep.subr.mxu0 0.0
    %3254 = vmatpush2.xpose.msra.mxu0 0.0
    %3255 = vmatprep.subr.mxu0 0.0
    %3256 = vmatpush2.xpose.msra.mxu0 0.0
    %3257 = vmatprep.subr.mxu0 0.0
    %3258 = vmatpush2.xpose.msra.mxu0 0.0
    %3259 = vmatprep.subr.mxu0 0.0
    %3260 = vmatpush2.xpose.msra.mxu0 0.0
    %3261 = vmatprep.mubr.f32.mxu0 0.0
    %3262 = vmatmul.mubr.f32.gmra.mxu0 %v3196
    %v3263 = vpop.f32.mrf.mxu0
    %v3264 = vadd.f32 0.0, %v3263
    %v3265 = vpop.f32.mrf.mxu0
    %3266 = vdwg.mxu0
    %v3267 = vsel %vm2131, %v3264, -inf
    %3268 = vmax.xlane.f32.xlu0 %v3267
    %v3269 = vpop.xlane.xlu0 %3268
    %v3270 = vsub.f32 %v3264, %v3269
    %v3271 = vmul.f32 %v3270, 1.442695
    %v3272 = vpow.pop %v3271
    %v3273 = vsel %vm2131, %v3272, 0.0
    %3274 = vadd.xlane.f32.xlu0 %v3273
    %v3275 = vpop.xlane.xlu0 %3274
    %v3276 = vrcp.pop %v3275
    %v3277 = vmul.f32 %v3272, %v3276
    %v3279 = vsel %vm2143, %v3277, 0
    %3281 = vmatprep.subr.mxu0 0.0
    %3282 = vmatpush1.msra.mxu0 0.0
    %3283 = vmatprep.subr.mxu0 0.0
    %3284 = vmatpush1.msra.mxu0 0.0
    %3285 = vmatprep.subr.mxu0 0.0
    %3286 = vmatpush1.msra.mxu0 0.0
    %3287 = vmatprep.subr.mxu0 0.0
    %3288 = vmatpush1.msra.mxu0 0.0
    %3289 = vmatprep.subr.mxu0 0.0
    %3290 = vmatpush1.msra.mxu0 0.0
    %3291 = vmatprep.subr.mxu0 0.0
    %3292 = vmatpush1.msra.mxu0 0.0
    %3293 = vmatprep.subr.mxu0 0.0
    %3294 = vmatpush1.msra.mxu0 0.0
    %3295 = vmatprep.subr.mxu0 0.0
    %3296 = vmatpush1.msra.mxu0 0.0
    %3297 = vmatprep.subr.mxu0 0.0
    %3298 = vmatpush1.msra.mxu0 0.0
    %3299 = vmatprep.subr.mxu0 0.0
    %3300 = vmatpush1.msra.mxu0 0.0
    %3301 = vmatprep.subr.mxu0 0.0
    %3302 = vmatpush1.msra.mxu0 0.0
    %3303 = vmatprep.subr.mxu0 0.0
    %3304 = vmatpush1.msra.mxu0 0.0
    %3305 = vmatprep.subr.mxu0 0.0
    %3306 = vmatpush1.msra.mxu0 0.0
    %3307 = vmatprep.subr.mxu0 0.0
    %3308 = vmatpush1.msra.mxu0 0.0
    %3309 = vmatprep.subr.mxu0 0.0
    %3310 = vmatpush1.msra.mxu0 0.0
    %3311 = vmatprep.subr.mxu0 0.0
    %3312 = vmatpush1.msra.mxu0 %v1586
    %3313 = vmatprep.subr.mxu0 0.0
    %3314 = vmatpush2.msra.mxu0 0.0
    %3315 = vmatprep.subr.mxu0 0.0
    %3316 = vmatpush2.msra.mxu0 0.0
    %3317 = vmatprep.subr.mxu0 0.0
    %3318 = vmatpush2.msra.mxu0 0.0
    %3319 = vmatprep.subr.mxu0 0.0
    %3320 = vmatpush2.msra.mxu0 0.0
    %3321 = vmatprep.subr.mxu0 0.0
    %3322 = vmatpush2.msra.mxu0 0.0
    %3323 = vmatprep.subr.mxu0 0.0
    %3324 = vmatpush2.msra.mxu0 0.0
    %3325 = vmatprep.subr.mxu0 0.0
    %3326 = vmatpush2.msra.mxu0 0.0
    %3327 = vmatprep.subr.mxu0 0.0
    %3328 = vmatpush2.msra.mxu0 0.0
    %3329 = vmatprep.subr.mxu0 0.0
    %3330 = vmatpush2.msra.mxu0 0.0
    %3331 = vmatprep.subr.mxu0 0.0
    %3332 = vmatpush2.msra.mxu0 0.0
    %3333 = vmatprep.subr.mxu0 0.0
    %3334 = vmatpush2.msra.mxu0 0.0
    %3335 = vmatprep.subr.mxu0 0.0
    %3336 = vmatpush2.msra.mxu0 0.0
    %3337 = vmatprep.subr.mxu0 0.0
    %3338 = vmatpush2.msra.mxu0 0.0
    %3339 = vmatprep.subr.mxu0 0.0
    %3340 = vmatpush2.msra.mxu0 0.0
    %3341 = vmatprep.subr.mxu0 0.0
    %3342 = vmatpush2.msra.mxu0 0.0
    %3343 = vmatprep.subr.mxu0 0.0
    %3344 = vmatpush2.msra.mxu0 0.0
    %3345 = vmatprep.mubr.f32.mxu0 0.0
    %3346 = vmatmul.mubr.f32.gmra.mxu0 %v3279
    %v3347 = vpop.f32.mrf.mxu0
    %v3348 = vadd.f32 0.0, %v3347
    %v3349 = vpop.f32.mrf.mxu0
    %3350 = vdwg.mxu0
    %v3351 = vpack.c.bf16 %v3196, %v3196
    %v3352 = vpack.c.bf16 %v3348, %v3348
    %3353 = vmatprep.subr.bf16.mxu0 0
    %3354 = vmatpush1.bf16.msra.mxu0 %v2290
    %3355 = vmatprep.subr.bf16.mxu0 0
    %3356 = vmatpush1.bf16.msra.mxu0 %v2289
    %3357 = vmatprep.subr.bf16.mxu0 0
    %3358 = vmatpush1.bf16.msra.mxu0 %v2288
    %3359 = vmatprep.subr.bf16.mxu0 0
    %3360 = vmatpush1.bf16.msra.mxu0 %v2287
    %3361 = vmatprep.subr.bf16.mxu0 0
    %3362 = vmatpush1.bf16.msra.mxu0 %v2286
    %3363 = vmatprep.subr.bf16.mxu0 0
    %3364 = vmatpush1.bf16.msra.mxu0 %v2285
    %3365 = vmatprep.subr.bf16.mxu0 0
    %3366 = vmatpush1.bf16.msra.mxu0 %v2284
    %3367 = vmatprep.subr.bf16.mxu0 0
    %3368 = vmatpush1.bf16.msra.mxu0 %v2283
    %3369 = vmatprep.subr.bf16.mxu0 0
    %3370 = vmatpush2.bf16.msra.mxu0 %v2298
    %3371 = vmatprep.subr.bf16.mxu0 0
    %3372 = vmatpush2.bf16.msra.mxu0 %v2297
    %3373 = vmatprep.subr.bf16.mxu0 0
    %3374 = vmatpush2.bf16.msra.mxu0 %v2296
    %3375 = vmatprep.subr.bf16.mxu0 0
    %3376 = vmatpush2.bf16.msra.mxu0 %v2295
    %3377 = vmatprep.subr.bf16.mxu0 0
    %3378 = vmatpush2.bf16.msra.mxu0 %v2294
    %3379 = vmatprep.subr.bf16.mxu0 0
    %3380 = vmatpush2.bf16.msra.mxu0 %v2293
    %3381 = vmatprep.subr.bf16.mxu0 0
    %3382 = vmatpush2.bf16.msra.mxu0 %v2292
    %3383 = vmatprep.subr.bf16.mxu0 0
    %3384 = vmatpush2.bf16.msra.mxu0 %v2291
    %3385 = vmatprep.mubr.bf16.mxu0 %v3352
    %3386 = vmatmul.mubr.bf16.gmra.mxu0 %v3351
    %v3387 = vpop.f32.mrf.mxu0
    %v3388 = vadd.f32 %v1568, %v3387
    %v3389 = vpop.f32.mrf.mxu0
    %v3390 = vpop.f32.mrf.mxu0
    %v3391 = vpop.f32.mrf.mxu0
    %3392 = vdwg.mxu0
    %v3393 = vtanh.pop %v3388
    %v3394 = vpack.c.bf16 %v3393, %v3393
    %3395 = vmatprep.subr.bf16.mxu0 %v2420
    %3396 = vmatpush1.bf16.msra.mxu0 %v2419
    %3397 = vmatprep.subr.bf16.mxu0 %v2418
    %3398 = vmatpush1.bf16.msra.mxu0 %v2417
    %3399 = vmatprep.subr.bf16.mxu0 %v2416
    %3400 = vmatpush1.bf16.msra.mxu0 %v2415
    %3401 = vmatprep.subr.bf16.mxu0 %v2414
    %3402 = vmatpush1.bf16.msra.mxu0 %v2413
    %3403 = vmatprep.subr.bf16.mxu0 %v2412
    %3404 = vmatpush1.bf16.msra.mxu0 %v2411
    %3405 = vmatprep.subr.bf16.mxu0 %v2410
    %3406 = vmatpush1.bf16.msra.mxu0 %v2409
    %3407 = vmatprep.subr.bf16.mxu0 %v2408
    %3408 = vmatpush1.bf16.msra.mxu0 %v2407
    %3409 = vmatprep.subr.bf16.mxu0 %v2406
    %3410 = vmatpush1.bf16.msra.mxu0 %v2405
    %3411 = vmatprep.subr.bf16.mxu0 0
    %3412 = vmatpush2.bf16.msra.mxu0 0
    %3413 = vmatprep.subr.bf16.mxu0 0
    %3414 = vmatpush2.bf16.msra.mxu0 0
    %3415 = vmatprep.subr.bf16.mxu0 0
    %3416 = vmatpush2.bf16.msra.mxu0 0
    %3417 = vmatprep.subr.bf16.mxu0 0
    %3418 = vmatpush2.bf16.msra.mxu0 0
    %3419 = vmatprep.subr.bf16.mxu0 0
    %3420 = vmatpush2.bf16.msra.mxu0 0
    %3421 = vmatprep.subr.bf16.mxu0 0
    %3422 = vmatpush2.bf16.msra.mxu0 0
    %3423 = vmatprep.subr.bf16.mxu0 0
    %3424 = vmatpush2.bf16.msra.mxu0 0
    %3425 = vmatprep.subr.bf16.mxu0 0
    %3426 = vmatpush2.bf16.msra.mxu0 0
    %3427 = vmatprep.mubr.bf16.mxu0 0
    %3428 = vmatmul.mubr.bf16.gmra.mxu0 %v3394
    %v3429 = vpop.f32.mrf.mxu0
    %v3430 = vadd.f32 %v2441, %v3429
    %v3431 = vpop.f32.mrf.mxu0
    %v3432 = vadd.f32 %v2445, %v3431
    %v3433 = vpop.f32.mrf.mxu0
    %v3434 = vpop.f32.mrf.mxu0
    %3435 = vdwg.mxu0
    %v3436 = vsel %vm2489, %v3430, -inf
    %v3437 = vsel %vm2489, %v3432, -inf
    %v3438 = vmax.f32 %v3436, %v3437
    %3439 = vmax.xlane.f32.xlu0 %v3438
    %v3440 = vpop.xlane.xlu0 %3439
    %vm3441 = vcmp.ge.f32.partialorder %v3430, %v3440
    %vm3442 = vcmp.ge.f32.partialorder %v3432, %v3440
    %v3443 = vsel %vm3441, %v2496, 256
    %v3444 = vsel %vm3442, %v2497, 256
    %v3445 = vsel %vm2489, %v3443, 2147483647
    %v3446 = vsel %vm2489, %v3444, 2147483647
    %vm3447 = vcmp.lt.s32.totalorder %v3445, %v3446
    %v3448 = vsel %vm3447, %v3445, %v3446
    %v3449 = vand.u32 %v3448, 65535
    %v3450 = vshra.s32 %v3448, 16
    %v3451 = vcvt.s32.f32 %v3449
    %v3452 = vcvt.s32.f32 %v3450
    %3453 = vmin.xlane.f32.xlu0 %v3452
    %v3454 = vpop.xlane.xlu0 %3453
    %vm3455 = vcmp.eq.f32.partialorder %v3452, %v3454
    %v3456 = vsel %vm3455, %v3451, inf
    %3457 = vmin.xlane.f32.xlu0 %v3456
    %v3458 = vpop.xlane.xlu0 %3457
    %v3459 = vcvt.f32.s32 %v3458
    %v3460 = vcvt.f32.s32 %v3454
    %v3461 = vshll.u32 %v3460, 16
    %v3462 = vadd.s32 %v3461, %v3459
    %v3463 = vsub.f32 %v3430, %v3440
    %v3464 = vsub.f32 %v3432, %v3440
    %v3465 = vmul.f32 %v3463, 1.442695
    %v3466 = vpow.pop %v3465
    %v3467 = vmul.f32 %v3464, 1.442695
    %v3468 = vpow.pop %v3467
    %v3469 = vsel %vm2489, %v3466, 0.0
    %v3470 = vsel %vm2489, %v3468, 0.0
    %v3471 = vadd.f32 %v3469, %v3470
    %3472 = vadd.xlane.f32.xlu0 %v3471
    %v3473 = vpop.xlane.xlu0 %3472
    %v3474 = vrcp.pop %v3473
    %v3475 = vmul.f32 1.0, %v3474
    %3476 = vst.msk [vmem:[#allocation4] sm:$0x1] %vm2533, %v3462
    %v3477 = vld [vmem:[#allocation4] sm:$0x1]
    %s3478 = vtos %v3477
    %v3479 = vstv %s3478
    %3480 = vst [vmem:[%s14 + $0x2] sm:$0x1] %v3479
    %3481 = vst [vmem:[%s15 + $0x2] sm:$0x1] %v3475
    %s3482 = scalar_lea.vmem [#allocation5], %s3478
    %v3483 = vld [vmem:[%s3482] sm:$0x1]
    %v3484 = vpack.c.bf16 %v3483, %v3483
    %3485 = vmatprep.subr.bf16.mxu0 %v1691
    %3486 = vmatpush1.bf16.msra.mxu0 %v1690
    %3487 = vmatprep.subr.bf16.mxu0 %v1688
    %3488 = vmatpush1.bf16.msra.mxu0 %v1687
    %3489 = vmatprep.subr.bf16.mxu0 %v1685
    %3490 = vmatpush1.bf16.msra.mxu0 %v1684
    %3491 = vmatprep.subr.bf16.mxu0 %v1682
    %3492 = vmatpush1.bf16.msra.mxu0 %v1681
    %3493 = vmatprep.subr.bf16.mxu0 %v1679
    %3494 = vmatpush1.bf16.msra.mxu0 %v1678
    %3495 = vmatprep.subr.bf16.mxu0 %v1676
    %3496 = vmatpush1.bf16.msra.mxu0 %v1675
    %3497 = vmatprep.subr.bf16.mxu0 %v1673
    %3498 = vmatpush1.bf16.msra.mxu0 %v1672
    %3499 = vmatprep.subr.bf16.mxu0 %v1670
    %3500 = vmatpush1.bf16.msra.mxu0 %v1669
    %3501 = vmatprep.subr.bf16.mxu0 0
    %3502 = vmatpush2.bf16.msra.mxu0 0
    %3503 = vmatprep.subr.bf16.mxu0 0
    %3504 = vmatpush2.bf16.msra.mxu0 0
    %3505 = vmatprep.subr.bf16.mxu0 0
    %3506 = vmatpush2.bf16.msra.mxu0 0
    %3507 = vmatprep.subr.bf16.mxu0 0
    %3508 = vmatpush2.bf16.msra.mxu0 0
    %3509 = vmatprep.subr.bf16.mxu0 0
    %3510 = vmatpush2.bf16.msra.mxu0 0
    %3511 = vmatprep.subr.bf16.mxu0 0
    %3512 = vmatpush2.bf16.msra.mxu0 0
    %3513 = vmatprep.subr.bf16.mxu0 0
    %3514 = vmatpush2.bf16.msra.mxu0 0
    %3515 = vmatprep.subr.bf16.mxu0 0
    %3516 = vmatpush2.bf16.msra.mxu0 0
    %3517 = vmatprep.mubr.bf16.mxu0 0
    %3518 = vmatmul.mubr.bf16.gmra.mxu0 %v3484
    %v3519 = vpop.f32.mrf.mxu0
    %v3520 = vadd.f32 %v1721, %v3519
    %v3521 = vpop.f32.mrf.mxu0
    %v3522 = vadd.f32 %v1725, %v3521
    %v3523 = vpop.f32.mrf.mxu0
    %v3524 = vpop.f32.mrf.mxu0
    %3525 = vdwg.mxu0
    %3526 = vmatprep.subr.bf16.mxu0 0
    %3527 = vmatpush1.bf16.msra.mxu0 %v1692
    %3528 = vmatprep.subr.bf16.mxu0 0
    %3529 = vmatpush1.bf16.msra.mxu0 %v1689
    %3530 = vmatprep.subr.bf16.mxu0 0
    %3531 = vmatpush1.bf16.msra.mxu0 %v1686
    %3532 = vmatprep.subr.bf16.mxu0 0
    %3533 = vmatpush1.bf16.msra.mxu0 %v1683
    %3534 = vmatprep.subr.bf16.mxu0 0
    %3535 = vmatpush1.bf16.msra.mxu0 %v1680
    %3536 = vmatprep.subr.bf16.mxu0 0
    %3537 = vmatpush1.bf16.msra.mxu0 %v1677
    %3538 = vmatprep.subr.bf16.mxu0 0
    %3539 = vmatpush1.bf16.msra.mxu0 %v1674
    %3540 = vmatprep.subr.bf16.mxu0 0
    %3541 = vmatpush1.bf16.msra.mxu0 %v1671
    %3542 = vmatprep.subr.bf16.mxu0 0
    %3543 = vmatpush2.bf16.msra.mxu0 0
    %3544 = vmatprep.subr.bf16.mxu0 0
    %3545 = vmatpush2.bf16.msra.mxu0 0
    %3546 = vmatprep.subr.bf16.mxu0 0
    %3547 = vmatpush2.bf16.msra.mxu0 0
    %3548 = vmatprep.subr.bf16.mxu0 0
    %3549 = vmatpush2.bf16.msra.mxu0 0
    %3550 = vmatprep.subr.bf16.mxu0 0
    %3551 = vmatpush2.bf16.msra.mxu0 0
    %3552 = vmatprep.subr.bf16.mxu0 0
    %3553 = vmatpush2.bf16.msra.mxu0 0
    %3554 = vmatprep.subr.bf16.mxu0 0
    %3555 = vmatpush2.bf16.msra.mxu0 0
    %3556 = vmatprep.subr.bf16.mxu0 0
    %3557 = vmatpush2.bf16.msra.mxu0 0
    %3558 = vmatprep.mubr.bf16.mxu0 0
    %3559 = vmatmul.mubr.bf16.gmra.mxu0 %v3484
    %v3560 = vpop.f32.mrf.mxu0
    %v3561 = vadd.f32 %v1729, %v3560
    %v3562 = vpop.f32.mrf.mxu0
    %v3563 = vpop.f32.mrf.mxu0
    %v3564 = vpop.f32.mrf.mxu0
    %3565 = vdwg.mxu0
    %3566 = vmatprep.subr.bf16.mxu0 %v1917
    %3567 = vmatpush1.bf16.msra.mxu0 %v1916
    %3568 = vmatprep.subr.bf16.mxu0 %v1914
    %3569 = vmatpush1.bf16.msra.mxu0 %v1913
    %3570 = vmatprep.subr.bf16.mxu0 %v1911
    %3571 = vmatpush1.bf16.msra.mxu0 %v1910
    %3572 = vmatprep.subr.bf16.mxu0 %v1908
    %3573 = vmatpush1.bf16.msra.mxu0 %v1907
    %3574 = vmatprep.subr.bf16.mxu0 %v1905
    %3575 = vmatpush1.bf16.msra.mxu0 %v1904
    %3576 = vmatprep.subr.bf16.mxu0 %v1902
    %3577 = vmatpush1.bf16.msra.mxu0 %v1901
    %3578 = vmatprep.subr.bf16.mxu0 %v1899
    %3579 = vmatpush1.bf16.msra.mxu0 %v1898
    %3580 = vmatprep.subr.bf16.mxu0 %v1896
    %3581 = vmatpush1.bf16.msra.mxu0 %v1895
    %3582 = vmatprep.subr.bf16.mxu0 0
    %3583 = vmatpush2.bf16.msra.mxu0 0
    %3584 = vmatprep.subr.bf16.mxu0 0
    %3585 = vmatpush2.bf16.msra.mxu0 0
    %3586 = vmatprep.subr.bf16.mxu0 0
    %3587 = vmatpush2.bf16.msra.mxu0 0
    %3588 = vmatprep.subr.bf16.mxu0 0
    %3589 = vmatpush2.bf16.msra.mxu0 0
    %3590 = vmatprep.subr.bf16.mxu0 0
    %3591 = vmatpush2.bf16.msra.mxu0 0
    %3592 = vmatprep.subr.bf16.mxu0 0
    %3593 = vmatpush2.bf16.msra.mxu0 0
    %3594 = vmatprep.subr.bf16.mxu0 0
    %3595 = vmatpush2.bf16.msra.mxu0 0
    %3596 = vmatprep.subr.bf16.mxu0 0
    %3597 = vmatpush2.bf16.msra.mxu0 0
    %3598 = vmatprep.mubr.bf16.mxu0 0
    %3599 = vmatmul.mubr.bf16.gmra.mxu0 %v3351
    %v3600 = vpop.f32.mrf.mxu0
    %v3601 = vadd.f32 %v1947, %v3600
    %v3602 = vpop.f32.mrf.mxu0
    %v3603 = vadd.f32 %v1951, %v3602
    %v3604 = vpop.f32.mrf.mxu0
    %v3605 = vpop.f32.mrf.mxu0
    %3606 = vdwg.mxu0
    %3607 = vmatprep.subr.bf16.mxu0 0
    %3608 = vmatpush1.bf16.msra.mxu0 %v1918
    %3609 = vmatprep.subr.bf16.mxu0 0
    %3610 = vmatpush1.bf16.msra.mxu0 %v1915
    %3611 = vmatprep.subr.bf16.mxu0 0
    %3612 = vmatpush1.bf16.msra.mxu0 %v1912
    %3613 = vmatprep.subr.bf16.mxu0 0
    %3614 = vmatpush1.bf16.msra.mxu0 %v1909
    %3615 = vmatprep.subr.bf16.mxu0 0
    %3616 = vmatpush1.bf16.msra.mxu0 %v1906
    %3617 = vmatprep.subr.bf16.mxu0 0
    %3618 = vmatpush1.bf16.msra.mxu0 %v1903
    %3619 = vmatprep.subr.bf16.mxu0 0
    %3620 = vmatpush1.bf16.msra.mxu0 %v1900
    %3621 = vmatprep.subr.bf16.mxu0 0
    %3622 = vmatpush1.bf16.msra.mxu0 %v1897
    %3623 = vmatprep.subr.bf16.mxu0 0
    %3624 = vmatpush2.bf16.msra.mxu0 0
    %3625 = vmatprep.subr.bf16.mxu0 0
    %3626 = vmatpush2.bf16.msra.mxu0 0
    %3627 = vmatprep.subr.bf16.mxu0 0
    %3628 = vmatpush2.bf16.msra.mxu0 0
    %3629 = vmatprep.subr.bf16.mxu0 0
    %3630 = vmatpush2.bf16.msra.mxu0 0
    %3631 = vmatprep.subr.bf16.mxu0 0
    %3632 = vmatpush2.bf16.msra.mxu0 0
    %3633 = vmatprep.subr.bf16.mxu0 0
    %3634 = vmatpush2.bf16.msra.mxu0 0
    %3635 = vmatprep.subr.bf16.mxu0 0
    %3636 = vmatpush2.bf16.msra.mxu0 0
    %3637 = vmatprep.subr.bf16.mxu0 0
    %3638 = vmatpush2.bf16.msra.mxu0 0
    %3639 = vmatprep.mubr.bf16.mxu0 0
    %3640 = vmatmul.mubr.bf16.gmra.mxu0 %v3351
    %v3641 = vpop.f32.mrf.mxu0
    %v3642 = vadd.f32 %v1955, %v3641
    %v3643 = vpop.f32.mrf.mxu0
    %v3644 = vpop.f32.mrf.mxu0
    %v3645 = vpop.f32.mrf.mxu0
    %3646 = vdwg.mxu0
    %v3647 = vadd.f32 %v3520, %v3601
    %v3648 = vxor.u32 %v3647, 2147483648
    %v3649 = vmul.f32 %v3648, 1.442695
    %v3650 = vpow.pop %v3649
    %v3651 = vadd.f32 %v3650, 1.0
    %v3652 = vrcp.pop %v3651
    %v3653 = vmul.f32 1.0, %v3652
    %v3654 = vadd.f32 %v3522, %v3603
    %v3655 = vxor.u32 %v3654, 2147483648
    %v3656 = vmul.f32 %v3655, 1.442695
    %v3657 = vpow.pop %v3656
    %v3658 = vadd.f32 %v3657, 1.0
    %v3659 = vrcp.pop %v3658
    %v3660 = vmul.f32 1.0, %v3659
    %v3661 = vmul.f32 %v3653, %v3642
    %v3662 = vadd.f32 %v3561, %v3661
    %v3663 = vtanh.pop %v3662
    %v3664 = vsub.f32 1.0, %v3660
    %v3665 = vmul.f32 %v3664, %v3663
    %v3666 = vmul.f32 %v3660, %v3196
    %v3667 = vadd.f32 %v3665, %v3666
    %3668 = vmatprep.subr.mxu0 0.0
    %3669 = vmatpush1.xpose.msra.mxu0 0.0
    %3670 = vmatprep.subr.mxu0 0.0
    %3671 = vmatpush1.xpose.msra.mxu0 0.0
    %3672 = vmatprep.subr.mxu0 0.0
    %3673 = vmatpush1.xpose.msra.mxu0 0.0
    %3674 = vmatprep.subr.mxu0 0.0
    %3675 = vmatpush1.xpose.msra.mxu0 0.0
    %3676 = vmatprep.subr.mxu0 0.0
    %3677 = vmatpush1.xpose.msra.mxu0 0.0
    %3678 = vmatprep.subr.mxu0 0.0
    %3679 = vmatpush1.xpose.msra.mxu0 0.0
    %3680 = vmatprep.subr.mxu0 0.0
    %3681 = vmatpush1.xpose.msra.mxu0 0.0
    %3682 = vmatprep.subr.mxu0 0.0
    %3683 = vmatpush1.xpose.msra.mxu0 0.0
    %3684 = vmatprep.subr.mxu0 0.0
    %3685 = vmatpush1.xpose.msra.mxu0 0.0
    %3686 = vmatprep.subr.mxu0 0.0
    %3687 = vmatpush1.xpose.msra.mxu0 0.0
    %3688 = vmatprep.subr.mxu0 0.0
    %3689 = vmatpush1.xpose.msra.mxu0 0.0
    %3690 = vmatprep.subr.mxu0 0.0
    %3691 = vmatpush1.xpose.msra.mxu0 0.0
    %3692 = vmatprep.subr.mxu0 0.0
    %3693 = vmatpush1.xpose.msra.mxu0 0.0
    %3694 = vmatprep.subr.mxu0 0.0
    %3695 = vmatpush1.xpose.msra.mxu0 0.0
    %3696 = vmatprep.subr.mxu0 0.0
    %3697 = vmatpush1.xpose.msra.mxu0 0.0
    %3698 = vmatprep.subr.mxu0 0.0
    %3699 = vmatpush1.xpose.msra.mxu0 %v1586
    %3700 = vmatprep.subr.mxu0 0.0
    %3701 = vmatpush2.xpose.msra.mxu0 0.0
    %3702 = vmatprep.subr.mxu0 0.0
    %3703 = vmatpush2.xpose.msra.mxu0 0.0
    %3704 = vmatprep.subr.mxu0 0.0
    %3705 = vmatpush2.xpose.msra.mxu0 0.0
    %3706 = vmatprep.subr.mxu0 0.0
    %3707 = vmatpush2.xpose.msra.mxu0 0.0
    %3708 = vmatprep.subr.mxu0 0.0
    %3709 = vmatpush2.xpose.msra.mxu0 0.0
    %3710 = vmatprep.subr.mxu0 0.0
    %3711 = vmatpush2.xpose.msra.mxu0 0.0
    %3712 = vmatprep.subr.mxu0 0.0
    %3713 = vmatpush2.xpose.msra.mxu0 0.0
    %3714 = vmatprep.subr.mxu0 0.0
    %3715 = vmatpush2.xpose.msra.mxu0 0.0
    %3716 = vmatprep.subr.mxu0 0.0
    %3717 = vmatpush2.xpose.msra.mxu0 0.0
    %3718 = vmatprep.subr.mxu0 0.0
    %3719 = vmatpush2.xpose.msra.mxu0 0.0
    %3720 = vmatprep.subr.mxu0 0.0
    %3721 = vmatpush2.xpose.msra.mxu0 0.0
    %3722 = vmatprep.subr.mxu0 0.0
    %3723 = vmatpush2.xpose.msra.mxu0 0.0
    %3724 = vmatprep.subr.mxu0 0.0
    %3725 = vmatpush2.xpose.msra.mxu0 0.0
    %3726 = vmatprep.subr.mxu0 0.0
    %3727 = vmatpush2.xpose.msra.mxu0 0.0
    %3728 = vmatprep.subr.mxu0 0.0
    %3729 = vmatpush2.xpose.msra.mxu0 0.0
    %3730 = vmatprep.subr.mxu0 0.0
    %3731 = vmatpush2.xpose.msra.mxu0 0.0
    %3732 = vmatprep.mubr.f32.mxu0 0.0
    %3733 = vmatmul.mubr.f32.gmra.mxu0 %v3667
    %v3734 = vpop.f32.mrf.mxu0
    %v3735 = vadd.f32 0.0, %v3734
    %v3736 = vpop.f32.mrf.mxu0
    %3737 = vdwg.mxu0
    %v3738 = vsel %vm2131, %v3735, -inf
    %3739 = vmax.xlane.f32.xlu0 %v3738
    %v3740 = vpop.xlane.xlu0 %3739
    %v3741 = vsub.f32 %v3735, %v3740
    %v3742 = vmul.f32 %v3741, 1.442695
    %v3743 = vpow.pop %v3742
    %v3744 = vsel %vm2131, %v3743, 0.0
    %3745 = vadd.xlane.f32.xlu0 %v3744
    %v3746 = vpop.xlane.xlu0 %3745
    %v3747 = vrcp.pop %v3746
    %v3748 = vmul.f32 %v3743, %v3747
    %v3750 = vsel %vm2143, %v3748, 0
    %3752 = vmatprep.subr.mxu0 0.0
    %3753 = vmatpush1.msra.mxu0 0.0
    %3754 = vmatprep.subr.mxu0 0.0
    %3755 = vmatpush1.msra.mxu0 0.0
    %3756 = vmatprep.subr.mxu0 0.0
    %3757 = vmatpush1.msra.mxu0 0.0
    %3758 = vmatprep.subr.mxu0 0.0
    %3759 = vmatpush1.msra.mxu0 0.0
    %3760 = vmatprep.subr.mxu0 0.0
    %3761 = vmatpush1.msra.mxu0 0.0
    %3762 = vmatprep.subr.mxu0 0.0
    %3763 = vmatpush1.msra.mxu0 0.0
    %3764 = vmatprep.subr.mxu0 0.0
    %3765 = vmatpush1.msra.mxu0 0.0
    %3766 = vmatprep.subr.mxu0 0.0
    %3767 = vmatpush1.msra.mxu0 0.0
    %3768 = vmatprep.subr.mxu0 0.0
    %3769 = vmatpush1.msra.mxu0 0.0
    %3770 = vmatprep.subr.mxu0 0.0
    %3771 = vmatpush1.msra.mxu0 0.0
    %3772 = vmatprep.subr.mxu0 0.0
    %3773 = vmatpush1.msra.mxu0 0.0
    %3774 = vmatprep.subr.mxu0 0.0
    %3775 = vmatpush1.msra.mxu0 0.0
    %3776 = vmatprep.subr.mxu0 0.0
    %3777 = vmatpush1.msra.mxu0 0.0
    %3778 = vmatprep.subr.mxu0 0.0
    %3779 = vmatpush1.msra.mxu0 0.0
    %3780 = vmatprep.subr.mxu0 0.0
    %3781 = vmatpush1.msra.mxu0 0.0
    %3782 = vmatprep.subr.mxu0 0.0
    %3783 = vmatpush1.msra.mxu0 %v1586
    %3784 = vmatprep.subr.mxu0 0.0
    %3785 = vmatpush2.msra.mxu0 0.0
    %3786 = vmatprep.subr.mxu0 0.0
    %3787 = vmatpush2.msra.mxu0 0.0
    %3788 = vmatprep.subr.mxu0 0.0
    %3789 = vmatpush2.msra.mxu0 0.0
    %3790 = vmatprep.subr.mxu0 0.0
    %3791 = vmatpush2.msra.mxu0 0.0
    %3792 = vmatprep.subr.mxu0 0.0
    %3793 = vmatpush2.msra.mxu0 0.0
    %3794 = vmatprep.subr.mxu0 0.0
    %3795 = vmatpush2.msra.mxu0 0.0
    %3796 = vmatprep.subr.mxu0 0.0
    %3797 = vmatpush2.msra.mxu0 0.0
    %3798 = vmatprep.subr.mxu0 0.0
    %3799 = vmatpush2.msra.mxu0 0.0
    %3800 = vmatprep.subr.mxu0 0.0
    %3801 = vmatpush2.msra.mxu0 0.0
    %3802 = vmatprep.subr.mxu0 0.0
    %3803 = vmatpush2.msra.mxu0 0.0
    %3804 = vmatprep.subr.mxu0 0.0
    %3805 = vmatpush2.msra.mxu0 0.0
    %3806 = vmatprep.subr.mxu0 0.0
    %3807 = vmatpush2.msra.mxu0 0.0
    %3808 = vmatprep.subr.mxu0 0.0
    %3809 = vmatpush2.msra.mxu0 0.0
    %3810 = vmatprep.subr.mxu0 0.0
    %3811 = vmatpush2.msra.mxu0 0.0
    %3812 = vmatprep.subr.mxu0 0.0
    %3813 = vmatpush2.msra.mxu0 0.0
    %3814 = vmatprep.subr.mxu0 0.0
    %3815 = vmatpush2.msra.mxu0 0.0
    %3816 = vmatprep.mubr.f32.mxu0 0.0
    %3817 = vmatmul.mubr.f32.gmra.mxu0 %v3750
    %v3818 = vpop.f32.mrf.mxu0
    %v3819 = vadd.f32 0.0, %v3818
    %v3820 = vpop.f32.mrf.mxu0
    %3821 = vdwg.mxu0
    %v3822 = vpack.c.bf16 %v3667, %v3667
    %v3823 = vpack.c.bf16 %v3819, %v3819
    %3824 = vmatprep.subr.bf16.mxu0 0
    %3825 = vmatpush1.bf16.msra.mxu0 %v2290
    %3826 = vmatprep.subr.bf16.mxu0 0
    %3827 = vmatpush1.bf16.msra.mxu0 %v2289
    %3828 = vmatprep.subr.bf16.mxu0 0
    %3829 = vmatpush1.bf16.msra.mxu0 %v2288
    %3830 = vmatprep.subr.bf16.mxu0 0
    %3831 = vmatpush1.bf16.msra.mxu0 %v2287
    %3832 = vmatprep.subr.bf16.mxu0 0
    %3833 = vmatpush1.bf16.msra.mxu0 %v2286
    %3834 = vmatprep.subr.bf16.mxu0 0
    %3835 = vmatpush1.bf16.msra.mxu0 %v2285
    %3836 = vmatprep.subr.bf16.mxu0 0
    %3837 = vmatpush1.bf16.msra.mxu0 %v2284
    %3838 = vmatprep.subr.bf16.mxu0 0
    %3839 = vmatpush1.bf16.msra.mxu0 %v2283
    %3840 = vmatprep.subr.bf16.mxu0 0
    %3841 = vmatpush2.bf16.msra.mxu0 %v2298
    %3842 = vmatprep.subr.bf16.mxu0 0
    %3843 = vmatpush2.bf16.msra.mxu0 %v2297
    %3844 = vmatprep.subr.bf16.mxu0 0
    %3845 = vmatpush2.bf16.msra.mxu0 %v2296
    %3846 = vmatprep.subr.bf16.mxu0 0
    %3847 = vmatpush2.bf16.msra.mxu0 %v2295
    %3848 = vmatprep.subr.bf16.mxu0 0
    %3849 = vmatpush2.bf16.msra.mxu0 %v2294
    %3850 = vmatprep.subr.bf16.mxu0 0
    %3851 = vmatpush2.bf16.msra.mxu0 %v2293
    %3852 = vmatprep.subr.bf16.mxu0 0
    %3853 = vmatpush2.bf16.msra.mxu0 %v2292
    %3854 = vmatprep.subr.bf16.mxu0 0
    %3855 = vmatpush2.bf16.msra.mxu0 %v2291
    %3856 = vmatprep.mubr.bf16.mxu0 %v3823
    %3857 = vmatmul.mubr.bf16.gmra.mxu0 %v3822
    %v3858 = vpop.f32.mrf.mxu0
    %v3859 = vadd.f32 %v1568, %v3858
    %v3860 = vpop.f32.mrf.mxu0
    %v3861 = vpop.f32.mrf.mxu0
    %v3862 = vpop.f32.mrf.mxu0
    %3863 = vdwg.mxu0
    %v3864 = vtanh.pop %v3859
    %v3865 = vpack.c.bf16 %v3864, %v3864
    %3866 = vmatprep.subr.bf16.mxu0 %v2420
    %3867 = vmatpush1.bf16.msra.mxu0 %v2419
    %3868 = vmatprep.subr.bf16.mxu0 %v2418
    %3869 = vmatpush1.bf16.msra.mxu0 %v2417
    %3870 = vmatprep.subr.bf16.mxu0 %v2416
    %3871 = vmatpush1.bf16.msra.mxu0 %v2415
    %3872 = vmatprep.subr.bf16.mxu0 %v2414
    %3873 = vmatpush1.bf16.msra.mxu0 %v2413
    %3874 = vmatprep.subr.bf16.mxu0 %v2412
    %3875 = vmatpush1.bf16.msra.mxu0 %v2411
    %3876 = vmatprep.subr.bf16.mxu0 %v2410
    %3877 = vmatpush1.bf16.msra.mxu0 %v2409
    %3878 = vmatprep.subr.bf16.mxu0 %v2408
    %3879 = vmatpush1.bf16.msra.mxu0 %v2407
    %3880 = vmatprep.subr.bf16.mxu0 %v2406
    %3881 = vmatpush1.bf16.msra.mxu0 %v2405
    %3882 = vmatprep.subr.bf16.mxu0 0
    %3883 = vmatpush2.bf16.msra.mxu0 0
    %3884 = vmatprep.subr.bf16.mxu0 0
    %3885 = vmatpush2.bf16.msra.mxu0 0
    %3886 = vmatprep.subr.bf16.mxu0 0
    %3887 = vmatpush2.bf16.msra.mxu0 0
    %3888 = vmatprep.subr.bf16.mxu0 0
    %3889 = vmatpush2.bf16.msra.mxu0 0
    %3890 = vmatprep.subr.bf16.mxu0 0
    %3891 = vmatpush2.bf16.msra.mxu0 0
    %3892 = vmatprep.subr.bf16.mxu0 0
    %3893 = vmatpush2.bf16.msra.mxu0 0
    %3894 = vmatprep.subr.bf16.mxu0 0
    %3895 = vmatpush2.bf16.msra.mxu0 0
    %3896 = vmatprep.subr.bf16.mxu0 0
    %3897 = vmatpush2.bf16.msra.mxu0 0
    %3898 = vmatprep.mubr.bf16.mxu0 0
    %3899 = vmatmul.mubr.bf16.gmra.mxu0 %v3865
    %v3900 = vpop.f32.mrf.mxu0
    %v3901 = vadd.f32 %v2441, %v3900
    %v3902 = vpop.f32.mrf.mxu0
    %v3903 = vadd.f32 %v2445, %v3902
    %v3904 = vpop.f32.mrf.mxu0
    %v3905 = vpop.f32.mrf.mxu0
    %3906 = vdwg.mxu0
    %v3907 = vsel %vm2489, %v3901, -inf
    %v3908 = vsel %vm2489, %v3903, -inf
    %v3909 = vmax.f32 %v3907, %v3908
    %3910 = vmax.xlane.f32.xlu0 %v3909
    %v3911 = vpop.xlane.xlu0 %3910
    %vm3912 = vcmp.ge.f32.partialorder %v3901, %v3911
    %vm3913 = vcmp.ge.f32.partialorder %v3903, %v3911
    %v3914 = vsel %vm3912, %v2496, 256
    %v3915 = vsel %vm3913, %v2497, 256
    %v3916 = vsel %vm2489, %v3914, 2147483647
    %v3917 = vsel %vm2489, %v3915, 2147483647
    %vm3918 = vcmp.lt.s32.totalorder %v3916, %v3917
    %v3919 = vsel %vm3918, %v3916, %v3917
    %v3920 = vand.u32 %v3919, 65535
    %v3921 = vshra.s32 %v3919, 16
    %v3922 = vcvt.s32.f32 %v3920
    %v3923 = vcvt.s32.f32 %v3921
    %3924 = vmin.xlane.f32.xlu0 %v3923
    %v3925 = vpop.xlane.xlu0 %3924
    %vm3926 = vcmp.eq.f32.partialorder %v3923, %v3925
    %v3927 = vsel %vm3926, %v3922, inf
    %3928 = vmin.xlane.f32.xlu0 %v3927
    %v3929 = vpop.xlane.xlu0 %3928
    %v3930 = vcvt.f32.s32 %v3929
    %v3931 = vcvt.f32.s32 %v3925
    %v3932 = vshll.u32 %v3931, 16
    %v3933 = vadd.s32 %v3932, %v3930
    %v3934 = vsub.f32 %v3901, %v3911
    %v3935 = vsub.f32 %v3903, %v3911
    %v3936 = vmul.f32 %v3934, 1.442695
    %v3937 = vpow.pop %v3936
    %v3938 = vmul.f32 %v3935, 1.442695
    %v3939 = vpow.pop %v3938
    %v3940 = vsel %vm2489, %v3937, 0.0
    %v3941 = vsel %vm2489, %v3939, 0.0
    %v3942 = vadd.f32 %v3940, %v3941
    %3943 = vadd.xlane.f32.xlu0 %v3942
    %v3944 = vpop.xlane.xlu0 %3943
    %v3945 = vrcp.pop %v3944
    %v3946 = vmul.f32 1.0, %v3945
    %3947 = vst.msk [vmem:[#allocation4] sm:$0x1] %vm2533, %v3933
    %v3948 = vld [vmem:[#allocation4] sm:$0x1]
    %s3949 = vtos %v3948
    %v3950 = vstv %s3949
    %3951 = vst [vmem:[%s14 + $0x3] sm:$0x1] %v3950
    %3952 = vst [vmem:[%s15 + $0x3] sm:$0x1] %v3946
    %s3953 = scalar_lea.vmem [#allocation5], %s3949
    %v3954 = vld [vmem:[%s3953] sm:$0x1]
    %v3955 = vpack.c.bf16 %v3954, %v3954
    %3956 = vmatprep.subr.bf16.mxu0 %v1691
    %3957 = vmatpush1.bf16.msra.mxu0 %v1690
    %3958 = vmatprep.subr.bf16.mxu0 %v1688
    %3959 = vmatpush1.bf16.msra.mxu0 %v1687
    %3960 = vmatprep.subr.bf16.mxu0 %v1685
    %3961 = vmatpush1.bf16.msra.mxu0 %v1684
    %3962 = vmatprep.subr.bf16.mxu0 %v1682
    %3963 = vmatpush1.bf16.msra.mxu0 %v1681
    %3964 = vmatprep.subr.bf16.mxu0 %v1679
    %3965 = vmatpush1.bf16.msra.mxu0 %v1678
    %3966 = vmatprep.subr.bf16.mxu0 %v1676
    %3967 = vmatpush1.bf16.msra.mxu0 %v1675
    %3968 = vmatprep.subr.bf16.mxu0 %v1673
    %3969 = vmatpush1.bf16.msra.mxu0 %v1672
    %3970 = vmatprep.subr.bf16.mxu0 %v1670
    %3971 = vmatpush1.bf16.msra.mxu0 %v1669
    %3972 = vmatprep.subr.bf16.mxu0 0
    %3973 = vmatpush2.bf16.msra.mxu0 0
    %3974 = vmatprep.subr.bf16.mxu0 0
    %3975 = vmatpush2.bf16.msra.mxu0 0
    %3976 = vmatprep.subr.bf16.mxu0 0
    %3977 = vmatpush2.bf16.msra.mxu0 0
    %3978 = vmatprep.subr.bf16.mxu0 0
    %3979 = vmatpush2.bf16.msra.mxu0 0
    %3980 = vmatprep.subr.bf16.mxu0 0
    %3981 = vmatpush2.bf16.msra.mxu0 0
    %3982 = vmatprep.subr.bf16.mxu0 0
    %3983 = vmatpush2.bf16.msra.mxu0 0
    %3984 = vmatprep.subr.bf16.mxu0 0
    %3985 = vmatpush2.bf16.msra.mxu0 0
    %3986 = vmatprep.subr.bf16.mxu0 0
    %3987 = vmatpush2.bf16.msra.mxu0 0
    %3988 = vmatprep.mubr.bf16.mxu0 0
    %3989 = vmatmul.mubr.bf16.gmra.mxu0 %v3955
    %v3990 = vpop.f32.mrf.mxu0
    %v3991 = vadd.f32 %v1721, %v3990
    %v3992 = vpop.f32.mrf.mxu0
    %v3993 = vadd.f32 %v1725, %v3992
    %v3994 = vpop.f32.mrf.mxu0
    %v3995 = vpop.f32.mrf.mxu0
    %3996 = vdwg.mxu0
    %3997 = vmatprep.subr.bf16.mxu0 0
    %3998 = vmatpush1.bf16.msra.mxu0 %v1692
    %3999 = vmatprep.subr.bf16.mxu0 0
    %4000 = vmatpush1.bf16.msra.mxu0 %v1689
    %4001 = vmatprep.subr.bf16.mxu0 0
    %4002 = vmatpush1.bf16.msra.mxu0 %v1686
    %4003 = vmatprep.subr.bf16.mxu0 0
    %4004 = vmatpush1.bf16.msra.mxu0 %v1683
    %4005 = vmatprep.subr.bf16.mxu0 0
    %4006 = vmatpush1.bf16.msra.mxu0 %v1680
    %4007 = vmatprep.subr.bf16.mxu0 0
    %4008 = vmatpush1.bf16.msra.mxu0 %v1677
    %4009 = vmatprep.subr.bf16.mxu0 0
    %4010 = vmatpush1.bf16.msra.mxu0 %v1674
    %4011 = vmatprep.subr.bf16.mxu0 0
    %4012 = vmatpush1.bf16.msra.mxu0 %v1671
    %4013 = vmatprep.subr.bf16.mxu0 0
    %4014 = vmatpush2.bf16.msra.mxu0 0
    %4015 = vmatprep.subr.bf16.mxu0 0
    %4016 = vmatpush2.bf16.msra.mxu0 0
    %4017 = vmatprep.subr.bf16.mxu0 0
    %4018 = vmatpush2.bf16.msra.mxu0 0
    %4019 = vmatprep.subr.bf16.mxu0 0
    %4020 = vmatpush2.bf16.msra.mxu0 0
    %4021 = vmatprep.subr.bf16.mxu0 0
    %4022 = vmatpush2.bf16.msra.mxu0 0
    %4023 = vmatprep.subr.bf16.mxu0 0
    %4024 = vmatpush2.bf16.msra.mxu0 0
    %4025 = vmatprep.subr.bf16.mxu0 0
    %4026 = vmatpush2.bf16.msra.mxu0 0
    %4027 = vmatprep.subr.bf16.mxu0 0
    %4028 = vmatpush2.bf16.msra.mxu0 0
    %4029 = vmatprep.mubr.bf16.mxu0 0
    %4030 = vmatmul.mubr.bf16.gmra.mxu0 %v3955
    %v4031 = vpop.f32.mrf.mxu0
    %v4032 = vadd.f32 %v1729, %v4031
    %v4033 = vpop.f32.mrf.mxu0
    %v4034 = vpop.f32.mrf.mxu0
    %v4035 = vpop.f32.mrf.mxu0
    %4036 = vdwg.mxu0
    %4037 = vmatprep.subr.bf16.mxu0 %v1917
    %4038 = vmatpush1.bf16.msra.mxu0 %v1916
    %4039 = vmatprep.subr.bf16.mxu0 %v1914
    %4040 = vmatpush1.bf16.msra.mxu0 %v1913
    %4041 = vmatprep.subr.bf16.mxu0 %v1911
    %4042 = vmatpush1.bf16.msra.mxu0 %v1910
    %4043 = vmatprep.subr.bf16.mxu0 %v1908
    %4044 = vmatpush1.bf16.msra.mxu0 %v1907
    %4045 = vmatprep.subr.bf16.mxu0 %v1905
    %4046 = vmatpush1.bf16.msra.mxu0 %v1904
    %4047 = vmatprep.subr.bf16.mxu0 %v1902
    %4048 = vmatpush1.bf16.msra.mxu0 %v1901
    %4049 = vmatprep.subr.bf16.mxu0 %v1899
    %4050 = vmatpush1.bf16.msra.mxu0 %v1898
    %4051 = vmatprep.subr.bf16.mxu0 %v1896
    %4052 = vmatpush1.bf16.msra.mxu0 %v1895
    %4053 = vmatprep.subr.bf16.mxu0 0
    %4054 = vmatpush2.bf16.msra.mxu0 0
    %4055 = vmatprep.subr.bf16.mxu0 0
    %4056 = vmatpush2.bf16.msra.mxu0 0
    %4057 = vmatprep.subr.bf16.mxu0 0
    %4058 = vmatpush2.bf16.msra.mxu0 0
    %4059 = vmatprep.subr.bf16.mxu0 0
    %4060 = vmatpush2.bf16.msra.mxu0 0
    %4061 = vmatprep.subr.bf16.mxu0 0
    %4062 = vmatpush2.bf16.msra.mxu0 0
    %4063 = vmatprep.subr.bf16.mxu0 0
    %4064 = vmatpush2.bf16.msra.mxu0 0
    %4065 = vmatprep.subr.bf16.mxu0 0
    %4066 = vmatpush2.bf16.msra.mxu0 0
    %4067 = vmatprep.subr.bf16.mxu0 0
    %4068 = vmatpush2.bf16.msra.mxu0 0
    %4069 = vmatprep.mubr.bf16.mxu0 0
    %4070 = vmatmul.mubr.bf16.gmra.mxu0 %v3822
    %v4071 = vpop.f32.mrf.mxu0
    %v4072 = vadd.f32 %v1947, %v4071
    %v4073 = vpop.f32.mrf.mxu0
    %v4074 = vadd.f32 %v1951, %v4073
    %v4075 = vpop.f32.mrf.mxu0
    %v4076 = vpop.f32.mrf.mxu0
    %4077 = vdwg.mxu0
    %4078 = vmatprep.subr.bf16.mxu0 0
    %4079 = vmatpush1.bf16.msra.mxu0 %v1918
    %4080 = vmatprep.subr.bf16.mxu0 0
    %4081 = vmatpush1.bf16.msra.mxu0 %v1915
    %4082 = vmatprep.subr.bf16.mxu0 0
    %4083 = vmatpush1.bf16.msra.mxu0 %v1912
    %4084 = vmatprep.subr.bf16.mxu0 0
    %4085 = vmatpush1.bf16.msra.mxu0 %v1909
    %4086 = vmatprep.subr.bf16.mxu0 0
    %4087 = vmatpush1.bf16.msra.mxu0 %v1906
    %4088 = vmatprep.subr.bf16.mxu0 0
    %4089 = vmatpush1.bf16.msra.mxu0 %v1903
    %4090 = vmatprep.subr.bf16.mxu0 0
    %4091 = vmatpush1.bf16.msra.mxu0 %v1900
    %4092 = vmatprep.subr.bf16.mxu0 0
    %4093 = vmatpush1.bf16.msra.mxu0 %v1897
    %4094 = vmatprep.subr.bf16.mxu0 0
    %4095 = vmatpush2.bf16.msra.mxu0 0
    %4096 = vmatprep.subr.bf16.mxu0 0
    %4097 = vmatpush2.bf16.msra.mxu0 0
    %4098 = vmatprep.subr.bf16.mxu0 0
    %4099 = vmatpush2.bf16.msra.mxu0 0
    %4100 = vmatprep.subr.bf16.mxu0 0
    %4101 = vmatpush2.bf16.msra.mxu0 0
    %4102 = vmatprep.subr.bf16.mxu0 0
    %4103 = vmatpush2.bf16.msra.mxu0 0
    %4104 = vmatprep.subr.bf16.mxu0 0
    %4105 = vmatpush2.bf16.msra.mxu0 0
    %4106 = vmatprep.subr.bf16.mxu0 0
    %4107 = vmatpush2.bf16.msra.mxu0 0
    %4108 = vmatprep.subr.bf16.mxu0 0
    %4109 = vmatpush2.bf16.msra.mxu0 0
    %4110 = vmatprep.mubr.bf16.mxu0 0
    %4111 = vmatmul.mubr.bf16.gmra.mxu0 %v3822
    %v4112 = vpop.f32.mrf.mxu0
    %v4113 = vadd.f32 %v1955, %v4112
    %v4114 = vpop.f32.mrf.mxu0
    %v4115 = vpop.f32.mrf.mxu0
    %v4116 = vpop.f32.mrf.mxu0
    %4117 = vdwg.mxu0
    %v4118 = vadd.f32 %v3991, %v4072
    %v4119 = vxor.u32 %v4118, 2147483648
    %v4120 = vmul.f32 %v4119, 1.442695
    %v4121 = vpow.pop %v4120
    %v4122 = vadd.f32 %v4121, 1.0
    %v4123 = vrcp.pop %v4122
    %v4124 = vmul.f32 1.0, %v4123
    %v4125 = vadd.f32 %v3993, %v4074
    %v4126 = vxor.u32 %v4125, 2147483648
    %v4127 = vmul.f32 %v4126, 1.442695
    %v4128 = vpow.pop %v4127
    %v4129 = vadd.f32 %v4128, 1.0
    %v4130 = vrcp.pop %v4129
    %v4131 = vmul.f32 1.0, %v4130
    %v4132 = vmul.f32 %v4124, %v4113
    %v4133 = vadd.f32 %v4032, %v4132
    %v4134 = vtanh.pop %v4133
    %v4135 = vsub.f32 1.0, %v4131
    %v4136 = vmul.f32 %v4135, %v4134
    %v4137 = vmul.f32 %v4131, %v3667
    %v4138 = vadd.f32 %v4136, %v4137
    %4139 = vmatprep.subr.mxu0 0.0
    %4140 = vmatpush1.xpose.msra.mxu0 0.0
    %4141 = vmatprep.subr.mxu0 0.0
    %4142 = vmatpush1.xpose.msra.mxu0 0.0
    %4143 = vmatprep.subr.mxu0 0.0
    %4144 = vmatpush1.xpose.msra.mxu0 0.0
    %4145 = vmatprep.subr.mxu0 0.0
    %4146 = vmatpush1.xpose.msra.mxu0 0.0
    %4147 = vmatprep.subr.mxu0 0.0
    %4148 = vmatpush1.xpose.msra.mxu0 0.0
    %4149 = vmatprep.subr.mxu0 0.0
    %4150 = vmatpush1.xpose.msra.mxu0 0.0
    %4151 = vmatprep.subr.mxu0 0.0
    %4152 = vmatpush1.xpose.msra.mxu0 0.0
    %4153 = vmatprep.subr.mxu0 0.0
    %4154 = vmatpush1.xpose.msra.mxu0 0.0
    %4155 = vmatprep.subr.mxu0 0.0
    %4156 = vmatpush1.xpose.msra.mxu0 0.0
    %4157 = vmatprep.subr.mxu0 0.0
    %4158 = vmatpush1.xpose.msra.mxu0 0.0
    %4159 = vmatprep.subr.mxu0 0.0
    %4160 = vmatpush1.xpose.msra.mxu0 0.0
    %4161 = vmatprep.subr.mxu0 0.0
    %4162 = vmatpush1.xpose.msra.mxu0 0.0
    %4163 = vmatprep.subr.mxu0 0.0
    %4164 = vmatpush1.xpose.msra.mxu0 0.0
    %4165 = vmatprep.subr.mxu0 0.0
    %4166 = vmatpush1.xpose.msra.mxu0 0.0
    %4167 = vmatprep.subr.mxu0 0.0
    %4168 = vmatpush1.xpose.msra.mxu0 0.0
    %4169 = vmatprep.subr.mxu0 0.0
    %4170 = vmatpush1.xpose.msra.mxu0 %v1586
    %4171 = vmatprep.subr.mxu0 0.0
    %4172 = vmatpush2.xpose.msra.mxu0 0.0
    %4173 = vmatprep.subr.mxu0 0.0
    %4174 = vmatpush2.xpose.msra.mxu0 0.0
    %4175 = vmatprep.subr.mxu0 0.0
    %4176 = vmatpush2.xpose.msra.mxu0 0.0
    %4177 = vmatprep.subr.mxu0 0.0
    %4178 = vmatpush2.xpose.msra.mxu0 0.0
    %4179 = vmatprep.subr.mxu0 0.0
    %4180 = vmatpush2.xpose.msra.mxu0 0.0
    %4181 = vmatprep.subr.mxu0 0.0
    %4182 = vmatpush2.xpose.msra.mxu0 0.0
    %4183 = vmatprep.subr.mxu0 0.0
    %4184 = vmatpush2.xpose.msra.mxu0 0.0
    %4185 = vmatprep.subr.mxu0 0.0
    %4186 = vmatpush2.xpose.msra.mxu0 0.0
    %4187 = vmatprep.subr.mxu0 0.0
    %4188 = vmatpush2.xpose.msra.mxu0 0.0
    %4189 = vmatprep.subr.mxu0 0.0
    %4190 = vmatpush2.xpose.msra.mxu0 0.0
    %4191 = vmatprep.subr.mxu0 0.0
    %4192 = vmatpush2.xpose.msra.mxu0 0.0
    %4193 = vmatprep.subr.mxu0 0.0
    %4194 = vmatpush2.xpose.msra.mxu0 0.0
    %4195 = vmatprep.subr.mxu0 0.0
    %4196 = vmatpush2.xpose.msra.mxu0 0.0
    %4197 = vmatprep.subr.mxu0 0.0
    %4198 = vmatpush2.xpose.msra.mxu0 0.0
    %4199 = vmatprep.subr.mxu0 0.0
    %4200 = vmatpush2.xpose.msra.mxu0 0.0
    %4201 = vmatprep.subr.mxu0 0.0
    %4202 = vmatpush2.xpose.msra.mxu0 0.0
    %4203 = vmatprep.mubr.f32.mxu0 0.0
    %4204 = vmatmul.mubr.f32.gmra.mxu0 %v4138
    %v4205 = vpop.f32.mrf.mxu0
    %v4206 = vadd.f32 0.0, %v4205
    %v4207 = vpop.f32.mrf.mxu0
    %4208 = vdwg.mxu0
    %v4209 = vsel %vm2131, %v4206, -inf
    %4210 = vmax.xlane.f32.xlu0 %v4209
    %v4211 = vpop.xlane.xlu0 %4210
    %v4212 = vsub.f32 %v4206, %v4211
    %v4213 = vmul.f32 %v4212, 1.442695
    %v4214 = vpow.pop %v4213
    %v4215 = vsel %vm2131, %v4214, 0.0
    %4216 = vadd.xlane.f32.xlu0 %v4215
    %v4217 = vpop.xlane.xlu0 %4216
    %v4218 = vrcp.pop %v4217
    %v4219 = vmul.f32 %v4214, %v4218
    %v4221 = vsel %vm2143, %v4219, 0
    %4223 = vmatprep.subr.mxu0 0.0
    %4224 = vmatpush1.msra.mxu0 0.0
    %4225 = vmatprep.subr.mxu0 0.0
    %4226 = vmatpush1.msra.mxu0 0.0
    %4227 = vmatprep.subr.mxu0 0.0
    %4228 = vmatpush1.msra.mxu0 0.0
    %4229 = vmatprep.subr.mxu0 0.0
    %4230 = vmatpush1.msra.mxu0 0.0
    %4231 = vmatprep.subr.mxu0 0.0
    %4232 = vmatpush1.msra.mxu0 0.0
    %4233 = vmatprep.subr.mxu0 0.0
    %4234 = vmatpush1.msra.mxu0 0.0
    %4235 = vmatprep.subr.mxu0 0.0
    %4236 = vmatpush1.msra.mxu0 0.0
    %4237 = vmatprep.subr.mxu0 0.0
    %4238 = vmatpush1.msra.mxu0 0.0
    %4239 = vmatprep.subr.mxu0 0.0
    %4240 = vmatpush1.msra.mxu0 0.0
    %4241 = vmatprep.subr.mxu0 0.0
    %4242 = vmatpush1.msra.mxu0 0.0
    %4243 = vmatprep.subr.mxu0 0.0
    %4244 = vmatpush1.msra.mxu0 0.0
    %4245 = vmatprep.subr.mxu0 0.0
    %4246 = vmatpush1.msra.mxu0 0.0
    %4247 = vmatprep.subr.mxu0 0.0
    %4248 = vmatpush1.msra.mxu0 0.0
    %4249 = vmatprep.subr.mxu0 0.0
    %4250 = vmatpush1.msra.mxu0 0.0
    %4251 = vmatprep.subr.mxu0 0.0
    %4252 = vmatpush1.msra.mxu0 0.0
    %4253 = vmatprep.subr.mxu0 0.0
    %4254 = vmatpush1.msra.mxu0 %v1586
    %4255 = vmatprep.subr.mxu0 0.0
    %4256 = vmatpush2.msra.mxu0 0.0
    %4257 = vmatprep.subr.mxu0 0.0
    %4258 = vmatpush2.msra.mxu0 0.0
    %4259 = vmatprep.subr.mxu0 0.0
    %4260 = vmatpush2.msra.mxu0 0.0
    %4261 = vmatprep.subr.mxu0 0.0
    %4262 = vmatpush2.msra.mxu0 0.0
    %4263 = vmatprep.subr.mxu0 0.0
    %4264 = vmatpush2.msra.mxu0 0.0
    %4265 = vmatprep.subr.mxu0 0.0
    %4266 = vmatpush2.msra.mxu0 0.0
    %4267 = vmatprep.subr.mxu0 0.0
    %4268 = vmatpush2.msra.mxu0 0.0
    %4269 = vmatprep.subr.mxu0 0.0
    %4270 = vmatpush2.msra.mxu0 0.0
    %4271 = vmatprep.subr.mxu0 0.0
    %4272 = vmatpush2.msra.mxu0 0.0
    %4273 = vmatprep.subr.mxu0 0.0
    %4274 = vmatpush2.msra.mxu0 0.0
    %4275 = vmatprep.subr.mxu0 0.0
    %4276 = vmatpush2.msra.mxu0 0.0
    %4277 = vmatprep.subr.mxu0 0.0
    %4278 = vmatpush2.msra.mxu0 0.0
    %4279 = vmatprep.subr.mxu0 0.0
    %4280 = vmatpush2.msra.mxu0 0.0
    %4281 = vmatprep.subr.mxu0 0.0
    %4282 = vmatpush2.msra.mxu0 0.0
    %4283 = vmatprep.subr.mxu0 0.0
    %4284 = vmatpush2.msra.mxu0 0.0
    %4285 = vmatprep.subr.mxu0 0.0
    %4286 = vmatpush2.msra.mxu0 0.0
    %4287 = vmatprep.mubr.f32.mxu0 0.0
    %4288 = vmatmul.mubr.f32.gmra.mxu0 %v4221
    %v4289 = vpop.f32.mrf.mxu0
    %v4290 = vadd.f32 0.0, %v4289
    %v4291 = vpop.f32.mrf.mxu0
    %4292 = vdwg.mxu0
    %v4293 = vpack.c.bf16 %v4138, %v4138
    %v4294 = vpack.c.bf16 %v4290, %v4290
    %4295 = vmatprep.subr.bf16.mxu0 0
    %4296 = vmatpush1.bf16.msra.mxu0 %v2290
    %4297 = vmatprep.subr.bf16.mxu0 0
    %4298 = vmatpush1.bf16.msra.mxu0 %v2289
    %4299 = vmatprep.subr.bf16.mxu0 0
    %4300 = vmatpush1.bf16.msra.mxu0 %v2288
    %4301 = vmatprep.subr.bf16.mxu0 0
    %4302 = vmatpush1.bf16.msra.mxu0 %v2287
    %4303 = vmatprep.subr.bf16.mxu0 0
    %4304 = vmatpush1.bf16.msra.mxu0 %v2286
    %4305 = vmatprep.subr.bf16.mxu0 0
    %4306 = vmatpush1.bf16.msra.mxu0 %v2285
    %4307 = vmatprep.subr.bf16.mxu0 0
    %4308 = vmatpush1.bf16.msra.mxu0 %v2284
    %4309 = vmatprep.subr.bf16.mxu0 0
    %4310 = vmatpush1.bf16.msra.mxu0 %v2283
    %4311 = vmatprep.subr.bf16.mxu0 0
    %4312 = vmatpush2.bf16.msra.mxu0 %v2298
    %4313 = vmatprep.subr.bf16.mxu0 0
    %4314 = vmatpush2.bf16.msra.mxu0 %v2297
    %4315 = vmatprep.subr.bf16.mxu0 0
    %4316 = vmatpush2.bf16.msra.mxu0 %v2296
    %4317 = vmatprep.subr.bf16.mxu0 0
    %4318 = vmatpush2.bf16.msra.mxu0 %v2295
    %4319 = vmatprep.subr.bf16.mxu0 0
    %4320 = vmatpush2.bf16.msra.mxu0 %v2294
    %4321 = vmatprep.subr.bf16.mxu0 0
    %4322 = vmatpush2.bf16.msra.mxu0 %v2293
    %4323 = vmatprep.subr.bf16.mxu0 0
    %4324 = vmatpush2.bf16.msra.mxu0 %v2292
    %4325 = vmatprep.subr.bf16.mxu0 0
    %4326 = vmatpush2.bf16.msra.mxu0 %v2291
    %4327 = vmatprep.mubr.bf16.mxu0 %v4294
    %4328 = vmatmul.mubr.bf16.gmra.mxu0 %v4293
    %v4329 = vpop.f32.mrf.mxu0
    %v4330 = vadd.f32 %v1568, %v4329
    %v4331 = vpop.f32.mrf.mxu0
    %v4332 = vpop.f32.mrf.mxu0
    %v4333 = vpop.f32.mrf.mxu0
    %4334 = vdwg.mxu0
    %v4335 = vtanh.pop %v4330
    %v4336 = vpack.c.bf16 %v4335, %v4335
    %4337 = vmatprep.subr.bf16.mxu0 %v2420
    %4338 = vmatpush1.bf16.msra.mxu0 %v2419
    %4339 = vmatprep.subr.bf16.mxu0 %v2418
    %4340 = vmatpush1.bf16.msra.mxu0 %v2417
    %4341 = vmatprep.subr.bf16.mxu0 %v2416
    %4342 = vmatpush1.bf16.msra.mxu0 %v2415
    %4343 = vmatprep.subr.bf16.mxu0 %v2414
    %4344 = vmatpush1.bf16.msra.mxu0 %v2413
    %4345 = vmatprep.subr.bf16.mxu0 %v2412
    %4346 = vmatpush1.bf16.msra.mxu0 %v2411
    %4347 = vmatprep.subr.bf16.mxu0 %v2410
    %4348 = vmatpush1.bf16.msra.mxu0 %v2409
    %4349 = vmatprep.subr.bf16.mxu0 %v2408
    %4350 = vmatpush1.bf16.msra.mxu0 %v2407
    %4351 = vmatprep.subr.bf16.mxu0 %v2406
    %4352 = vmatpush1.bf16.msra.mxu0 %v2405
    %4353 = vmatprep.subr.bf16.mxu0 0
    %4354 = vmatpush2.bf16.msra.mxu0 0
    %4355 = vmatprep.subr.bf16.mxu0 0
    %4356 = vmatpush2.bf16.msra.mxu0 0
    %4357 = vmatprep.subr.bf16.mxu0 0
    %4358 = vmatpush2.bf16.msra.mxu0 0
    %4359 = vmatprep.subr.bf16.mxu0 0
    %4360 = vmatpush2.bf16.msra.mxu0 0
    %4361 = vmatprep.subr.bf16.mxu0 0
    %4362 = vmatpush2.bf16.msra.mxu0 0
    %4363 = vmatprep.subr.bf16.mxu0 0
    %4364 = vmatpush2.bf16.msra.mxu0 0
    %4365 = vmatprep.subr.bf16.mxu0 0
    %4366 = vmatpush2.bf16.msra.mxu0 0
    %4367 = vmatprep.subr.bf16.mxu0 0
    %4368 = vmatpush2.bf16.msra.mxu0 0
    %4369 = vmatprep.mubr.bf16.mxu0 0
    %4370 = vmatmul.mubr.bf16.gmra.mxu0 %v4336
    %v4371 = vpop.f32.mrf.mxu0
    %v4372 = vadd.f32 %v2441, %v4371
    %v4373 = vpop.f32.mrf.mxu0
    %v4374 = vadd.f32 %v2445, %v4373
    %v4375 = vpop.f32.mrf.mxu0
    %v4376 = vpop.f32.mrf.mxu0
    %4377 = vdwg.mxu0
    %v4378 = vsel %vm2489, %v4372, -inf
    %v4379 = vsel %vm2489, %v4374, -inf
    %v4380 = vmax.f32 %v4378, %v4379
    %4381 = vmax.xlane.f32.xlu0 %v4380
    %v4382 = vpop.xlane.xlu0 %4381
    %vm4383 = vcmp.ge.f32.partialorder %v4372, %v4382
    %vm4384 = vcmp.ge.f32.partialorder %v4374, %v4382
    %v4385 = vsel %vm4383, %v2496, 256
    %v4386 = vsel %vm4384, %v2497, 256
    %v4387 = vsel %vm2489, %v4385, 2147483647
    %v4388 = vsel %vm2489, %v4386, 2147483647
    %vm4389 = vcmp.lt.s32.totalorder %v4387, %v4388
    %v4390 = vsel %vm4389, %v4387, %v4388
    %v4391 = vand.u32 %v4390, 65535
    %v4392 = vshra.s32 %v4390, 16
    %v4393 = vcvt.s32.f32 %v4391
    %v4394 = vcvt.s32.f32 %v4392
    %4395 = vmin.xlane.f32.xlu0 %v4394
    %v4396 = vpop.xlane.xlu0 %4395
    %vm4397 = vcmp.eq.f32.partialorder %v4394, %v4396
    %v4398 = vsel %vm4397, %v4393, inf
    %4399 = vmin.xlane.f32.xlu0 %v4398
    %v4400 = vpop.xlane.xlu0 %4399
    %v4401 = vcvt.f32.s32 %v4400
    %v4402 = vcvt.f32.s32 %v4396
    %v4403 = vshll.u32 %v4402, 16
    %v4404 = vadd.s32 %v4403, %v4401
    %v4405 = vsub.f32 %v4372, %v4382
    %v4406 = vsub.f32 %v4374, %v4382
    %v4407 = vmul.f32 %v4405, 1.442695
    %v4408 = vpow.pop %v4407
    %v4409 = vmul.f32 %v4406, 1.442695
    %v4410 = vpow.pop %v4409
    %v4411 = vsel %vm2489, %v4408, 0.0
    %v4412 = vsel %vm2489, %v4410, 0.0
    %v4413 = vadd.f32 %v4411, %v4412
    %4414 = vadd.xlane.f32.xlu0 %v4413
    %v4415 = vpop.xlane.xlu0 %4414
    %v4416 = vrcp.pop %v4415
    %v4417 = vmul.f32 1.0, %v4416
    %4418 = vst.msk [vmem:[#allocation4] sm:$0x1] %vm2533, %v4404
    %v4419 = vld [vmem:[#allocation4] sm:$0x1]
    %s4420 = vtos %v4419
    %v4421 = vstv %s4420
    %4422 = vst [vmem:[%s14 + $0x4] sm:$0x1] %v4421
    %4423 = vst [vmem:[%s15 + $0x4] sm:$0x1] %v4417
    %s4424 = scalar_lea.vmem [#allocation5], %s4420
    %v4425 = vld [vmem:[%s4424] sm:$0x1]
    %v4426 = vpack.c.bf16 %v4425, %v4425
    %4427 = vmatprep.subr.bf16.mxu0 %v1691
    %4428 = vmatpush1.bf16.msra.mxu0 %v1690
    %4429 = vmatprep.subr.bf16.mxu0 %v1688
    %4430 = vmatpush1.bf16.msra.mxu0 %v1687
    %4431 = vmatprep.subr.bf16.mxu0 %v1685
    %4432 = vmatpush1.bf16.msra.mxu0 %v1684
    %4433 = vmatprep.subr.bf16.mxu0 %v1682
    %4434 = vmatpush1.bf16.msra.mxu0 %v1681
    %4435 = vmatprep.subr.bf16.mxu0 %v1679
    %4436 = vmatpush1.bf16.msra.mxu0 %v1678
    %4437 = vmatprep.subr.bf16.mxu0 %v1676
    %4438 = vmatpush1.bf16.msra.mxu0 %v1675
    %4439 = vmatprep.subr.bf16.mxu0 %v1673
    %4440 = vmatpush1.bf16.msra.mxu0 %v1672
    %4441 = vmatprep.subr.bf16.mxu0 %v1670
    %4442 = vmatpush1.bf16.msra.mxu0 %v1669
    %4443 = vmatprep.subr.bf16.mxu0 0
    %4444 = vmatpush2.bf16.msra.mxu0 0
    %4445 = vmatprep.subr.bf16.mxu0 0
    %4446 = vmatpush2.bf16.msra.mxu0 0
    %4447 = vmatprep.subr.bf16.mxu0 0
    %4448 = vmatpush2.bf16.msra.mxu0 0
    %4449 = vmatprep.subr.bf16.mxu0 0
    %4450 = vmatpush2.bf16.msra.mxu0 0
    %4451 = vmatprep.subr.bf16.mxu0 0
    %4452 = vmatpush2.bf16.msra.mxu0 0
    %4453 = vmatprep.subr.bf16.mxu0 0
    %4454 = vmatpush2.bf16.msra.mxu0 0
    %4455 = vmatprep.subr.bf16.mxu0 0
    %4456 = vmatpush2.bf16.msra.mxu0 0
    %4457 = vmatprep.subr.bf16.mxu0 0
    %4458 = vmatpush2.bf16.msra.mxu0 0
    %4459 = vmatprep.mubr.bf16.mxu0 0
    %4460 = vmatmul.mubr.bf16.gmra.mxu0 %v4426
    %v4461 = vpop.f32.mrf.mxu0
    %v4462 = vadd.f32 %v1721, %v4461
    %v4463 = vpop.f32.mrf.mxu0
    %v4464 = vadd.f32 %v1725, %v4463
    %v4465 = vpop.f32.mrf.mxu0
    %v4466 = vpop.f32.mrf.mxu0
    %4467 = vdwg.mxu0
    %4468 = vmatprep.subr.bf16.mxu0 0
    %4469 = vmatpush1.bf16.msra.mxu0 %v1692
    %4470 = vmatprep.subr.bf16.mxu0 0
    %4471 = vmatpush1.bf16.msra.mxu0 %v1689
    %4472 = vmatprep.subr.bf16.mxu0 0
    %4473 = vmatpush1.bf16.msra.mxu0 %v1686
    %4474 = vmatprep.subr.bf16.mxu0 0
    %4475 = vmatpush1.bf16.msra.mxu0 %v1683
    %4476 = vmatprep.subr.bf16.mxu0 0
    %4477 = vmatpush1.bf16.msra.mxu0 %v1680
    %4478 = vmatprep.subr.bf16.mxu0 0
    %4479 = vmatpush1.bf16.msra.mxu0 %v1677
    %4480 = vmatprep.subr.bf16.mxu0 0
    %4481 = vmatpush1.bf16.msra.mxu0 %v1674
    %4482 = vmatprep.subr.bf16.mxu0 0
    %4483 = vmatpush1.bf16.msra.mxu0 %v1671
    %4484 = vmatprep.subr.bf16.mxu0 0
    %4485 = vmatpush2.bf16.msra.mxu0 0
    %4486 = vmatprep.subr.bf16.mxu0 0
    %4487 = vmatpush2.bf16.msra.mxu0 0
    %4488 = vmatprep.subr.bf16.mxu0 0
    %4489 = vmatpush2.bf16.msra.mxu0 0
    %4490 = vmatprep.subr.bf16.mxu0 0
    %4491 = vmatpush2.bf16.msra.mxu0 0
    %4492 = vmatprep.subr.bf16.mxu0 0
    %4493 = vmatpush2.bf16.msra.mxu0 0
    %4494 = vmatprep.subr.bf16.mxu0 0
    %4495 = vmatpush2.bf16.msra.mxu0 0
    %4496 = vmatprep.subr.bf16.mxu0 0
    %4497 = vmatpush2.bf16.msra.mxu0 0
    %4498 = vmatprep.subr.bf16.mxu0 0
    %4499 = vmatpush2.bf16.msra.mxu0 0
    %4500 = vmatprep.mubr.bf16.mxu0 0
    %4501 = vmatmul.mubr.bf16.gmra.mxu0 %v4426
    %v4502 = vpop.f32.mrf.mxu0
    %v4503 = vadd.f32 %v1729, %v4502
    %v4504 = vpop.f32.mrf.mxu0
    %v4505 = vpop.f32.mrf.mxu0
    %v4506 = vpop.f32.mrf.mxu0
    %4507 = vdwg.mxu0
    %4508 = vmatprep.subr.bf16.mxu0 %v1917
    %4509 = vmatpush1.bf16.msra.mxu0 %v1916
    %4510 = vmatprep.subr.bf16.mxu0 %v1914
    %4511 = vmatpush1.bf16.msra.mxu0 %v1913
    %4512 = vmatprep.subr.bf16.mxu0 %v1911
    %4513 = vmatpush1.bf16.msra.mxu0 %v1910
    %4514 = vmatprep.subr.bf16.mxu0 %v1908
    %4515 = vmatpush1.bf16.msra.mxu0 %v1907
    %4516 = vmatprep.subr.bf16.mxu0 %v1905
    %4517 = vmatpush1.bf16.msra.mxu0 %v1904
    %4518 = vmatprep.subr.bf16.mxu0 %v1902
    %4519 = vmatpush1.bf16.msra.mxu0 %v1901
    %4520 = vmatprep.subr.bf16.mxu0 %v1899
    %4521 = vmatpush1.bf16.msra.mxu0 %v1898
    %4522 = vmatprep.subr.bf16.mxu0 %v1896
    %4523 = vmatpush1.bf16.msra.mxu0 %v1895
    %4524 = vmatprep.subr.bf16.mxu0 0
    %4525 = vmatpush2.bf16.msra.mxu0 0
    %4526 = vmatprep.subr.bf16.mxu0 0
    %4527 = vmatpush2.bf16.msra.mxu0 0
    %4528 = vmatprep.subr.bf16.mxu0 0
    %4529 = vmatpush2.bf16.msra.mxu0 0
    %4530 = vmatprep.subr.bf16.mxu0 0
    %4531 = vmatpush2.bf16.msra.mxu0 0
    %4532 = vmatprep.subr.bf16.mxu0 0
    %4533 = vmatpush2.bf16.msra.mxu0 0
    %4534 = vmatprep.subr.bf16.mxu0 0
    %4535 = vmatpush2.bf16.msra.mxu0 0
    %4536 = vmatprep.subr.bf16.mxu0 0
    %4537 = vmatpush2.bf16.msra.mxu0 0
    %4538 = vmatprep.subr.bf16.mxu0 0
    %4539 = vmatpush2.bf16.msra.mxu0 0
    %4540 = vmatprep.mubr.bf16.mxu0 0
    %4541 = vmatmul.mubr.bf16.gmra.mxu0 %v4293
    %v4542 = vpop.f32.mrf.mxu0
    %v4543 = vadd.f32 %v1947, %v4542
    %v4544 = vpop.f32.mrf.mxu0
    %v4545 = vadd.f32 %v1951, %v4544
    %v4546 = vpop.f32.mrf.mxu0
    %v4547 = vpop.f32.mrf.mxu0
    %4548 = vdwg.mxu0
    %4549 = vmatprep.subr.bf16.mxu0 0
    %4550 = vmatpush1.bf16.msra.mxu0 %v1918
    %4551 = vmatprep.subr.bf16.mxu0 0
    %4552 = vmatpush1.bf16.msra.mxu0 %v1915
    %4553 = vmatprep.subr.bf16.mxu0 0
    %4554 = vmatpush1.bf16.msra.mxu0 %v1912
    %4555 = vmatprep.subr.bf16.mxu0 0
    %4556 = vmatpush1.bf16.msra.mxu0 %v1909
    %4557 = vmatprep.subr.bf16.mxu0 0
    %4558 = vmatpush1.bf16.msra.mxu0 %v1906
    %4559 = vmatprep.subr.bf16.mxu0 0
    %4560 = vmatpush1.bf16.msra.mxu0 %v1903
    %4561 = vmatprep.subr.bf16.mxu0 0
    %4562 = vmatpush1.bf16.msra.mxu0 %v1900
    %4563 = vmatprep.subr.bf16.mxu0 0
    %4564 = vmatpush1.bf16.msra.mxu0 %v1897
    %4565 = vmatprep.subr.bf16.mxu0 0
    %4566 = vmatpush2.bf16.msra.mxu0 0
    %4567 = vmatprep.subr.bf16.mxu0 0
    %4568 = vmatpush2.bf16.msra.mxu0 0
    %4569 = vmatprep.subr.bf16.mxu0 0
    %4570 = vmatpush2.bf16.msra.mxu0 0
    %4571 = vmatprep.subr.bf16.mxu0 0
    %4572 = vmatpush2.bf16.msra.mxu0 0
    %4573 = vmatprep.subr.bf16.mxu0 0
    %4574 = vmatpush2.bf16.msra.mxu0 0
    %4575 = vmatprep.subr.bf16.mxu0 0
    %4576 = vmatpush2.bf16.msra.mxu0 0
    %4577 = vmatprep.subr.bf16.mxu0 0
    %4578 = vmatpush2.bf16.msra.mxu0 0
    %4579 = vmatprep.subr.bf16.mxu0 0
    %4580 = vmatpush2.bf16.msra.mxu0 0
    %4581 = vmatprep.mubr.bf16.mxu0 0
    %4582 = vmatmul.mubr.bf16.gmra.mxu0 %v4293
    %v4583 = vpop.f32.mrf.mxu0
    %v4584 = vadd.f32 %v1955, %v4583
    %v4585 = vpop.f32.mrf.mxu0
    %v4586 = vpop.f32.mrf.mxu0
    %v4587 = vpop.f32.mrf.mxu0
    %4588 = vdwg.mxu0
    %v4589 = vadd.f32 %v4462, %v4543
    %v4590 = vxor.u32 %v4589, 2147483648
    %v4591 = vmul.f32 %v4590, 1.442695
    %v4592 = vpow.pop %v4591
    %v4593 = vadd.f32 %v4592, 1.0
    %v4594 = vrcp.pop %v4593
    %v4595 = vmul.f32 1.0, %v4594
    %v4596 = vadd.f32 %v4464, %v4545
    %v4597 = vxor.u32 %v4596, 2147483648
    %v4598 = vmul.f32 %v4597, 1.442695
    %v4599 = vpow.pop %v4598
    %v4600 = vadd.f32 %v4599, 1.0
    %v4601 = vrcp.pop %v4600
    %v4602 = vmul.f32 1.0, %v4601
    %v4603 = vmul.f32 %v4595, %v4584
    %v4604 = vadd.f32 %v4503, %v4603
    %v4605 = vtanh.pop %v4604
    %v4606 = vsub.f32 1.0, %v4602
    %v4607 = vmul.f32 %v4606, %v4605
    %v4608 = vmul.f32 %v4602, %v4138
    %v4609 = vadd.f32 %v4607, %v4608
    %4610 = vmatprep.subr.mxu0 0.0
    %4611 = vmatpush1.xpose.msra.mxu0 0.0
    %4612 = vmatprep.subr.mxu0 0.0
    %4613 = vmatpush1.xpose.msra.mxu0 0.0
    %4614 = vmatprep.subr.mxu0 0.0
    %4615 = vmatpush1.xpose.msra.mxu0 0.0
    %4616 = vmatprep.subr.mxu0 0.0
    %4617 = vmatpush1.xpose.msra.mxu0 0.0
    %4618 = vmatprep.subr.mxu0 0.0
    %4619 = vmatpush1.xpose.msra.mxu0 0.0
    %4620 = vmatprep.subr.mxu0 0.0
    %4621 = vmatpush1.xpose.msra.mxu0 0.0
    %4622 = vmatprep.subr.mxu0 0.0
    %4623 = vmatpush1.xpose.msra.mxu0 0.0
    %4624 = vmatprep.subr.mxu0 0.0
    %4625 = vmatpush1.xpose.msra.mxu0 0.0
    %4626 = vmatprep.subr.mxu0 0.0
    %4627 = vmatpush1.xpose.msra.mxu0 0.0
    %4628 = vmatprep.subr.mxu0 0.0
    %4629 = vmatpush1.xpose.msra.mxu0 0.0
    %4630 = vmatprep.subr.mxu0 0.0
    %4631 = vmatpush1.xpose.msra.mxu0 0.0
    %4632 = vmatprep.subr.mxu0 0.0
    %4633 = vmatpush1.xpose.msra.mxu0 0.0
    %4634 = vmatprep.subr.mxu0 0.0
    %4635 = vmatpush1.xpose.msra.mxu0 0.0
    %4636 = vmatprep.subr.mxu0 0.0
    %4637 = vmatpush1.xpose.msra.mxu0 0.0
    %4638 = vmatprep.subr.mxu0 0.0
    %4639 = vmatpush1.xpose.msra.mxu0 0.0
    %4640 = vmatprep.subr.mxu0 0.0
    %4641 = vmatpush1.xpose.msra.mxu0 %v1586
    %4642 = vmatprep.subr.mxu0 0.0
    %4643 = vmatpush2.xpose.msra.mxu0 0.0
    %4644 = vmatprep.subr.mxu0 0.0
    %4645 = vmatpush2.xpose.msra.mxu0 0.0
    %4646 = vmatprep.subr.mxu0 0.0
    %4647 = vmatpush2.xpose.msra.mxu0 0.0
    %4648 = vmatprep.subr.mxu0 0.0
    %4649 = vmatpush2.xpose.msra.mxu0 0.0
    %4650 = vmatprep.subr.mxu0 0.0
    %4651 = vmatpush2.xpose.msra.mxu0 0.0
    %4652 = vmatprep.subr.mxu0 0.0
    %4653 = vmatpush2.xpose.msra.mxu0 0.0
    %4654 = vmatprep.subr.mxu0 0.0
    %4655 = vmatpush2.xpose.msra.mxu0 0.0
    %4656 = vmatprep.subr.mxu0 0.0
    %4657 = vmatpush2.xpose.msra.mxu0 0.0
    %4658 = vmatprep.subr.mxu0 0.0
    %4659 = vmatpush2.xpose.msra.mxu0 0.0
    %4660 = vmatprep.subr.mxu0 0.0
    %4661 = vmatpush2.xpose.msra.mxu0 0.0
    %4662 = vmatprep.subr.mxu0 0.0
    %4663 = vmatpush2.xpose.msra.mxu0 0.0
    %4664 = vmatprep.subr.mxu0 0.0
    %4665 = vmatpush2.xpose.msra.mxu0 0.0
    %4666 = vmatprep.subr.mxu0 0.0
    %4667 = vmatpush2.xpose.msra.mxu0 0.0
    %4668 = vmatprep.subr.mxu0 0.0
    %4669 = vmatpush2.xpose.msra.mxu0 0.0
    %4670 = vmatprep.subr.mxu0 0.0
    %4671 = vmatpush2.xpose.msra.mxu0 0.0
    %4672 = vmatprep.subr.mxu0 0.0
    %4673 = vmatpush2.xpose.msra.mxu0 0.0
    %4674 = vmatprep.mubr.f32.mxu0 0.0
    %4675 = vmatmul.mubr.f32.gmra.mxu0 %v4609
    %v4676 = vpop.f32.mrf.mxu0
    %v4677 = vadd.f32 0.0, %v4676
    %v4678 = vpop.f32.mrf.mxu0
    %4679 = vdwg.mxu0
    %v4680 = vsel %vm2131, %v4677, -inf
    %4681 = vmax.xlane.f32.xlu0 %v4680
    %v4682 = vpop.xlane.xlu0 %4681
    %v4683 = vsub.f32 %v4677, %v4682
    %v4684 = vmul.f32 %v4683, 1.442695
    %v4685 = vpow.pop %v4684
    %v4686 = vsel %vm2131, %v4685, 0.0
    %4687 = vadd.xlane.f32.xlu0 %v4686
    %v4688 = vpop.xlane.xlu0 %4687
    %v4689 = vrcp.pop %v4688
    %v4690 = vmul.f32 %v4685, %v4689
    %v4692 = vsel %vm2143, %v4690, 0
    %4694 = vmatprep.subr.mxu0 0.0
    %4695 = vmatpush1.msra.mxu0 0.0
    %4696 = vmatprep.subr.mxu0 0.0
    %4697 = vmatpush1.msra.mxu0 0.0
    %4698 = vmatprep.subr.mxu0 0.0
    %4699 = vmatpush1.msra.mxu0 0.0
    %4700 = vmatprep.subr.mxu0 0.0
    %4701 = vmatpush1.msra.mxu0 0.0
    %4702 = vmatprep.subr.mxu0 0.0
    %4703 = vmatpush1.msra.mxu0 0.0
    %4704 = vmatprep.subr.mxu0 0.0
    %4705 = vmatpush1.msra.mxu0 0.0
    %4706 = vmatprep.subr.mxu0 0.0
    %4707 = vmatpush1.msra.mxu0 0.0
    %4708 = vmatprep.subr.mxu0 0.0
    %4709 = vmatpush1.msra.mxu0 0.0
    %4710 = vmatprep.subr.mxu0 0.0
    %4711 = vmatpush1.msra.mxu0 0.0
    %4712 = vmatprep.subr.mxu0 0.0
    %4713 = vmatpush1.msra.mxu0 0.0
    %4714 = vmatprep.subr.mxu0 0.0
    %4715 = vmatpush1.msra.mxu0 0.0
    %4716 = vmatprep.subr.mxu0 0.0
    %4717 = vmatpush1.msra.mxu0 0.0
    %4718 = vmatprep.subr.mxu0 0.0
    %4719 = vmatpush1.msra.mxu0 0.0
    %4720 = vmatprep.subr.mxu0 0.0
    %4721 = vmatpush1.msra.mxu0 0.0
    %4722 = vmatprep.subr.mxu0 0.0
    %4723 = vmatpush1.msra.mxu0 0.0
    %4724 = vmatprep.subr.mxu0 0.0
    %4725 = vmatpush1.msra.mxu0 %v1586
    %4726 = vmatprep.subr.mxu0 0.0
    %4727 = vmatpush2.msra.mxu0 0.0
    %4728 = vmatprep.subr.mxu0 0.0
    %4729 = vmatpush2.msra.mxu0 0.0
    %4730 = vmatprep.subr.mxu0 0.0
    %4731 = vmatpush2.msra.mxu0 0.0
    %4732 = vmatprep.subr.mxu0 0.0
    %4733 = vmatpush2.msra.mxu0 0.0
    %4734 = vmatprep.subr.mxu0 0.0
    %4735 = vmatpush2.msra.mxu0 0.0
    %4736 = vmatprep.subr.mxu0 0.0
    %4737 = vmatpush2.msra.mxu0 0.0
    %4738 = vmatprep.subr.mxu0 0.0
    %4739 = vmatpush2.msra.mxu0 0.0
    %4740 = vmatprep.subr.mxu0 0.0
    %4741 = vmatpush2.msra.mxu0 0.0
    %4742 = vmatprep.subr.mxu0 0.0
    %4743 = vmatpush2.msra.mxu0 0.0
    %4744 = vmatprep.subr.mxu0 0.0
    %4745 = vmatpush2.msra.mxu0 0.0
    %4746 = vmatprep.subr.mxu0 0.0
    %4747 = vmatpush2.msra.mxu0 0.0
    %4748 = vmatprep.subr.mxu0 0.0
    %4749 = vmatpush2.msra.mxu0 0.0
    %4750 = vmatprep.subr.mxu0 0.0
    %4751 = vmatpush2.msra.mxu0 0.0
    %4752 = vmatprep.subr.mxu0 0.0
    %4753 = vmatpush2.msra.mxu0 0.0
    %4754 = vmatprep.subr.mxu0 0.0
    %4755 = vmatpush2.msra.mxu0 0.0
    %4756 = vmatprep.subr.mxu0 0.0
    %4757 = vmatpush2.msra.mxu0 0.0
    %4758 = vmatprep.mubr.f32.mxu0 0.0
    %4759 = vmatmul.mubr.f32.gmra.mxu0 %v4692
    %v4760 = vpop.f32.mrf.mxu0
    %v4761 = vadd.f32 0.0, %v4760
    %v4762 = vpop.f32.mrf.mxu0
    %4763 = vdwg.mxu0
    %v4764 = vpack.c.bf16 %v4609, %v4609
    %v4765 = vpack.c.bf16 %v4761, %v4761
    %4766 = vmatprep.subr.bf16.mxu0 0
    %4767 = vmatpush1.bf16.msra.mxu0 %v2290
    %4768 = vmatprep.subr.bf16.mxu0 0
    %4769 = vmatpush1.bf16.msra.mxu0 %v2289
    %4770 = vmatprep.subr.bf16.mxu0 0
    %4771 = vmatpush1.bf16.msra.mxu0 %v2288
    %4772 = vmatprep.subr.bf16.mxu0 0
    %4773 = vmatpush1.bf16.msra.mxu0 %v2287
    %4774 = vmatprep.subr.bf16.mxu0 0
    %4775 = vmatpush1.bf16.msra.mxu0 %v2286
    %4776 = vmatprep.subr.bf16.mxu0 0
    %4777 = vmatpush1.bf16.msra.mxu0 %v2285
    %4778 = vmatprep.subr.bf16.mxu0 0
    %4779 = vmatpush1.bf16.msra.mxu0 %v2284
    %4780 = vmatprep.subr.bf16.mxu0 0
    %4781 = vmatpush1.bf16.msra.mxu0 %v2283
    %4782 = vmatprep.subr.bf16.mxu0 0
    %4783 = vmatpush2.bf16.msra.mxu0 %v2298
    %4784 = vmatprep.subr.bf16.mxu0 0
    %4785 = vmatpush2.bf16.msra.mxu0 %v2297
    %4786 = vmatprep.subr.bf16.mxu0 0
    %4787 = vmatpush2.bf16.msra.mxu0 %v2296
    %4788 = vmatprep.subr.bf16.mxu0 0
    %4789 = vmatpush2.bf16.msra.mxu0 %v2295
    %4790 = vmatprep.subr.bf16.mxu0 0
    %4791 = vmatpush2.bf16.msra.mxu0 %v2294
    %4792 = vmatprep.subr.bf16.mxu0 0
    %4793 = vmatpush2.bf16.msra.mxu0 %v2293
    %4794 = vmatprep.subr.bf16.mxu0 0
    %4795 = vmatpush2.bf16.msra.mxu0 %v2292
    %4796 = vmatprep.subr.bf16.mxu0 0
    %4797 = vmatpush2.bf16.msra.mxu0 %v2291
    %4798 = vmatprep.mubr.bf16.mxu0 %v4765
    %4799 = vmatmul.mubr.bf16.gmra.mxu0 %v4764
    %v4800 = vpop.f32.mrf.mxu0
    %v4801 = vadd.f32 %v1568, %v4800
    %v4802 = vpop.f32.mrf.mxu0
    %v4803 = vpop.f32.mrf.mxu0
    %v4804 = vpop.f32.mrf.mxu0
    %4805 = vdwg.mxu0
    %v4806 = vtanh.pop %v4801
    %v4807 = vpack.c.bf16 %v4806, %v4806
    %4808 = vmatprep.subr.bf16.mxu0 %v2420
    %4809 = vmatpush1.bf16.msra.mxu0 %v2419
    %4810 = vmatprep.subr.bf16.mxu0 %v2418
    %4811 = vmatpush1.bf16.msra.mxu0 %v2417
    %4812 = vmatprep.subr.bf16.mxu0 %v2416
    %4813 = vmatpush1.bf16.msra.mxu0 %v2415
    %4814 = vmatprep.subr.bf16.mxu0 %v2414
    %4815 = vmatpush1.bf16.msra.mxu0 %v2413
    %4816 = vmatprep.subr.bf16.mxu0 %v2412
    %4817 = vmatpush1.bf16.msra.mxu0 %v2411
    %4818 = vmatprep.subr.bf16.mxu0 %v2410
    %4819 = vmatpush1.bf16.msra.mxu0 %v2409
    %4820 = vmatprep.subr.bf16.mxu0 %v2408
    %4821 = vmatpush1.bf16.msra.mxu0 %v2407
    %4822 = vmatprep.subr.bf16.mxu0 %v2406
    %4823 = vmatpush1.bf16.msra.mxu0 %v2405
    %4824 = vmatprep.subr.bf16.mxu0 0
    %4825 = vmatpush2.bf16.msra.mxu0 0
    %4826 = vmatprep.subr.bf16.mxu0 0
    %4827 = vmatpush2.bf16.msra.mxu0 0
    %4828 = vmatprep.subr.bf16.mxu0 0
    %4829 = vmatpush2.bf16.msra.mxu0 0
    %4830 = vmatprep.subr.bf16.mxu0 0
    %4831 = vmatpush2.bf16.msra.mxu0 0
    %4832 = vmatprep.subr.bf16.mxu0 0
    %4833 = vmatpush2.bf16.msra.mxu0 0
    %4834 = vmatprep.subr.bf16.mxu0 0
    %4835 = vmatpush2.bf16.msra.mxu0 0
    %4836 = vmatprep.subr.bf16.mxu0 0
    %4837 = vmatpush2.bf16.msra.mxu0 0
    %4838 = vmatprep.subr.bf16.mxu0 0
    %4839 = vmatpush2.bf16.msra.mxu0 0
    %4840 = vmatprep.mubr.bf16.mxu0 0
    %4841 = vmatmul.mubr.bf16.gmra.mxu0 %v4807
    %v4842 = vpop.f32.mrf.mxu0
    %v4843 = vadd.f32 %v2441, %v4842
    %v4844 = vpop.f32.mrf.mxu0
    %v4845 = vadd.f32 %v2445, %v4844
    %v4846 = vpop.f32.mrf.mxu0
    %v4847 = vpop.f32.mrf.mxu0
    %4848 = vdwg.mxu0
    %v4849 = vsel %vm2489, %v4843, -inf
    %v4850 = vsel %vm2489, %v4845, -inf
    %v4851 = vmax.f32 %v4849, %v4850
    %4852 = vmax.xlane.f32.xlu0 %v4851
    %v4853 = vpop.xlane.xlu0 %4852
    %vm4854 = vcmp.ge.f32.partialorder %v4843, %v4853
    %vm4855 = vcmp.ge.f32.partialorder %v4845, %v4853
    %v4856 = vsel %vm4854, %v2496, 256
    %v4857 = vsel %vm4855, %v2497, 256
    %v4858 = vsel %vm2489, %v4856, 2147483647
    %v4859 = vsel %vm2489, %v4857, 2147483647
    %vm4860 = vcmp.lt.s32.totalorder %v4858, %v4859
    %v4861 = vsel %vm4860, %v4858, %v4859
    %v4862 = vand.u32 %v4861, 65535
    %v4863 = vshra.s32 %v4861, 16
    %v4864 = vcvt.s32.f32 %v4862
    %v4865 = vcvt.s32.f32 %v4863
    %4866 = vmin.xlane.f32.xlu0 %v4865
    %v4867 = vpop.xlane.xlu0 %4866
    %vm4868 = vcmp.eq.f32.partialorder %v4865, %v4867
    %v4869 = vsel %vm4868, %v4864, inf
    %4870 = vmin.xlane.f32.xlu0 %v4869
    %v4871 = vpop.xlane.xlu0 %4870
    %v4872 = vcvt.f32.s32 %v4871
    %v4873 = vcvt.f32.s32 %v4867
    %v4874 = vshll.u32 %v4873, 16
    %v4875 = vadd.s32 %v4874, %v4872
    %v4876 = vsub.f32 %v4843, %v4853
    %v4877 = vsub.f32 %v4845, %v4853
    %v4878 = vmul.f32 %v4876, 1.442695
    %v4879 = vpow.pop %v4878
    %v4880 = vmul.f32 %v4877, 1.442695
    %v4881 = vpow.pop %v4880
    %v4882 = vsel %vm2489, %v4879, 0.0
    %v4883 = vsel %vm2489, %v4881, 0.0
    %v4884 = vadd.f32 %v4882, %v4883
    %4885 = vadd.xlane.f32.xlu0 %v4884
    %v4886 = vpop.xlane.xlu0 %4885
    %v4887 = vrcp.pop %v4886
    %v4888 = vmul.f32 1.0, %v4887
    %4889 = vst.msk [vmem:[#allocation4] sm:$0x1] %vm2533, %v4875
    %v4890 = vld [vmem:[#allocation4] sm:$0x1]
    %s4891 = vtos %v4890
    %v4892 = vstv %s4891
    %4893 = vst [vmem:[%s14 + $0x5] sm:$0x1] %v4892
    %4894 = vst [vmem:[%s15 + $0x5] sm:$0x1] %v4888
    // Predicated region
    $region86: #{greedy_search_decode.1} parent=1 // pred_check
      _
    $region87: #{greedy_search_decode.1} parent=1 // pred_check_branch
      %4896 = sbr.rel (0) target = $region89
    $region88: #{greedy_search_decode.1} parent=1 // pred_region
      _
    $region89: #{greedy_search_decode.1} parent=1 // pred_fallthru
      _
    // Predicated region
    $region90: #{greedy_search_decode.1} parent=1 // pred_check
      _
    $region91: #{greedy_search_decode.1} parent=1 // pred_check_branch
      %4898 = sbr.rel (0) target = $region93
    $region92: #{greedy_search_decode.1} parent=1 // pred_region
      _
    $region93: #{greedy_search_decode.1} parent=1 // pred_fallthru
      _
    // Predicated region
    $region94: #{greedy_search_decode.1} parent=1 // pred_check
      _
    $region95: #{greedy_search_decode.1} parent=1 // pred_check_branch
      %4900 = sbr.rel (0) target = $region97
    $region96: #{greedy_search_decode.1} parent=1 // pred_region
      _
    $region97: #{greedy_search_decode.1} parent=1 // pred_fallthru
      _
    // Predicated region
    $region98: #{greedy_search_decode.1} parent=1 // pred_check
      _
    $region99: #{greedy_search_decode.1} parent=1 // pred_check_branch
      %4902 = sbr.rel (0) target = $region101
    $region100: #{greedy_search_decode.1} parent=1 // pred_region
      _
    $region101: #{greedy_search_decode.1} parent=1 // pred_fallthru
      _
    %4903 = vsyncpa [#allocation6], 1
    %4904 = vsyncpa [#allocation8], 1
    %4905 = vsyncpa [#allocation11], 1
    %4906 = vsyncpa [#allocation14], 1

</llo_original>
